<compile_context>
chip_gen: v6e
topology: v6e:2x2x1
jax: 0.10.0
libtpu: 0.0.40
codegen_flags: <defaults>
</compile_context>

<pallas_src>
import jax
import jax.numpy as jnp
from jax.experimental import pallas as pl
from jax.experimental.pallas import tpu as pltpu


# ----------------------------- Pallas kernel -------------------------------

def _make_kernel(H, W, Wp, L, gcin, gcmid, gcout):
    """Fused BasicBlock kernel on a pad-2, width-flattened NCHW plane.

    The channel axis carries `nb` images (block-diagonal weights), so one
    grid step processes a whole group of images.
    """
    lc1 = L - 2 * (Wp + 1)   # conv1 compute range (covers all conv2 tap needs)
    lc2 = L - 4 * (Wp + 1)   # conv2 compute range (covers all true outputs)
    offs = [(Wp + 1) + dh * Wp + dw for dh in (-1, 0, 1) for dw in (-1, 0, 1)]

    def kernel(x_ref, w1_ref, b1_ref, m_ref, w2_ref, b2_ref, o_ref, mid_ref):
        # ---- conv1 + folded-BN bias + ReLU -------------------------------
        # Each 3x3 tap is a static lane-offset slice of the flattened plane.
        acc1 = jnp.zeros((gcmid, lc1), jnp.float32)
        for t, off in enumerate(offs):
            acc1 = acc1 + jnp.dot(w1_ref[t], x_ref[0, :, off:off + lc1],
                                  preferred_element_type=jnp.float32)
        # Mask zeroes every padding position (image halo AND any cross-image
        # straddle) so conv2 sees its zero halo with no extra HBM traffic.
        mid_ref[...] = jnp.maximum(acc1 + b1_ref[...], 0.0) * m_ref[...]

        # ---- conv2 + folded-BN bias + residual add + ReLU ----------------
        acc2 = jnp.zeros((gcout, lc2), jnp.float32)
        for t, off in enumerate(offs):
            acc2 = acc2 + jnp.dot(w2_ref[t], mid_ref[:, off:off + lc2],
                                  preferred_element_type=jnp.float32)
        res = x_ref[0, :, 2 * (Wp + 1): 2 * (Wp + 1) + lc2]     # residual = x
        o_ref[0, :, :] = jnp.maximum(acc2 + b2_ref[...] + res, 0.0
                                     ).astype(o_ref.dtype)

    return kernel, lc1, lc2


# ------------------------------ JAX glue ------------------------------------

def _fold_bn(gamma, beta, mean, var, eps=1e-5):
    scale = gamma / jnp.sqrt(var + eps)
    return scale, beta - mean * scale


def _weight_taps(w_oihw, scale, nb):
    """(Cout,Cin,3,3) -> (9, nb*Cout, nb*Cin): BN scale folded, batch folded
    into channels via a block-diagonal (per-image) weight."""
    w = w_oihw * scale[:, None, None, None]
    cout, cin = w.shape[0], w.shape[1]
    taps = jnp.transpose(w, (2, 3, 0, 1)).reshape(9, cout, cin)
    eye = jnp.eye(nb, dtype=taps.dtype)[None]          # (1, nb, nb)
    return jnp.kron(eye, taps)                          # (9, nb*Cout, nb*Cin)


def _pick_group(n, cin, max_rows=32):
    """Largest divisor of n such that nb*cin channel rows stay small."""
    for d in range(n, 0, -1):
        if n % d == 0 and d * cin <= max_rows:
            return d
    return 1


@jax.jit
def basic_block_forward(x_nchw, params):
    n, cin, h, w = x_nchw.shape
    cmid = params["conv1_w"].shape[0]
    cout = params["conv2_w"].shape[0]
    assert cin == cout, "downsample=None requires inplanes == planes"

    nb = _pick_group(n, cin)          # images folded into the channel axis
    ng = n // nb                      # grid size
    hp, wp = h + 4, w + 4
    L = hp * wp

    kernel, lc1, lc2 = _make_kernel(h, w, wp, L, nb * cin, nb * cmid, nb * cout)

    s1, b1 = _fold_bn(params["bn1_gamma"], params["bn1_beta"],
                      params["bn1_mean"], params["bn1_var"])
    s2, b2 = _fold_bn(params["bn2_gamma"], params["bn2_beta"],
                      params["bn2_mean"], params["bn2_var"])
    w1 = _weight_taps(params["conv1_w"], s1, nb).astype(jnp.float32)
    w2 = _weight_taps(params["conv2_w"], s2, nb).astype(jnp.float32)
    b1 = jnp.tile(b1, nb).reshape(nb * cmid, 1).astype(jnp.float32)
    b2 = jnp.tile(b2, nb).reshape(nb * cout, 1).astype(jnp.float32)

    # Zero-pad spatially by 2, flatten H,W, and pack nb images per group
    # along the channel axis.  All pure reshapes in NCHW layout.
    xp = jnp.pad(x_nchw, ((0, 0), (0, 0), (2, 2), (2, 2)))
    xp = xp.reshape(ng, nb * cin, L)

    # Mask of "true image" positions inside the conv1 compute range
    # (lane position is the same for every image in the group).
    o = jnp.arange(lc1) + (wp + 1)
    r, c = o // wp, o % wp
    mask = ((r >= 2) & (r < 2 + h) & (c >= 2) & (c < 2 + w))
    mask = mask.astype(jnp.float32).reshape(1, lc1)

    flops = 2 * ng * 9 * ((nb * cin) * (nb * cmid) * lc1
                          + (nb * cmid) * (nb * cout) * lc2)
    bytes_accessed = 4 * (xp.size + w1.size + w2.size + ng * nb * cout * lc2)

    out_flat = pl.pallas_call(
        kernel,
        out_shape=jax.ShapeDtypeStruct((ng, nb * cout, lc2), jnp.float32),
        grid_spec=pltpu.PrefetchScalarGridSpec(
            num_scalar_prefetch=0,
            grid=(ng,),
            in_specs=[
                pl.BlockSpec((1, nb * cin, L), lambda g: (g, 0, 0)),        # x group
                pl.BlockSpec((9, nb * cmid, nb * cin), lambda g: (0, 0, 0)),  # w1 (resident)
                pl.BlockSpec((nb * cmid, 1), lambda g: (0, 0)),             # bn1 bias
                pl.BlockSpec((1, lc1), lambda g: (0, 0)),                   # interior mask
                pl.BlockSpec((9, nb * cout, nb * cmid), lambda g: (0, 0, 0)),  # w2 (resident)
                pl.BlockSpec((nb * cout, 1), lambda g: (0, 0)),             # bn2 bias
            ],
            out_specs=pl.BlockSpec((1, nb * cout, lc2), lambda g: (g, 0, 0)),
            scratch_shapes=[pltpu.VMEM((nb * cmid, lc1), jnp.float32)],     # mid in VMEM
        ),
        compiler_params=pltpu.CompilerParams(
            dimension_semantics=("parallel",)),
        cost_estimate=pl.CostEstimate(flops=flops, transcendentals=0,
                                      bytes_accessed=bytes_accessed),
    )(xp, w1, b1, mask, w2, b2)

    # Unpack: output index k = r*Wp + c per image; pad tail, reshape, slice.
    out = out_flat.reshape(n, cout, lc2)
    out = jnp.pad(out, ((0, 0), (0, 0), (0, h * wp - lc2)))   # tail == 4
    return out.reshape(n, cout, h, wp)[:, :, :, :w]


# --------------------------- pure-JAX reference -----------------------------

def _reference_forward(x, params, eps=1e-5):
    def conv(v, wt):
        return jax.lax.conv_general_dilated(
            v, wt, window_strides=(1, 1), padding=((1, 1), (1, 1)),
            dimension_numbers=("NCHW", "OIHW", "NCHW"))

    def bn(v, g, b, m, var):
        g, b, m, var = (a[None, :, None, None] for a in (g, b, m, var))
        return (v - m) / jnp.sqrt(var + eps) * g + b

    out = jax.nn.relu(bn(conv(x, params["conv1_w"]), params["bn1_gamma"],
                         params["bn1_beta"], params["bn1_mean"], params["bn1_var"]))
    out = bn(conv(out, params["conv2_w"]), params["bn2_gamma"],
             params["bn2_beta"], params["bn2_mean"], params["bn2_var"]) + x
    return jax.nn.relu(out)


# --------------------------------- main -------------------------------------

if __name__ == "__main__":
    key = jax.random.PRNGKey(0)
    N, C, H, W = 2, 4, 16, 16          # inplanes = planes = 4, stride = 1
    planes = C

    keys = jax.random.split(key, 11)
    x = jax.random.normal(keys[0], (N, C, H, W), dtype=jnp.float32)

    params = {
        "conv1_w": jax.random.normal(keys[1], (planes, C, 3, 3), jnp.float32) * 0.1,
        "conv2_w": jax.random.normal(keys[2], (planes, planes, 3, 3), jnp.float32) * 0.1,
        "bn1_gamma": jax.random.normal(keys[3], (planes,), jnp.float32) * 0.1 + 1.0,
        "bn1_beta": jax.random.normal(keys[4], (planes,), jnp.float32) * 0.1,
        "bn1_mean": jax.random.normal(keys[5], (planes,), jnp.float32) * 0.1,
        "bn1_var": jax.random.uniform(keys[6], (planes,), jnp.float32, 0.5, 1.5),
        "bn2_gamma": jax.random.normal(keys[7], (planes,), jnp.float32) * 0.1 + 1.0,
        "bn2_beta": jax.random.normal(keys[8], (planes,), jnp.float32) * 0.1,
        "bn2_mean": jax.random.normal(keys[9], (planes,), jnp.float32) * 0.1,
        "bn2_var": jax.random.uniform(keys[10], (planes,), jnp.float32, 0.5, 1.5),
    }

    out = basic_block_forward(x, params)
    out = jax.block_until_ready(out)

    ref = _reference_forward(x, params)
    assert out.shape == (N, planes, H, W)
    assert jnp.allclose(out, ref, rtol=1e-4, atol=1e-4), "mismatch vs reference"

    print("KERNEL_OK")
</pallas_src>

<mosaic_0001>
module attributes {stable_mosaic.version = 11 : i64} {
  func.func @kernel(%arg0: i32, %arg1: memref<1x8x400xf32, #tpu.memory_space<vmem>>, %arg2: memref<9x8x8xf32, #tpu.memory_space<vmem>>, %arg3: memref<8x1xf32, #tpu.memory_space<vmem>>, %arg4: memref<1x358xf32, #tpu.memory_space<vmem>>, %arg5: memref<9x8x8xf32, #tpu.memory_space<vmem>>, %arg6: memref<8x1xf32, #tpu.memory_space<vmem>>, %arg7: memref<1x8x316xf32, #tpu.memory_space<vmem>>, %arg8: memref<8x358xf32, #tpu.memory_space<vmem>>) attributes {dimension_semantics = [#tpu.dimension_semantics<parallel>], iteration_bounds = array<i64: 1>, scalar_prefetch = 0 : i64, scratch_operands = 1 : i64, tpu.core_type = #tpu.core_type<tc>, window_params = [{transform_indices = @transform_0, window_bounds = array<i64: 1, 8, 400>}, {pipeline_mode = #tpu.pipeline_mode<synchronous>, transform_indices = @transform_1, window_bounds = array<i64: 9, 8, 8>}, {pipeline_mode = #tpu.pipeline_mode<synchronous>, transform_indices = @transform_2, window_bounds = array<i64: 8, 1>}, {pipeline_mode = #tpu.pipeline_mode<synchronous>, transform_indices = @transform_3, window_bounds = array<i64: 1, 358>}, {pipeline_mode = #tpu.pipeline_mode<synchronous>, transform_indices = @transform_4, window_bounds = array<i64: 9, 8, 8>}, {pipeline_mode = #tpu.pipeline_mode<synchronous>, transform_indices = @transform_5, window_bounds = array<i64: 8, 1>}, {transform_indices = @transform_6, window_bounds = array<i64: 1, 8, 316>}]} {
    %cst = arith.constant 0.000000e+00 : f32
    %0 = vector.broadcast %cst : f32 to vector<8x358xf32>
    %c0 = arith.constant 0 : index
    %c0_0 = arith.constant 0 : index
    %c0_1 = arith.constant 0 : index
    %1 = vector.load %arg2[%c0, %c0_0, %c0_1] : memref<9x8x8xf32, #tpu.memory_space<vmem>>, vector<1x8x8xf32>
    %2 = vector.shape_cast %1 : vector<1x8x8xf32> to vector<8x8xf32>
    %c0_2 = arith.constant 0 : index
    %c0_3 = arith.constant 0 : index
    %c0_4 = arith.constant 0 : index
    %3 = vector.load %arg1[%c0_2, %c0_3, %c0_4] : memref<1x8x400xf32, #tpu.memory_space<vmem>>, vector<1x8x358xf32>
    %4 = vector.shape_cast %3 : vector<1x8x358xf32> to vector<8x358xf32>
    %cst_5 = arith.constant dense<0.000000e+00> : vector<8x358xf32>
    %5 = tpu.matmul %2, %4, %cst_5 {dimension_numbers = #tpu.dot_dimension_numbers<[1], [0], [0], [1], [0, 0, 1, 1], [], []>} : vector<8x8xf32>, vector<8x358xf32>, vector<8x358xf32> -> vector<8x358xf32>
    %6 = arith.addf %0, %5 : vector<8x358xf32>
    %c1 = arith.constant 1 : index
    %c0_6 = arith.constant 0 : index
    %c0_7 = arith.constant 0 : index
    %7 = vector.load %arg2[%c1, %c0_6, %c0_7] : memref<9x8x8xf32, #tpu.memory_space<vmem>>, vector<1x8x8xf32>
    %8 = vector.shape_cast %7 : vector<1x8x8xf32> to vector<8x8xf32>
    %c0_8 = arith.constant 0 : index
    %c0_9 = arith.constant 0 : index
    %c1_10 = arith.constant 1 : index
    %9 = vector.load %arg1[%c0_8, %c0_9, %c1_10] : memref<1x8x400xf32, #tpu.memory_space<vmem>>, vector<1x8x358xf32>
    %10 = vector.shape_cast %9 : vector<1x8x358xf32> to vector<8x358xf32>
    %cst_11 = arith.constant dense<0.000000e+00> : vector<8x358xf32>
    %11 = tpu.matmul %8, %10, %cst_11 {dimension_numbers = #tpu.dot_dimension_numbers<[1], [0], [0], [1], [0, 0, 1, 1], [], []>} : vector<8x8xf32>, vector<8x358xf32>, vector<8x358xf32> -> vector<8x358xf32>
    %12 = arith.addf %6, %11 : vector<8x358xf32>
    %c2 = arith.constant 2 : index
    %c0_12 = arith.constant 0 : index
    %c0_13 = arith.constant 0 : index
    %13 = vector.load %arg2[%c2, %c0_12, %c0_13] : memref<9x8x8xf32, #tpu.memory_space<vmem>>, vector<1x8x8xf32>
    %14 = vector.shape_cast %13 : vector<1x8x8xf32> to vector<8x8xf32>
    %c0_14 = arith.constant 0 : index
    %c0_15 = arith.constant 0 : index
    %c2_16 = arith.constant 2 : index
    %15 = vector.load %arg1[%c0_14, %c0_15, %c2_16] : memref<1x8x400xf32, #tpu.memory_space<vmem>>, vector<1x8x358xf32>
    %16 = vector.shape_cast %15 : vector<1x8x358xf32> to vector<8x358xf32>
    %cst_17 = arith.constant dense<0.000000e+00> : vector<8x358xf32>
    %17 = tpu.matmul %14, %16, %cst_17 {dimension_numbers = #tpu.dot_dimension_numbers<[1], [0], [0], [1], [0, 0, 1, 1], [], []>} : vector<8x8xf32>, vector<8x358xf32>, vector<8x358xf32> -> vector<8x358xf32>
    %18 = arith.addf %12, %17 : vector<8x358xf32>
    %c3 = arith.constant 3 : index
    %c0_18 = arith.constant 0 : index
    %c0_19 = arith.constant 0 : index
    %19 = vector.load %arg2[%c3, %c0_18, %c0_19] : memref<9x8x8xf32, #tpu.memory_space<vmem>>, vector<1x8x8xf32>
    %20 = vector.shape_cast %19 : vector<1x8x8xf32> to vector<8x8xf32>
    %c0_20 = arith.constant 0 : index
    %c0_21 = arith.constant 0 : index
    %c20 = arith.constant 20 : index
    %21 = vector.load %arg1[%c0_20, %c0_21, %c20] : memref<1x8x400xf32, #tpu.memory_space<vmem>>, vector<1x8x358xf32>
    %22 = vector.shape_cast %21 : vector<1x8x358xf32> to vector<8x358xf32>
    %cst_22 = arith.constant dense<0.000000e+00> : vector<8x358xf32>
    %23 = tpu.matmul %20, %22, %cst_22 {dimension_numbers = #tpu.dot_dimension_numbers<[1], [0], [0], [1], [0, 0, 1, 1], [], []>} : vector<8x8xf32>, vector<8x358xf32>, vector<8x358xf32> -> vector<8x358xf32>
    %24 = arith.addf %18, %23 : vector<8x358xf32>
    %c4 = arith.constant 4 : index
    %c0_23 = arith.constant 0 : index
    %c0_24 = arith.constant 0 : index
    %25 = vector.load %arg2[%c4, %c0_23, %c0_24] : memref<9x8x8xf32, #tpu.memory_space<vmem>>, vector<1x8x8xf32>
    %26 = vector.shape_cast %25 : vector<1x8x8xf32> to vector<8x8xf32>
    %c0_25 = arith.constant 0 : index
    %c0_26 = arith.constant 0 : index
    %c21 = arith.constant 21 : index
    %27 = vector.load %arg1[%c0_25, %c0_26, %c21] : memref<1x8x400xf32, #tpu.memory_space<vmem>>, vector<1x8x358xf32>
    %28 = vector.shape_cast %27 : vector<1x8x358xf32> to vector<8x358xf32>
    %cst_27 = arith.constant dense<0.000000e+00> : vector<8x358xf32>
    %29 = tpu.matmul %26, %28, %cst_27 {dimension_numbers = #tpu.dot_dimension_numbers<[1], [0], [0], [1], [0, 0, 1, 1], [], []>} : vector<8x8xf32>, vector<8x358xf32>, vector<8x358xf32> -> vector<8x358xf32>
    %30 = arith.addf %24, %29 : vector<8x358xf32>
    %c5 = arith.constant 5 : index
    %c0_28 = arith.constant 0 : index
    %c0_29 = arith.constant 0 : index
    %31 = vector.load %arg2[%c5, %c0_28, %c0_29] : memref<9x8x8xf32, #tpu.memory_space<vmem>>, vector<1x8x8xf32>
    %32 = vector.shape_cast %31 : vector<1x8x8xf32> to vector<8x8xf32>
    %c0_30 = arith.constant 0 : index
    %c0_31 = arith.constant 0 : index
    %c22 = arith.constant 22 : index
    %33 = vector.load %arg1[%c0_30, %c0_31, %c22] : memref<1x8x400xf32, #tpu.memory_space<vmem>>, vector<1x8x358xf32>
    %34 = vector.shape_cast %33 : vector<1x8x358xf32> to vector<8x358xf32>
    %cst_32 = arith.constant dense<0.000000e+00> : vector<8x358xf32>
    %35 = tpu.matmul %32, %34, %cst_32 {dimension_numbers = #tpu.dot_dimension_numbers<[1], [0], [0], [1], [0, 0, 1, 1], [], []>} : vector<8x8xf32>, vector<8x358xf32>, vector<8x358xf32> -> vector<8x358xf32>
    %36 = arith.addf %30, %35 : vector<8x358xf32>
    %c6 = arith.constant 6 : index
    %c0_33 = arith.constant 0 : index
    %c0_34 = arith.constant 0 : index
    %37 = vector.load %arg2[%c6, %c0_33, %c0_34] : memref<9x8x8xf32, #tpu.memory_space<vmem>>, vector<1x8x8xf32>
    %38 = vector.shape_cast %37 : vector<1x8x8xf32> to vector<8x8xf32>
    %c0_35 = arith.constant 0 : index
    %c0_36 = arith.constant 0 : index
    %c40 = arith.constant 40 : index
    %39 = vector.load %arg1[%c0_35, %c0_36, %c40] : memref<1x8x400xf32, #tpu.memory_space<vmem>>, vector<1x8x358xf32>
    %40 = vector.shape_cast %39 : vector<1x8x358xf32> to vector<8x358xf32>
    %cst_37 = arith.constant dense<0.000000e+00> : vector<8x358xf32>
    %41 = tpu.matmul %38, %40, %cst_37 {dimension_numbers = #tpu.dot_dimension_numbers<[1], [0], [0], [1], [0, 0, 1, 1], [], []>} : vector<8x8xf32>, vector<8x358xf32>, vector<8x358xf32> -> vector<8x358xf32>
    %42 = arith.addf %36, %41 : vector<8x358xf32>
    %c7 = arith.constant 7 : index
    %c0_38 = arith.constant 0 : index
    %c0_39 = arith.constant 0 : index
    %43 = vector.load %arg2[%c7, %c0_38, %c0_39] : memref<9x8x8xf32, #tpu.memory_space<vmem>>, vector<1x8x8xf32>
    %44 = vector.shape_cast %43 : vector<1x8x8xf32> to vector<8x8xf32>
    %c0_40 = arith.constant 0 : index
    %c0_41 = arith.constant 0 : index
    %c41 = arith.constant 41 : index
    %45 = vector.load %arg1[%c0_40, %c0_41, %c41] : memref<1x8x400xf32, #tpu.memory_space<vmem>>, vector<1x8x358xf32>
    %46 = vector.shape_cast %45 : vector<1x8x358xf32> to vector<8x358xf32>
    %cst_42 = arith.constant dense<0.000000e+00> : vector<8x358xf32>
    %47 = tpu.matmul %44, %46, %cst_42 {dimension_numbers = #tpu.dot_dimension_numbers<[1], [0], [0], [1], [0, 0, 1, 1], [], []>} : vector<8x8xf32>, vector<8x358xf32>, vector<8x358xf32> -> vector<8x358xf32>
    %48 = arith.addf %42, %47 : vector<8x358xf32>
    %c8 = arith.constant 8 : index
    %c0_43 = arith.constant 0 : index
    %c0_44 = arith.constant 0 : index
    %49 = vector.load %arg2[%c8, %c0_43, %c0_44] : memref<9x8x8xf32, #tpu.memory_space<vmem>>, vector<1x8x8xf32>
    %50 = vector.shape_cast %49 : vector<1x8x8xf32> to vector<8x8xf32>
    %c0_45 = arith.constant 0 : index
    %c0_46 = arith.constant 0 : index
    %c42 = arith.constant 42 : index
    %51 = vector.load %arg1[%c0_45, %c0_46, %c42] : memref<1x8x400xf32, #tpu.memory_space<vmem>>, vector<1x8x358xf32>
    %52 = vector.shape_cast %51 : vector<1x8x358xf32> to vector<8x358xf32>
    %cst_47 = arith.constant dense<0.000000e+00> : vector<8x358xf32>
    %53 = tpu.matmul %50, %52, %cst_47 {dimension_numbers = #tpu.dot_dimension_numbers<[1], [0], [0], [1], [0, 0, 1, 1], [], []>} : vector<8x8xf32>, vector<8x358xf32>, vector<8x358xf32> -> vector<8x358xf32>
    %54 = arith.addf %48, %53 : vector<8x358xf32>
    %c0_48 = arith.constant 0 : index
    %c0_49 = arith.constant 0 : index
    %55 = vector.load %arg3[%c0_48, %c0_49] : memref<8x1xf32, #tpu.memory_space<vmem>>, vector<8x1xf32>
    %56 = vector.broadcast %55 : vector<8x1xf32> to vector<8x358xf32>
    %57 = arith.addf %54, %56 : vector<8x358xf32>
    %cst_50 = arith.constant 0.000000e+00 : f32
    %58 = vector.broadcast %cst_50 : f32 to vector<8x358xf32>
    %59 = arith.maximumf %57, %58 : vector<8x358xf32>
    %c0_51 = arith.constant 0 : index
    %c0_52 = arith.constant 0 : index
    %60 = vector.load %arg4[%c0_51, %c0_52] : memref<1x358xf32, #tpu.memory_space<vmem>>, vector<1x358xf32>
    %61 = vector.broadcast %60 : vector<1x358xf32> to vector<8x358xf32>
    %62 = arith.mulf %59, %61 : vector<8x358xf32>
    %c0_53 = arith.constant 0 : index
    %c0_54 = arith.constant 0 : index
    %63 = vector.load %arg8[%c0_53, %c0_54] : memref<8x358xf32, #tpu.memory_space<vmem>>, vector<8x358xf32>
    tpu.vector_store %arg8[%c0_53, %c0_54], %62 {strides = array<i32>} : memref<8x358xf32, #tpu.memory_space<vmem>>, vector<8x358xf32>,
    %cst_55 = arith.constant 0.000000e+00 : f32
    %64 = vector.broadcast %cst_55 : f32 to vector<8x316xf32>
    %c0_56 = arith.constant 0 : index
    %c0_57 = arith.constant 0 : index
    %c0_58 = arith.constant 0 : index
    %65 = vector.load %arg5[%c0_56, %c0_57, %c0_58] : memref<9x8x8xf32, #tpu.memory_space<vmem>>, vector<1x8x8xf32>
    %66 = vector.shape_cast %65 : vector<1x8x8xf32> to vector<8x8xf32>
    %c0_59 = arith.constant 0 : index
    %c0_60 = arith.constant 0 : index
    %67 = vector.load %arg8[%c0_59, %c0_60] : memref<8x358xf32, #tpu.memory_space<vmem>>, vector<8x316xf32>
    %cst_61 = arith.constant dense<0.000000e+00> : vector<8x316xf32>
    %68 = tpu.matmul %66, %67, %cst_61 {dimension_numbers = #tpu.dot_dimension_numbers<[1], [0], [0], [1], [0, 0, 1, 1], [], []>} : vector<8x8xf32>, vector<8x316xf32>, vector<8x316xf32> -> vector<8x316xf32>
    %69 = arith.addf %64, %68 : vector<8x316xf32>
    %c1_62 = arith.constant 1 : index
    %c0_63 = arith.constant 0 : index
    %c0_64 = arith.constant 0 : index
    %70 = vector.load %arg5[%c1_62, %c0_63, %c0_64] : memref<9x8x8xf32, #tpu.memory_space<vmem>>, vector<1x8x8xf32>
    %71 = vector.shape_cast %70 : vector<1x8x8xf32> to vector<8x8xf32>
    %c0_65 = arith.constant 0 : index
    %c1_66 = arith.constant 1 : index
    %72 = vector.load %arg8[%c0_65, %c1_66] : memref<8x358xf32, #tpu.memory_space<vmem>>, vector<8x316xf32>
    %cst_67 = arith.constant dense<0.000000e+00> : vector<8x316xf32>
    %73 = tpu.matmul %71, %72, %cst_67 {dimension_numbers = #tpu.dot_dimension_numbers<[1], [0], [0], [1], [0, 0, 1, 1], [], []>} : vector<8x8xf32>, vector<8x316xf32>, vector<8x316xf32> -> vector<8x316xf32>
    %74 = arith.addf %69, %73 : vector<8x316xf32>
    %c2_68 = arith.constant 2 : index
    %c0_69 = arith.constant 0 : index
    %c0_70 = arith.constant 0 : index
    %75 = vector.load %arg5[%c2_68, %c0_69, %c0_70] : memref<9x8x8xf32, #tpu.memory_space<vmem>>, vector<1x8x8xf32>
    %76 = vector.shape_cast %75 : vector<1x8x8xf32> to vector<8x8xf32>
    %c0_71 = arith.constant 0 : index
    %c2_72 = arith.constant 2 : index
    %77 = vector.load %arg8[%c0_71, %c2_72] : memref<8x358xf32, #tpu.memory_space<vmem>>, vector<8x316xf32>
    %cst_73 = arith.constant dense<0.000000e+00> : vector<8x316xf32>
    %78 = tpu.matmul %76, %77, %cst_73 {dimension_numbers = #tpu.dot_dimension_numbers<[1], [0], [0], [1], [0, 0, 1, 1], [], []>} : vector<8x8xf32>, vector<8x316xf32>, vector<8x316xf32> -> vector<8x316xf32>
    %79 = arith.addf %74, %78 : vector<8x316xf32>
    %c3_74 = arith.constant 3 : index
    %c0_75 = arith.constant 0 : index
    %c0_76 = arith.constant 0 : index
    %80 = vector.load %arg5[%c3_74, %c0_75, %c0_76] : memref<9x8x8xf32, #tpu.memory_space<vmem>>, vector<1x8x8xf32>
    %81 = vector.shape_cast %80 : vector<1x8x8xf32> to vector<8x8xf32>
    %c0_77 = arith.constant 0 : index
    %c20_78 = arith.constant 20 : index
    %82 = vector.load %arg8[%c0_77, %c20_78] : memref<8x358xf32, #tpu.memory_space<vmem>>, vector<8x316xf32>
    %cst_79 = arith.constant dense<0.000000e+00> : vector<8x316xf32>
    %83 = tpu.matmul %81, %82, %cst_79 {dimension_numbers = #tpu.dot_dimension_numbers<[1], [0], [0], [1], [0, 0, 1, 1], [], []>} : vector<8x8xf32>, vector<8x316xf32>, vector<8x316xf32> -> vector<8x316xf32>
    %84 = arith.addf %79, %83 : vector<8x316xf32>
    %c4_80 = arith.constant 4 : index
    %c0_81 = arith.constant 0 : index
    %c0_82 = arith.constant 0 : index
    %85 = vector.load %arg5[%c4_80, %c0_81, %c0_82] : memref<9x8x8xf32, #tpu.memory_space<vmem>>, vector<1x8x8xf32>
    %86 = vector.shape_cast %85 : vector<1x8x8xf32> to vector<8x8xf32>
    %c0_83 = arith.constant 0 : index
    %c21_84 = arith.constant 21 : index
    %87 = vector.load %arg8[%c0_83, %c21_84] : memref<8x358xf32, #tpu.memory_space<vmem>>, vector<8x316xf32>
    %cst_85 = arith.constant dense<0.000000e+00> : vector<8x316xf32>
    %88 = tpu.matmul %86, %87, %cst_85 {dimension_numbers = #tpu.dot_dimension_numbers<[1], [0], [0], [1], [0, 0, 1, 1], [], []>} : vector<8x8xf32>, vector<8x316xf32>, vector<8x316xf32> -> vector<8x316xf32>
    %89 = arith.addf %84, %88 : vector<8x316xf32>
    %c5_86 = arith.constant 5 : index
    %c0_87 = arith.constant 0 : index
    %c0_88 = arith.constant 0 : index
    %90 = vector.load %arg5[%c5_86, %c0_87, %c0_88] : memref<9x8x8xf32, #tpu.memory_space<vmem>>, vector<1x8x8xf32>
    %91 = vector.shape_cast %90 : vector<1x8x8xf32> to vector<8x8xf32>
    %c0_89 = arith.constant 0 : index
    %c22_90 = arith.constant 22 : index
    %92 = vector.load %arg8[%c0_89, %c22_90] : memref<8x358xf32, #tpu.memory_space<vmem>>, vector<8x316xf32>
    %cst_91 = arith.constant dense<0.000000e+00> : vector<8x316xf32>
    %93 = tpu.matmul %91, %92, %cst_91 {dimension_numbers = #tpu.dot_dimension_numbers<[1], [0], [0], [1], [0, 0, 1, 1], [], []>} : vector<8x8xf32>, vector<8x316xf32>, vector<8x316xf32> -> vector<8x316xf32>
    %94 = arith.addf %89, %93 : vector<8x316xf32>
    %c6_92 = arith.constant 6 : index
    %c0_93 = arith.constant 0 : index
    %c0_94 = arith.constant 0 : index
    %95 = vector.load %arg5[%c6_92, %c0_93, %c0_94] : memref<9x8x8xf32, #tpu.memory_space<vmem>>, vector<1x8x8xf32>
    %96 = vector.shape_cast %95 : vector<1x8x8xf32> to vector<8x8xf32>
    %c0_95 = arith.constant 0 : index
    %c40_96 = arith.constant 40 : index
    %97 = vector.load %arg8[%c0_95, %c40_96] : memref<8x358xf32, #tpu.memory_space<vmem>>, vector<8x316xf32>
    %cst_97 = arith.constant dense<0.000000e+00> : vector<8x316xf32>
    %98 = tpu.matmul %96, %97, %cst_97 {dimension_numbers = #tpu.dot_dimension_numbers<[1], [0], [0], [1], [0, 0, 1, 1], [], []>} : vector<8x8xf32>, vector<8x316xf32>, vector<8x316xf32> -> vector<8x316xf32>
    %99 = arith.addf %94, %98 : vector<8x316xf32>
    %c7_98 = arith.constant 7 : index
    %c0_99 = arith.constant 0 : index
    %c0_100 = arith.constant 0 : index
    %100 = vector.load %arg5[%c7_98, %c0_99, %c0_100] : memref<9x8x8xf32, #tpu.memory_space<vmem>>, vector<1x8x8xf32>
    %101 = vector.shape_cast %100 : vector<1x8x8xf32> to vector<8x8xf32>
    %c0_101 = arith.constant 0 : index
    %c41_102 = arith.constant 41 : index
    %102 = vector.load %arg8[%c0_101, %c41_102] : memref<8x358xf32, #tpu.memory_space<vmem>>, vector<8x316xf32>
    %cst_103 = arith.constant dense<0.000000e+00> : vector<8x316xf32>
    %103 = tpu.matmul %101, %102, %cst_103 {dimension_numbers = #tpu.dot_dimension_numbers<[1], [0], [0], [1], [0, 0, 1, 1], [], []>} : vector<8x8xf32>, vector<8x316xf32>, vector<8x316xf32> -> vector<8x316xf32>
    %104 = arith.addf %99, %103 : vector<8x316xf32>
    %c8_104 = arith.constant 8 : index
    %c0_105 = arith.constant 0 : index
    %c0_106 = arith.constant 0 : index
    %105 = vector.load %arg5[%c8_104, %c0_105, %c0_106] : memref<9x8x8xf32, #tpu.memory_space<vmem>>, vector<1x8x8xf32>
    %106 = vector.shape_cast %105 : vector<1x8x8xf32> to vector<8x8xf32>
    %c0_107 = arith.constant 0 : index
    %c42_108 = arith.constant 42 : index
    %107 = vector.load %arg8[%c0_107, %c42_108] : memref<8x358xf32, #tpu.memory_space<vmem>>, vector<8x316xf32>
    %cst_109 = arith.constant dense<0.000000e+00> : vector<8x316xf32>
    %108 = tpu.matmul %106, %107, %cst_109 {dimension_numbers = #tpu.dot_dimension_numbers<[1], [0], [0], [1], [0, 0, 1, 1], [], []>} : vector<8x8xf32>, vector<8x316xf32>, vector<8x316xf32> -> vector<8x316xf32>
    %109 = arith.addf %104, %108 : vector<8x316xf32>
    %c0_110 = arith.constant 0 : index
    %c0_111 = arith.constant 0 : index
    %c42_112 = arith.constant 42 : index
    %110 = vector.load %arg1[%c0_110, %c0_111, %c42_112] : memref<1x8x400xf32, #tpu.memory_space<vmem>>, vector<1x8x316xf32>
    %111 = vector.shape_cast %110 : vector<1x8x316xf32> to vector<8x316xf32>
    %c0_113 = arith.constant 0 : index
    %c0_114 = arith.constant 0 : index
    %112 = vector.load %arg6[%c0_113, %c0_114] : memref<8x1xf32, #tpu.memory_space<vmem>>, vector<8x1xf32>
    %113 = vector.broadcast %112 : vector<8x1xf32> to vector<8x316xf32>
    %114 = arith.addf %109, %113 : vector<8x316xf32>
    %115 = arith.addf %114, %111 : vector<8x316xf32>
    %cst_115 = arith.constant 0.000000e+00 : f32
    %116 = vector.broadcast %cst_115 : f32 to vector<8x316xf32>
    %117 = arith.maximumf %115, %116 : vector<8x316xf32>
    %c0_116 = arith.constant 0 : index
    %c0_117 = arith.constant 0 : index
    %c0_118 = arith.constant 0 : index
    %118 = vector.load %arg7[%c0_116, %c0_117, %c0_118] : memref<1x8x316xf32, #tpu.memory_space<vmem>>, vector<1x8x316xf32>
    %119 = vector.shape_cast %118 : vector<1x8x316xf32> to vector<8x316xf32>
    %120 = vector.shape_cast %117 : vector<8x316xf32> to vector<1x8x316xf32>
    tpu.vector_store %arg7[%c0_116, %c0_117, %c0_118], %120 {strides = array<i32>} : memref<1x8x316xf32, #tpu.memory_space<vmem>>, vector<1x8x316xf32>,
    return
  }
  func.func @transform_0(%arg0: i32) -> (i32, i32, i32) {
    %c0_i32 = arith.constant 0 : i32
    %c0_i32_0 = arith.constant 0 : i32
    %c0_i32_1 = arith.constant 0 : i32
    return %arg0, %c0_i32, %c0_i32_0 : i32, i32, i32
  }
  func.func @transform_1(%arg0: i32) -> (i32, i32, i32) {
    %c0_i32 = arith.constant 0 : i32
    %c0_i32_0 = arith.constant 0 : i32
    %c0_i32_1 = arith.constant 0 : i32
    %c0_i32_2 = arith.constant 0 : i32
    return %c0_i32, %c0_i32_0, %c0_i32_1 : i32, i32, i32
  }
  func.func @transform_2(%arg0: i32) -> (i32, i32) {
    %c0_i32 = arith.constant 0 : i32
    %c0_i32_0 = arith.constant 0 : i32
    %c0_i32_1 = arith.constant 0 : i32
    return %c0_i32, %c0_i32_0 : i32, i32
  }
  func.func @transform_3(%arg0: i32) -> (i32, i32) {
    %c0_i32 = arith.constant 0 : i32
    %c0_i32_0 = arith.constant 0 : i32
    %c0_i32_1 = arith.constant 0 : i32
    return %c0_i32, %c0_i32_0 : i32, i32
  }
  func.func @transform_4(%arg0: i32) -> (i32, i32, i32) {
    %c0_i32 = arith.constant 0 : i32
    %c0_i32_0 = arith.constant 0 : i32
    %c0_i32_1 = arith.constant 0 : i32
    %c0_i32_2 = arith.constant 0 : i32
    return %c0_i32, %c0_i32_0, %c0_i32_1 : i32, i32, i32
  }
  func.func @transform_5(%arg0: i32) -> (i32, i32) {
    %c0_i32 = arith.constant 0 : i32
    %c0_i32_0 = arith.constant 0 : i32
    %c0_i32_1 = arith.constant 0 : i32
    return %c0_i32, %c0_i32_0 : i32, i32
  }
  func.func @transform_6(%arg0: i32) -> (i32, i32, i32) {
    %c0_i32 = arith.constant 0 : i32
    %c0_i32_0 = arith.constant 0 : i32
    %c0_i32_1 = arith.constant 0 : i32
    return %arg0, %c0_i32, %c0_i32_0 : i32, i32, i32
  }
}

</mosaic_0001>

<llo_original>
// kernel: tile.13
$region0: #{tile.13}
  #allocation0 [shape = 's32[1]{0}', space=sflag, size = 0x4, scoped, tag = 'scoped memory for tile.13']
  %s0 = inlined_call_operand.vmem [shape: f32[4], index: 0, kind: input, shape index: {}]
  %s1 = inlined_call_operand.vmem [shape: f32[2,4], index: 1, kind: output, shape index: {}]
  // Predicated region
  $region2: #{tile.13} parent=0 // pred_check
    _
  $region3: #{tile.13} parent=0 // pred_check_branch
    %3 = sbr.rel (0) target = $region5
  $region4: #{tile.13} parent=0 // pred_region
    _
  $region5: #{tile.13} parent=0 // pred_fallthru
    _
  %v4 = vld [vmem:[%s0] ss:$0 sm:$0xff]
  %5 = vst [vmem:[%s1] sm:$0x3] %v4

// kernel: tile.0
$region0: #{tile.0}
  %s0 = inlined_call_operand.vmem [shape: f32[2,4], index: 0, kind: input, shape index: {}]
  %s1 = inlined_call_operand.vmem [shape: f32[8,1], index: 1, kind: output, shape index: {}]
  $region1: #{tile.0} parent=0
    #allocation0 [shape = 'u8[4096]{0}', space=vmem, size = 0x1000, scoped, tag = 'scoped mem for input reshape']
    %s3 = sshll.u32 1, 2
    %s4 = ssub.s32 %s3, 1
    %v5 = vld [vmem:[%s0] sm:%s4]
    %6 = vst [vmem:[#allocation0] sm:%s4] %v5
    %v7 = vld [vmem:[#allocation0] sm:$0x3]
    %vm8 = vcmask 7168
    %9 = vst.msk [vmem:[%s1] ss:$4 sm:$0x3] %vm8, %v7
    %v10 = vld [vmem:[#allocation0] sm:$0x3]
    %11 = vrot.lane.b32.xlu0 %v10, 127
    %v12 = vpop.permute.xlu0 %11
    %vm13 = vcmask 7168
    %s14 = scalar_lea.vmem %s1, 1
    %15 = vst.msk [vmem:[%s14] ss:$4 sm:$0x3] %vm13, %v12
    %v16 = vld [vmem:[#allocation0] sm:$0x3]
    %17 = vrot.lane.b32.xlu0 %v16, 126
    %v18 = vpop.permute.xlu0 %17
    %vm19 = vcmask 7168
    %s20 = scalar_lea.vmem %s1, 2
    %21 = vst.msk [vmem:[%s20] ss:$4 sm:$0x3] %vm19, %v18
    %v22 = vld [vmem:[#allocation0] sm:$0x3]
    %23 = vrot.lane.b32.xlu0 %v22, 125
    %v24 = vpop.permute.xlu0 %23
    %vm25 = vcmask 7168
    %s26 = scalar_lea.vmem %s1, 3
    %27 = vst.msk [vmem:[%s26] ss:$4 sm:$0x3] %vm25, %v24

// kernel: basic_block_forward.1
$region0: #{basic_block_forward.1}
  #allocation0 [shape = 'u32[]', space=smem, size = 0x4, offset = 0x4, fixed_abs, tag = 'smem constant byte address 0x4 - core index']
  #allocation1 [shape = 'u32[144,128]{1,0:T(1,128)}', space=vmem, size = 0x12000, scoped, tag = 'internal scratch']
  #allocation2 [shape = 'f32[8,358]{1,0:T(8,128)}', space=vmem, size = 0x3000, scoped, tag = 'scratch operand']
  %s0 = inlined_call_operand.vmem [shape: f32[1,8,400], index: 0, kind: input, shape index: {}]
  %s1 = inlined_call_operand.vmem [shape: f32[9,8,8], index: 1, kind: input, shape index: {}]
  %s2 = inlined_call_operand.vmem [shape: f32[8,1], index: 2, kind: input, shape index: {}]
  %s3 = inlined_call_operand.vmem [shape: f32[1,358], index: 3, kind: input, shape index: {}]
  %s4 = inlined_call_operand.vmem [shape: f32[9,8,8], index: 4, kind: input, shape index: {}]
  %s5 = inlined_call_operand.vmem [shape: f32[8,1], index: 5, kind: input, shape index: {}]
  %s6 = inlined_call_operand.vmem [shape: f32[1,8,316], index: 6, kind: output, shape index: {}]
  %s7 = sld [smem:[#allocation0]]
  $region34: #{basic_block_forward.1} parent=0
    _
  %s9 = ssub.s32 1, %s7
  %s10 = scalar_select 0, %s9, %s7
  // Predicated region
  $region2: #{basic_block_forward.1} parent=0 // pred_check
    _
  $region3: #{basic_block_forward.1} parent=0 // pred_check_branch
    %12 = sbr.rel (0) target = $region5
  $region4: #{basic_block_forward.1} parent=0 // pred_region
    _
  $region5: #{basic_block_forward.1} parent=0 // pred_fallthru
    _
  // Predicated region
  $region6: #{basic_block_forward.1} parent=0 // pred_check
    _
  $region7: #{basic_block_forward.1} parent=0 // pred_check_branch
    %14 = sbr.rel (0) target = $region9
  $region8: #{basic_block_forward.1} parent=0 // pred_region
    _
  $region9: #{basic_block_forward.1} parent=0 // pred_fallthru
    _
  // Predicated region
  $region10: #{basic_block_forward.1} parent=0 // pred_check
    _
  $region11: #{basic_block_forward.1} parent=0 // pred_check_branch
    %16 = sbr.rel (0) target = $region13
  $region12: #{basic_block_forward.1} parent=0 // pred_region
    _
  $region13: #{basic_block_forward.1} parent=0 // pred_fallthru
    _
  // Predicated region
  $region14: #{basic_block_forward.1} parent=0 // pred_check
    _
  $region15: #{basic_block_forward.1} parent=0 // pred_check_branch
    %18 = sbr.rel (0) target = $region17
  $region16: #{basic_block_forward.1} parent=0 // pred_region
    _
  $region17: #{basic_block_forward.1} parent=0 // pred_fallthru
    _
  // Predicated region
  $region18: #{basic_block_forward.1} parent=0 // pred_check
    _
  $region19: #{basic_block_forward.1} parent=0 // pred_check_branch
    %20 = sbr.rel (0) target = $region21
  $region20: #{basic_block_forward.1} parent=0 // pred_region
    _
  $region21: #{basic_block_forward.1} parent=0 // pred_fallthru
    _
  // Predicated region
  $region22: #{basic_block_forward.1} parent=0 // pred_check
    _
  $region23: #{basic_block_forward.1} parent=0 // pred_check_branch
    %22 = sbr.rel (0) target = $region25
  $region24: #{basic_block_forward.1} parent=0 // pred_region
    _
  $region25: #{basic_block_forward.1} parent=0 // pred_fallthru
    _
  %v23 = vld [vmem:[%s1] sm:$0xff]
  %v24 = vld [vmem:[%s0] sm:$0xff]
  %v25 = vld [vmem:[%s0 + $0x8] sm:$0xff]
  %v26 = vld [vmem:[%s0 + $0x10] sm:$0xff]
  %s27 = scalar_lea.vmem %s1, 8
  %v28 = vld [vmem:[%s27] sm:$0xff]
  %32 = vrot.lane.b32.xlu0 %v24, 127
  %v33 = vpop.permute.xlu0 %32
  %34 = vrot.lane.b32.xlu0 %v25, 127
  %v35 = vpop.permute.xlu0 %34
  %36 = vrot.lane.b32.xlu0 %v26, 127
  %v37 = vpop.permute.xlu0 %36
  %vm38 = vcmask 1039360
  %v39 = vsel %vm38, %v33, %v35
  %v40 = vsel %vm38, %v35, %v37
  %vm44 = vcmask 64512
  %v46 = vsel %vm44, %v28, 0
  %48 = vmatprep.subr.mxu0 0.0
  %49 = vmatpush1.msra.mxu0 0.0
  %50 = vmatprep.subr.mxu0 0.0
  %51 = vmatpush1.msra.mxu0 0.0
  %52 = vmatprep.subr.mxu0 0.0
  %53 = vmatpush1.msra.mxu0 0.0
  %54 = vmatprep.subr.mxu0 0.0
  %55 = vmatpush1.msra.mxu0 0.0
  %56 = vmatprep.subr.mxu0 0.0
  %57 = vmatpush1.msra.mxu0 0.0
  %58 = vmatprep.subr.mxu0 0.0
  %59 = vmatpush1.msra.mxu0 0.0
  %60 = vmatprep.subr.mxu0 0.0
  %61 = vmatpush1.msra.mxu0 0.0
  %62 = vmatprep.subr.mxu0 0.0
  %63 = vmatpush1.msra.mxu0 0.0
  %64 = vmatprep.subr.mxu0 0.0
  %65 = vmatpush1.msra.mxu0 0.0
  %66 = vmatprep.subr.mxu0 0.0
  %67 = vmatpush1.msra.mxu0 0.0
  %68 = vmatprep.subr.mxu0 0.0
  %69 = vmatpush1.msra.mxu0 0.0
  %70 = vmatprep.subr.mxu0 0.0
  %71 = vmatpush1.msra.mxu0 0.0
  %72 = vmatprep.subr.mxu0 0.0
  %73 = vmatpush1.msra.mxu0 0.0
  %74 = vmatprep.subr.mxu0 0.0
  %75 = vmatpush1.msra.mxu0 0.0
  %76 = vmatprep.subr.mxu0 0.0
  %77 = vmatpush1.msra.mxu0 0.0
  %78 = vmatprep.subr.mxu0 %v40
  %79 = vmatpush1.msra.mxu0 %v39
  %80 = vmatprep.subr.mxu0 0.0
  %81 = vmatpush2.msra.mxu0 0.0
  %82 = vmatprep.subr.mxu0 0.0
  %83 = vmatpush2.msra.mxu0 0.0
  %84 = vmatprep.subr.mxu0 0.0
  %85 = vmatpush2.msra.mxu0 0.0
  %86 = vmatprep.subr.mxu0 0.0
  %87 = vmatpush2.msra.mxu0 0.0
  %88 = vmatprep.subr.mxu0 0.0
  %89 = vmatpush2.msra.mxu0 0.0
  %90 = vmatprep.subr.mxu0 0.0
  %91 = vmatpush2.msra.mxu0 0.0
  %92 = vmatprep.subr.mxu0 0.0
  %93 = vmatpush2.msra.mxu0 0.0
  %94 = vmatprep.subr.mxu0 0.0
  %95 = vmatpush2.msra.mxu0 0.0
  %96 = vmatprep.subr.mxu0 0.0
  %97 = vmatpush2.msra.mxu0 0.0
  %98 = vmatprep.subr.mxu0 0.0
  %99 = vmatpush2.msra.mxu0 0.0
  %100 = vmatprep.subr.mxu0 0.0
  %101 = vmatpush2.msra.mxu0 0.0
  %102 = vmatprep.subr.mxu0 0.0
  %103 = vmatpush2.msra.mxu0 0.0
  %104 = vmatprep.subr.mxu0 0.0
  %105 = vmatpush2.msra.mxu0 0.0
  %106 = vmatprep.subr.mxu0 0.0
  %107 = vmatpush2.msra.mxu0 0.0
  %108 = vmatprep.subr.mxu0 0.0
  %109 = vmatpush2.msra.mxu0 0.0
  %110 = vmatprep.subr.mxu0 0.0
  %111 = vmatpush2.msra.mxu0 0.0
  %112 = vmatprep.mubr.f32.mxu0 0.0
  %113 = vmatmul.mubr.f32.gmra.mxu0 %v46
  %v114 = vpop.f32.mrf.mxu0
  %v115 = vadd.f32 0.0, %v114
  %v116 = vpop.f32.mrf.mxu0
  %v117 = vadd.f32 0.0, %v116
  %118 = vdwg.mxu0
  %119 = vmatprep.subr.mxu0 0.0
  %120 = vmatpush1.msra.mxu0 0.0
  %121 = vmatprep.subr.mxu0 0.0
  %122 = vmatpush1.msra.mxu0 0.0
  %123 = vmatprep.subr.mxu0 0.0
  %124 = vmatpush1.msra.mxu0 0.0
  %125 = vmatprep.subr.mxu0 0.0
  %126 = vmatpush1.msra.mxu0 0.0
  %127 = vmatprep.subr.mxu0 0.0
  %128 = vmatpush1.msra.mxu0 0.0
  %129 = vmatprep.subr.mxu0 0.0
  %130 = vmatpush1.msra.mxu0 0.0
  %131 = vmatprep.subr.mxu0 0.0
  %132 = vmatpush1.msra.mxu0 0.0
  %133 = vmatprep.subr.mxu0 0.0
  %134 = vmatpush1.msra.mxu0 0.0
  %135 = vmatprep.subr.mxu0 0.0
  %136 = vmatpush1.msra.mxu0 0.0
  %137 = vmatprep.subr.mxu0 0.0
  %138 = vmatpush1.msra.mxu0 0.0
  %139 = vmatprep.subr.mxu0 0.0
  %140 = vmatpush1.msra.mxu0 0.0
  %141 = vmatprep.subr.mxu0 0.0
  %142 = vmatpush1.msra.mxu0 0.0
  %143 = vmatprep.subr.mxu0 0.0
  %144 = vmatpush1.msra.mxu0 0.0
  %145 = vmatprep.subr.mxu0 0.0
  %146 = vmatpush1.msra.mxu0 0.0
  %147 = vmatprep.subr.mxu0 0.0
  %148 = vmatpush1.msra.mxu0 0.0
  %149 = vmatprep.subr.mxu0 0.0
  %150 = vmatpush1.msra.mxu0 %v37
  %151 = vmatprep.subr.mxu0 0.0
  %152 = vmatpush2.msra.mxu0 0.0
  %153 = vmatprep.subr.mxu0 0.0
  %154 = vmatpush2.msra.mxu0 0.0
  %155 = vmatprep.subr.mxu0 0.0
  %156 = vmatpush2.msra.mxu0 0.0
  %157 = vmatprep.subr.mxu0 0.0
  %158 = vmatpush2.msra.mxu0 0.0
  %159 = vmatprep.subr.mxu0 0.0
  %160 = vmatpush2.msra.mxu0 0.0
  %161 = vmatprep.subr.mxu0 0.0
  %162 = vmatpush2.msra.mxu0 0.0
  %163 = vmatprep.subr.mxu0 0.0
  %164 = vmatpush2.msra.mxu0 0.0
  %165 = vmatprep.subr.mxu0 0.0
  %166 = vmatpush2.msra.mxu0 0.0
  %167 = vmatprep.subr.mxu0 0.0
  %168 = vmatpush2.msra.mxu0 0.0
  %169 = vmatprep.subr.mxu0 0.0
  %170 = vmatpush2.msra.mxu0 0.0
  %171 = vmatprep.subr.mxu0 0.0
  %172 = vmatpush2.msra.mxu0 0.0
  %173 = vmatprep.subr.mxu0 0.0
  %174 = vmatpush2.msra.mxu0 0.0
  %175 = vmatprep.subr.mxu0 0.0
  %176 = vmatpush2.msra.mxu0 0.0
  %177 = vmatprep.subr.mxu0 0.0
  %178 = vmatpush2.msra.mxu0 0.0
  %179 = vmatprep.subr.mxu0 0.0
  %180 = vmatpush2.msra.mxu0 0.0
  %181 = vmatprep.subr.mxu0 0.0
  %182 = vmatpush2.msra.mxu0 0.0
  %183 = vmatprep.mubr.f32.mxu0 0.0
  %184 = vmatmul.mubr.f32.gmra.mxu0 %v46
  %v185 = vpop.f32.mrf.mxu0
  %v186 = vadd.f32 0.0, %v185
  %v187 = vpop.f32.mrf.mxu0
  %188 = vdwg.mxu0
  %v190 = vsel %vm44, %v23, 0
  %192 = vmatprep.subr.mxu0 0.0
  %193 = vmatpush1.msra.mxu0 0.0
  %194 = vmatprep.subr.mxu0 0.0
  %195 = vmatpush1.msra.mxu0 0.0
  %196 = vmatprep.subr.mxu0 0.0
  %197 = vmatpush1.msra.mxu0 0.0
  %198 = vmatprep.subr.mxu0 0.0
  %199 = vmatpush1.msra.mxu0 0.0
  %200 = vmatprep.subr.mxu0 0.0
  %201 = vmatpush1.msra.mxu0 0.0
  %202 = vmatprep.subr.mxu0 0.0
  %203 = vmatpush1.msra.mxu0 0.0
  %204 = vmatprep.subr.mxu0 0.0
  %205 = vmatpush1.msra.mxu0 0.0
  %206 = vmatprep.subr.mxu0 0.0
  %207 = vmatpush1.msra.mxu0 0.0
  %208 = vmatprep.subr.mxu0 0.0
  %209 = vmatpush1.msra.mxu0 0.0
  %210 = vmatprep.subr.mxu0 0.0
  %211 = vmatpush1.msra.mxu0 0.0
  %212 = vmatprep.subr.mxu0 0.0
  %213 = vmatpush1.msra.mxu0 0.0
  %214 = vmatprep.subr.mxu0 0.0
  %215 = vmatpush1.msra.mxu0 0.0
  %216 = vmatprep.subr.mxu0 0.0
  %217 = vmatpush1.msra.mxu0 0.0
  %218 = vmatprep.subr.mxu0 0.0
  %219 = vmatpush1.msra.mxu0 0.0
  %220 = vmatprep.subr.mxu0 0.0
  %221 = vmatpush1.msra.mxu0 0.0
  %222 = vmatprep.subr.mxu0 %v25
  %223 = vmatpush1.msra.mxu0 %v24
  %224 = vmatprep.subr.mxu0 0.0
  %225 = vmatpush2.msra.mxu0 0.0
  %226 = vmatprep.subr.mxu0 0.0
  %227 = vmatpush2.msra.mxu0 0.0
  %228 = vmatprep.subr.mxu0 0.0
  %229 = vmatpush2.msra.mxu0 0.0
  %230 = vmatprep.subr.mxu0 0.0
  %231 = vmatpush2.msra.mxu0 0.0
  %232 = vmatprep.subr.mxu0 0.0
  %233 = vmatpush2.msra.mxu0 0.0
  %234 = vmatprep.subr.mxu0 0.0
  %235 = vmatpush2.msra.mxu0 0.0
  %236 = vmatprep.subr.mxu0 0.0
  %237 = vmatpush2.msra.mxu0 0.0
  %238 = vmatprep.subr.mxu0 0.0
  %239 = vmatpush2.msra.mxu0 0.0
  %240 = vmatprep.subr.mxu0 0.0
  %241 = vmatpush2.msra.mxu0 0.0
  %242 = vmatprep.subr.mxu0 0.0
  %243 = vmatpush2.msra.mxu0 0.0
  %244 = vmatprep.subr.mxu0 0.0
  %245 = vmatpush2.msra.mxu0 0.0
  %246 = vmatprep.subr.mxu0 0.0
  %247 = vmatpush2.msra.mxu0 0.0
  %248 = vmatprep.subr.mxu0 0.0
  %249 = vmatpush2.msra.mxu0 0.0
  %250 = vmatprep.subr.mxu0 0.0
  %251 = vmatpush2.msra.mxu0 0.0
  %252 = vmatprep.subr.mxu0 0.0
  %253 = vmatpush2.msra.mxu0 0.0
  %254 = vmatprep.subr.mxu0 0.0
  %255 = vmatpush2.msra.mxu0 0.0
  %256 = vmatprep.mubr.f32.mxu0 0.0
  %257 = vmatmul.mubr.f32.gmra.mxu0 %v190
  %v258 = vpop.f32.mrf.mxu0
  %v259 = vadd.f32 %v115, %v258
  %v260 = vpop.f32.mrf.mxu0
  %v261 = vadd.f32 %v117, %v260
  %262 = vdwg.mxu0
  %263 = vmatprep.subr.mxu0 0.0
  %264 = vmatpush1.msra.mxu0 0.0
  %265 = vmatprep.subr.mxu0 0.0
  %266 = vmatpush1.msra.mxu0 0.0
  %267 = vmatprep.subr.mxu0 0.0
  %268 = vmatpush1.msra.mxu0 0.0
  %269 = vmatprep.subr.mxu0 0.0
  %270 = vmatpush1.msra.mxu0 0.0
  %271 = vmatprep.subr.mxu0 0.0
  %272 = vmatpush1.msra.mxu0 0.0
  %273 = vmatprep.subr.mxu0 0.0
  %274 = vmatpush1.msra.mxu0 0.0
  %275 = vmatprep.subr.mxu0 0.0
  %276 = vmatpush1.msra.mxu0 0.0
  %277 = vmatprep.subr.mxu0 0.0
  %278 = vmatpush1.msra.mxu0 0.0
  %279 = vmatprep.subr.mxu0 0.0
  %280 = vmatpush1.msra.mxu0 0.0
  %281 = vmatprep.subr.mxu0 0.0
  %282 = vmatpush1.msra.mxu0 0.0
  %283 = vmatprep.subr.mxu0 0.0
  %284 = vmatpush1.msra.mxu0 0.0
  %285 = vmatprep.subr.mxu0 0.0
  %286 = vmatpush1.msra.mxu0 0.0
  %287 = vmatprep.subr.mxu0 0.0
  %288 = vmatpush1.msra.mxu0 0.0
  %289 = vmatprep.subr.mxu0 0.0
  %290 = vmatpush1.msra.mxu0 0.0
  %291 = vmatprep.subr.mxu0 0.0
  %292 = vmatpush1.msra.mxu0 0.0
  %293 = vmatprep.subr.mxu0 0.0
  %294 = vmatpush1.msra.mxu0 %v26
  %295 = vmatprep.subr.mxu0 0.0
  %296 = vmatpush2.msra.mxu0 0.0
  %297 = vmatprep.subr.mxu0 0.0
  %298 = vmatpush2.msra.mxu0 0.0
  %299 = vmatprep.subr.mxu0 0.0
  %300 = vmatpush2.msra.mxu0 0.0
  %301 = vmatprep.subr.mxu0 0.0
  %302 = vmatpush2.msra.mxu0 0.0
  %303 = vmatprep.subr.mxu0 0.0
  %304 = vmatpush2.msra.mxu0 0.0
  %305 = vmatprep.subr.mxu0 0.0
  %306 = vmatpush2.msra.mxu0 0.0
  %307 = vmatprep.subr.mxu0 0.0
  %308 = vmatpush2.msra.mxu0 0.0
  %309 = vmatprep.subr.mxu0 0.0
  %310 = vmatpush2.msra.mxu0 0.0
  %311 = vmatprep.subr.mxu0 0.0
  %312 = vmatpush2.msra.mxu0 0.0
  %313 = vmatprep.subr.mxu0 0.0
  %314 = vmatpush2.msra.mxu0 0.0
  %315 = vmatprep.subr.mxu0 0.0
  %316 = vmatpush2.msra.mxu0 0.0
  %317 = vmatprep.subr.mxu0 0.0
  %318 = vmatpush2.msra.mxu0 0.0
  %319 = vmatprep.subr.mxu0 0.0
  %320 = vmatpush2.msra.mxu0 0.0
  %321 = vmatprep.subr.mxu0 0.0
  %322 = vmatpush2.msra.mxu0 0.0
  %323 = vmatprep.subr.mxu0 0.0
  %324 = vmatpush2.msra.mxu0 0.0
  %325 = vmatprep.subr.mxu0 0.0
  %326 = vmatpush2.msra.mxu0 0.0
  %327 = vmatprep.mubr.f32.mxu0 0.0
  %328 = vmatmul.mubr.f32.gmra.mxu0 %v190
  %v329 = vpop.f32.mrf.mxu0
  %v330 = vadd.f32 %v186, %v329
  %v331 = vpop.f32.mrf.mxu0
  %332 = vdwg.mxu0
  %s333 = scalar_lea.vmem %s1, 16
  %v334 = vld [vmem:[%s333] sm:$0xff]
  %335 = vrot.lane.b32.xlu0 %v24, 126
  %v336 = vpop.permute.xlu0 %335
  %337 = vrot.lane.b32.xlu0 %v25, 126
  %v338 = vpop.permute.xlu0 %337
  %339 = vrot.lane.b32.xlu0 %v26, 126
  %v340 = vpop.permute.xlu0 %339
  %vm341 = vcmask 1031168
  %v342 = vsel %vm341, %v336, %v338
  %v343 = vsel %vm341, %v338, %v340
  %v348 = vsel %vm44, %v334, 0
  %350 = vmatprep.subr.mxu0 0.0
  %351 = vmatpush1.msra.mxu0 0.0
  %352 = vmatprep.subr.mxu0 0.0
  %353 = vmatpush1.msra.mxu0 0.0
  %354 = vmatprep.subr.mxu0 0.0
  %355 = vmatpush1.msra.mxu0 0.0
  %356 = vmatprep.subr.mxu0 0.0
  %357 = vmatpush1.msra.mxu0 0.0
  %358 = vmatprep.subr.mxu0 0.0
  %359 = vmatpush1.msra.mxu0 0.0
  %360 = vmatprep.subr.mxu0 0.0
  %361 = vmatpush1.msra.mxu0 0.0
  %362 = vmatprep.subr.mxu0 0.0
  %363 = vmatpush1.msra.mxu0 0.0
  %364 = vmatprep.subr.mxu0 0.0
  %365 = vmatpush1.msra.mxu0 0.0
  %366 = vmatprep.subr.mxu0 0.0
  %367 = vmatpush1.msra.mxu0 0.0
  %368 = vmatprep.subr.mxu0 0.0
  %369 = vmatpush1.msra.mxu0 0.0
  %370 = vmatprep.subr.mxu0 0.0
  %371 = vmatpush1.msra.mxu0 0.0
  %372 = vmatprep.subr.mxu0 0.0
  %373 = vmatpush1.msra.mxu0 0.0
  %374 = vmatprep.subr.mxu0 0.0
  %375 = vmatpush1.msra.mxu0 0.0
  %376 = vmatprep.subr.mxu0 0.0
  %377 = vmatpush1.msra.mxu0 0.0
  %378 = vmatprep.subr.mxu0 0.0
  %379 = vmatpush1.msra.mxu0 0.0
  %380 = vmatprep.subr.mxu0 %v343
  %381 = vmatpush1.msra.mxu0 %v342
  %382 = vmatprep.subr.mxu0 0.0
  %383 = vmatpush2.msra.mxu0 0.0
  %384 = vmatprep.subr.mxu0 0.0
  %385 = vmatpush2.msra.mxu0 0.0
  %386 = vmatprep.subr.mxu0 0.0
  %387 = vmatpush2.msra.mxu0 0.0
  %388 = vmatprep.subr.mxu0 0.0
  %389 = vmatpush2.msra.mxu0 0.0
  %390 = vmatprep.subr.mxu0 0.0
  %391 = vmatpush2.msra.mxu0 0.0
  %392 = vmatprep.subr.mxu0 0.0
  %393 = vmatpush2.msra.mxu0 0.0
  %394 = vmatprep.subr.mxu0 0.0
  %395 = vmatpush2.msra.mxu0 0.0
  %396 = vmatprep.subr.mxu0 0.0
  %397 = vmatpush2.msra.mxu0 0.0
  %398 = vmatprep.subr.mxu0 0.0
  %399 = vmatpush2.msra.mxu0 0.0
  %400 = vmatprep.subr.mxu0 0.0
  %401 = vmatpush2.msra.mxu0 0.0
  %402 = vmatprep.subr.mxu0 0.0
  %403 = vmatpush2.msra.mxu0 0.0
  %404 = vmatprep.subr.mxu0 0.0
  %405 = vmatpush2.msra.mxu0 0.0
  %406 = vmatprep.subr.mxu0 0.0
  %407 = vmatpush2.msra.mxu0 0.0
  %408 = vmatprep.subr.mxu0 0.0
  %409 = vmatpush2.msra.mxu0 0.0
  %410 = vmatprep.subr.mxu0 0.0
  %411 = vmatpush2.msra.mxu0 0.0
  %412 = vmatprep.subr.mxu0 0.0
  %413 = vmatpush2.msra.mxu0 0.0
  %414 = vmatprep.mubr.f32.mxu0 0.0
  %415 = vmatmul.mubr.f32.gmra.mxu0 %v348
  %v416 = vpop.f32.mrf.mxu0
  %v417 = vadd.f32 0.0, %v416
  %v418 = vpop.f32.mrf.mxu0
  %v419 = vadd.f32 0.0, %v418
  %420 = vdwg.mxu0
  %421 = vmatprep.subr.mxu0 0.0
  %422 = vmatpush1.msra.mxu0 0.0
  %423 = vmatprep.subr.mxu0 0.0
  %424 = vmatpush1.msra.mxu0 0.0
  %425 = vmatprep.subr.mxu0 0.0
  %426 = vmatpush1.msra.mxu0 0.0
  %427 = vmatprep.subr.mxu0 0.0
  %428 = vmatpush1.msra.mxu0 0.0
  %429 = vmatprep.subr.mxu0 0.0
  %430 = vmatpush1.msra.mxu0 0.0
  %431 = vmatprep.subr.mxu0 0.0
  %432 = vmatpush1.msra.mxu0 0.0
  %433 = vmatprep.subr.mxu0 0.0
  %434 = vmatpush1.msra.mxu0 0.0
  %435 = vmatprep.subr.mxu0 0.0
  %436 = vmatpush1.msra.mxu0 0.0
  %437 = vmatprep.subr.mxu0 0.0
  %438 = vmatpush1.msra.mxu0 0.0
  %439 = vmatprep.subr.mxu0 0.0
  %440 = vmatpush1.msra.mxu0 0.0
  %441 = vmatprep.subr.mxu0 0.0
  %442 = vmatpush1.msra.mxu0 0.0
  %443 = vmatprep.subr.mxu0 0.0
  %444 = vmatpush1.msra.mxu0 0.0
  %445 = vmatprep.subr.mxu0 0.0
  %446 = vmatpush1.msra.mxu0 0.0
  %447 = vmatprep.subr.mxu0 0.0
  %448 = vmatpush1.msra.mxu0 0.0
  %449 = vmatprep.subr.mxu0 0.0
  %450 = vmatpush1.msra.mxu0 0.0
  %451 = vmatprep.subr.mxu0 0.0
  %452 = vmatpush1.msra.mxu0 %v340
  %453 = vmatprep.subr.mxu0 0.0
  %454 = vmatpush2.msra.mxu0 0.0
  %455 = vmatprep.subr.mxu0 0.0
  %456 = vmatpush2.msra.mxu0 0.0
  %457 = vmatprep.subr.mxu0 0.0
  %458 = vmatpush2.msra.mxu0 0.0
  %459 = vmatprep.subr.mxu0 0.0
  %460 = vmatpush2.msra.mxu0 0.0
  %461 = vmatprep.subr.mxu0 0.0
  %462 = vmatpush2.msra.mxu0 0.0
  %463 = vmatprep.subr.mxu0 0.0
  %464 = vmatpush2.msra.mxu0 0.0
  %465 = vmatprep.subr.mxu0 0.0
  %466 = vmatpush2.msra.mxu0 0.0
  %467 = vmatprep.subr.mxu0 0.0
  %468 = vmatpush2.msra.mxu0 0.0
  %469 = vmatprep.subr.mxu0 0.0
  %470 = vmatpush2.msra.mxu0 0.0
  %471 = vmatprep.subr.mxu0 0.0
  %472 = vmatpush2.msra.mxu0 0.0
  %473 = vmatprep.subr.mxu0 0.0
  %474 = vmatpush2.msra.mxu0 0.0
  %475 = vmatprep.subr.mxu0 0.0
  %476 = vmatpush2.msra.mxu0 0.0
  %477 = vmatprep.subr.mxu0 0.0
  %478 = vmatpush2.msra.mxu0 0.0
  %479 = vmatprep.subr.mxu0 0.0
  %480 = vmatpush2.msra.mxu0 0.0
  %481 = vmatprep.subr.mxu0 0.0
  %482 = vmatpush2.msra.mxu0 0.0
  %483 = vmatprep.subr.mxu0 0.0
  %484 = vmatpush2.msra.mxu0 0.0
  %485 = vmatprep.mubr.f32.mxu0 0.0
  %486 = vmatmul.mubr.f32.gmra.mxu0 %v348
  %v487 = vpop.f32.mrf.mxu0
  %v488 = vadd.f32 0.0, %v487
  %v489 = vpop.f32.mrf.mxu0
  %490 = vdwg.mxu0
  %v491 = vadd.f32 %v259, %v417
  %v492 = vadd.f32 %v261, %v419
  %v493 = vadd.f32 %v330, %v488
  %s494 = scalar_lea.vmem %s1, 24
  %v495 = vld [vmem:[%s494] sm:$0xff]
  %496 = vrot.lane.b32.xlu0 %v24, 108
  %v497 = vpop.permute.xlu0 %496
  %498 = vrot.lane.b32.xlu0 %v25, 108
  %v499 = vpop.permute.xlu0 %498
  %500 = vrot.lane.b32.xlu0 %v26, 108
  %v501 = vpop.permute.xlu0 %500
  %vm502 = vcmask 883712
  %v503 = vsel %vm502, %v497, %v499
  %v504 = vsel %vm502, %v499, %v501
  %v509 = vsel %vm44, %v495, 0
  %511 = vmatprep.subr.mxu0 0.0
  %512 = vmatpush1.msra.mxu0 0.0
  %513 = vmatprep.subr.mxu0 0.0
  %514 = vmatpush1.msra.mxu0 0.0
  %515 = vmatprep.subr.mxu0 0.0
  %516 = vmatpush1.msra.mxu0 0.0
  %517 = vmatprep.subr.mxu0 0.0
  %518 = vmatpush1.msra.mxu0 0.0
  %519 = vmatprep.subr.mxu0 0.0
  %520 = vmatpush1.msra.mxu0 0.0
  %521 = vmatprep.subr.mxu0 0.0
  %522 = vmatpush1.msra.mxu0 0.0
  %523 = vmatprep.subr.mxu0 0.0
  %524 = vmatpush1.msra.mxu0 0.0
  %525 = vmatprep.subr.mxu0 0.0
  %526 = vmatpush1.msra.mxu0 0.0
  %527 = vmatprep.subr.mxu0 0.0
  %528 = vmatpush1.msra.mxu0 0.0
  %529 = vmatprep.subr.mxu0 0.0
  %530 = vmatpush1.msra.mxu0 0.0
  %531 = vmatprep.subr.mxu0 0.0
  %532 = vmatpush1.msra.mxu0 0.0
  %533 = vmatprep.subr.mxu0 0.0
  %534 = vmatpush1.msra.mxu0 0.0
  %535 = vmatprep.subr.mxu0 0.0
  %536 = vmatpush1.msra.mxu0 0.0
  %537 = vmatprep.subr.mxu0 0.0
  %538 = vmatpush1.msra.mxu0 0.0
  %539 = vmatprep.subr.mxu0 0.0
  %540 = vmatpush1.msra.mxu0 0.0
  %541 = vmatprep.subr.mxu0 %v504
  %542 = vmatpush1.msra.mxu0 %v503
  %543 = vmatprep.subr.mxu0 0.0
  %544 = vmatpush2.msra.mxu0 0.0
  %545 = vmatprep.subr.mxu0 0.0
  %546 = vmatpush2.msra.mxu0 0.0
  %547 = vmatprep.subr.mxu0 0.0
  %548 = vmatpush2.msra.mxu0 0.0
  %549 = vmatprep.subr.mxu0 0.0
  %550 = vmatpush2.msra.mxu0 0.0
  %551 = vmatprep.subr.mxu0 0.0
  %552 = vmatpush2.msra.mxu0 0.0
  %553 = vmatprep.subr.mxu0 0.0
  %554 = vmatpush2.msra.mxu0 0.0
  %555 = vmatprep.subr.mxu0 0.0
  %556 = vmatpush2.msra.mxu0 0.0
  %557 = vmatprep.subr.mxu0 0.0
  %558 = vmatpush2.msra.mxu0 0.0
  %559 = vmatprep.subr.mxu0 0.0
  %560 = vmatpush2.msra.mxu0 0.0
  %561 = vmatprep.subr.mxu0 0.0
  %562 = vmatpush2.msra.mxu0 0.0
  %563 = vmatprep.subr.mxu0 0.0
  %564 = vmatpush2.msra.mxu0 0.0
  %565 = vmatprep.subr.mxu0 0.0
  %566 = vmatpush2.msra.mxu0 0.0
  %567 = vmatprep.subr.mxu0 0.0
  %568 = vmatpush2.msra.mxu0 0.0
  %569 = vmatprep.subr.mxu0 0.0
  %570 = vmatpush2.msra.mxu0 0.0
  %571 = vmatprep.subr.mxu0 0.0
  %572 = vmatpush2.msra.mxu0 0.0
  %573 = vmatprep.subr.mxu0 0.0
  %574 = vmatpush2.msra.mxu0 0.0
  %575 = vmatprep.mubr.f32.mxu0 0.0
  %576 = vmatmul.mubr.f32.gmra.mxu0 %v509
  %v577 = vpop.f32.mrf.mxu0
  %v578 = vadd.f32 0.0, %v577
  %v579 = vpop.f32.mrf.mxu0
  %v580 = vadd.f32 0.0, %v579
  %581 = vdwg.mxu0
  %582 = vmatprep.subr.mxu0 0.0
  %583 = vmatpush1.msra.mxu0 0.0
  %584 = vmatprep.subr.mxu0 0.0
  %585 = vmatpush1.msra.mxu0 0.0
  %586 = vmatprep.subr.mxu0 0.0
  %587 = vmatpush1.msra.mxu0 0.0
  %588 = vmatprep.subr.mxu0 0.0
  %589 = vmatpush1.msra.mxu0 0.0
  %590 = vmatprep.subr.mxu0 0.0
  %591 = vmatpush1.msra.mxu0 0.0
  %592 = vmatprep.subr.mxu0 0.0
  %593 = vmatpush1.msra.mxu0 0.0
  %594 = vmatprep.subr.mxu0 0.0
  %595 = vmatpush1.msra.mxu0 0.0
  %596 = vmatprep.subr.mxu0 0.0
  %597 = vmatpush1.msra.mxu0 0.0
  %598 = vmatprep.subr.mxu0 0.0
  %599 = vmatpush1.msra.mxu0 0.0
  %600 = vmatprep.subr.mxu0 0.0
  %601 = vmatpush1.msra.mxu0 0.0
  %602 = vmatprep.subr.mxu0 0.0
  %603 = vmatpush1.msra.mxu0 0.0
  %604 = vmatprep.subr.mxu0 0.0
  %605 = vmatpush1.msra.mxu0 0.0
  %606 = vmatprep.subr.mxu0 0.0
  %607 = vmatpush1.msra.mxu0 0.0
  %608 = vmatprep.subr.mxu0 0.0
  %609 = vmatpush1.msra.mxu0 0.0
  %610 = vmatprep.subr.mxu0 0.0
  %611 = vmatpush1.msra.mxu0 0.0
  %612 = vmatprep.subr.mxu0 0.0
  %613 = vmatpush1.msra.mxu0 %v501
  %614 = vmatprep.subr.mxu0 0.0
  %615 = vmatpush2.msra.mxu0 0.0
  %616 = vmatprep.subr.mxu0 0.0
  %617 = vmatpush2.msra.mxu0 0.0
  %618 = vmatprep.subr.mxu0 0.0
  %619 = vmatpush2.msra.mxu0 0.0
  %620 = vmatprep.subr.mxu0 0.0
  %621 = vmatpush2.msra.mxu0 0.0
  %622 = vmatprep.subr.mxu0 0.0
  %623 = vmatpush2.msra.mxu0 0.0
  %624 = vmatprep.subr.mxu0 0.0
  %625 = vmatpush2.msra.mxu0 0.0
  %626 = vmatprep.subr.mxu0 0.0
  %627 = vmatpush2.msra.mxu0 0.0
  %628 = vmatprep.subr.mxu0 0.0
  %629 = vmatpush2.msra.mxu0 0.0
  %630 = vmatprep.subr.mxu0 0.0
  %631 = vmatpush2.msra.mxu0 0.0
  %632 = vmatprep.subr.mxu0 0.0
  %633 = vmatpush2.msra.mxu0 0.0
  %634 = vmatprep.subr.mxu0 0.0
  %635 = vmatpush2.msra.mxu0 0.0
  %636 = vmatprep.subr.mxu0 0.0
  %637 = vmatpush2.msra.mxu0 0.0
  %638 = vmatprep.subr.mxu0 0.0
  %639 = vmatpush2.msra.mxu0 0.0
  %640 = vmatprep.subr.mxu0 0.0
  %641 = vmatpush2.msra.mxu0 0.0
  %642 = vmatprep.subr.mxu0 0.0
  %643 = vmatpush2.msra.mxu0 0.0
  %644 = vmatprep.subr.mxu0 0.0
  %645 = vmatpush2.msra.mxu0 0.0
  %646 = vmatprep.mubr.f32.mxu0 0.0
  %647 = vmatmul.mubr.f32.gmra.mxu0 %v509
  %v648 = vpop.f32.mrf.mxu0
  %v649 = vadd.f32 0.0, %v648
  %v650 = vpop.f32.mrf.mxu0
  %651 = vdwg.mxu0
  %v652 = vadd.f32 %v491, %v578
  %v653 = vadd.f32 %v492, %v580
  %v654 = vadd.f32 %v493, %v649
  %s655 = scalar_lea.vmem %s1, 32
  %v656 = vld [vmem:[%s655] sm:$0xff]
  %657 = vrot.lane.b32.xlu0 %v24, 107
  %v658 = vpop.permute.xlu0 %657
  %659 = vrot.lane.b32.xlu0 %v25, 107
  %v660 = vpop.permute.xlu0 %659
  %661 = vrot.lane.b32.xlu0 %v26, 107
  %v662 = vpop.permute.xlu0 %661
  %vm663 = vcmask 875520
  %v664 = vsel %vm663, %v658, %v660
  %v665 = vsel %vm663, %v660, %v662
  %v670 = vsel %vm44, %v656, 0
  %672 = vmatprep.subr.mxu0 0.0
  %673 = vmatpush1.msra.mxu0 0.0
  %674 = vmatprep.subr.mxu0 0.0
  %675 = vmatpush1.msra.mxu0 0.0
  %676 = vmatprep.subr.mxu0 0.0
  %677 = vmatpush1.msra.mxu0 0.0
  %678 = vmatprep.subr.mxu0 0.0
  %679 = vmatpush1.msra.mxu0 0.0
  %680 = vmatprep.subr.mxu0 0.0
  %681 = vmatpush1.msra.mxu0 0.0
  %682 = vmatprep.subr.mxu0 0.0
  %683 = vmatpush1.msra.mxu0 0.0
  %684 = vmatprep.subr.mxu0 0.0
  %685 = vmatpush1.msra.mxu0 0.0
  %686 = vmatprep.subr.mxu0 0.0
  %687 = vmatpush1.msra.mxu0 0.0
  %688 = vmatprep.subr.mxu0 0.0
  %689 = vmatpush1.msra.mxu0 0.0
  %690 = vmatprep.subr.mxu0 0.0
  %691 = vmatpush1.msra.mxu0 0.0
  %692 = vmatprep.subr.mxu0 0.0
  %693 = vmatpush1.msra.mxu0 0.0
  %694 = vmatprep.subr.mxu0 0.0
  %695 = vmatpush1.msra.mxu0 0.0
  %696 = vmatprep.subr.mxu0 0.0
  %697 = vmatpush1.msra.mxu0 0.0
  %698 = vmatprep.subr.mxu0 0.0
  %699 = vmatpush1.msra.mxu0 0.0
  %700 = vmatprep.subr.mxu0 0.0
  %701 = vmatpush1.msra.mxu0 0.0
  %702 = vmatprep.subr.mxu0 %v665
  %703 = vmatpush1.msra.mxu0 %v664
  %704 = vmatprep.subr.mxu0 0.0
  %705 = vmatpush2.msra.mxu0 0.0
  %706 = vmatprep.subr.mxu0 0.0
  %707 = vmatpush2.msra.mxu0 0.0
  %708 = vmatprep.subr.mxu0 0.0
  %709 = vmatpush2.msra.mxu0 0.0
  %710 = vmatprep.subr.mxu0 0.0
  %711 = vmatpush2.msra.mxu0 0.0
  %712 = vmatprep.subr.mxu0 0.0
  %713 = vmatpush2.msra.mxu0 0.0
  %714 = vmatprep.subr.mxu0 0.0
  %715 = vmatpush2.msra.mxu0 0.0
  %716 = vmatprep.subr.mxu0 0.0
  %717 = vmatpush2.msra.mxu0 0.0
  %718 = vmatprep.subr.mxu0 0.0
  %719 = vmatpush2.msra.mxu0 0.0
  %720 = vmatprep.subr.mxu0 0.0
  %721 = vmatpush2.msra.mxu0 0.0
  %722 = vmatprep.subr.mxu0 0.0
  %723 = vmatpush2.msra.mxu0 0.0
  %724 = vmatprep.subr.mxu0 0.0
  %725 = vmatpush2.msra.mxu0 0.0
  %726 = vmatprep.subr.mxu0 0.0
  %727 = vmatpush2.msra.mxu0 0.0
  %728 = vmatprep.subr.mxu0 0.0
  %729 = vmatpush2.msra.mxu0 0.0
  %730 = vmatprep.subr.mxu0 0.0
  %731 = vmatpush2.msra.mxu0 0.0
  %732 = vmatprep.subr.mxu0 0.0
  %733 = vmatpush2.msra.mxu0 0.0
  %734 = vmatprep.subr.mxu0 0.0
  %735 = vmatpush2.msra.mxu0 0.0
  %736 = vmatprep.mubr.f32.mxu0 0.0
  %737 = vmatmul.mubr.f32.gmra.mxu0 %v670
  %v738 = vpop.f32.mrf.mxu0
  %v739 = vadd.f32 0.0, %v738
  %v740 = vpop.f32.mrf.mxu0
  %v741 = vadd.f32 0.0, %v740
  %742 = vdwg.mxu0
  %743 = vmatprep.subr.mxu0 0.0
  %744 = vmatpush1.msra.mxu0 0.0
  %745 = vmatprep.subr.mxu0 0.0
  %746 = vmatpush1.msra.mxu0 0.0
  %747 = vmatprep.subr.mxu0 0.0
  %748 = vmatpush1.msra.mxu0 0.0
  %749 = vmatprep.subr.mxu0 0.0
  %750 = vmatpush1.msra.mxu0 0.0
  %751 = vmatprep.subr.mxu0 0.0
  %752 = vmatpush1.msra.mxu0 0.0
  %753 = vmatprep.subr.mxu0 0.0
  %754 = vmatpush1.msra.mxu0 0.0
  %755 = vmatprep.subr.mxu0 0.0
  %756 = vmatpush1.msra.mxu0 0.0
  %757 = vmatprep.subr.mxu0 0.0
  %758 = vmatpush1.msra.mxu0 0.0
  %759 = vmatprep.subr.mxu0 0.0
  %760 = vmatpush1.msra.mxu0 0.0
  %761 = vmatprep.subr.mxu0 0.0
  %762 = vmatpush1.msra.mxu0 0.0
  %763 = vmatprep.subr.mxu0 0.0
  %764 = vmatpush1.msra.mxu0 0.0
  %765 = vmatprep.subr.mxu0 0.0
  %766 = vmatpush1.msra.mxu0 0.0
  %767 = vmatprep.subr.mxu0 0.0
  %768 = vmatpush1.msra.mxu0 0.0
  %769 = vmatprep.subr.mxu0 0.0
  %770 = vmatpush1.msra.mxu0 0.0
  %771 = vmatprep.subr.mxu0 0.0
  %772 = vmatpush1.msra.mxu0 0.0
  %773 = vmatprep.subr.mxu0 0.0
  %774 = vmatpush1.msra.mxu0 %v662
  %775 = vmatprep.subr.mxu0 0.0
  %776 = vmatpush2.msra.mxu0 0.0
  %777 = vmatprep.subr.mxu0 0.0
  %778 = vmatpush2.msra.mxu0 0.0
  %779 = vmatprep.subr.mxu0 0.0
  %780 = vmatpush2.msra.mxu0 0.0
  %781 = vmatprep.subr.mxu0 0.0
  %782 = vmatpush2.msra.mxu0 0.0
  %783 = vmatprep.subr.mxu0 0.0
  %784 = vmatpush2.msra.mxu0 0.0
  %785 = vmatprep.subr.mxu0 0.0
  %786 = vmatpush2.msra.mxu0 0.0
  %787 = vmatprep.subr.mxu0 0.0
  %788 = vmatpush2.msra.mxu0 0.0
  %789 = vmatprep.subr.mxu0 0.0
  %790 = vmatpush2.msra.mxu0 0.0
  %791 = vmatprep.subr.mxu0 0.0
  %792 = vmatpush2.msra.mxu0 0.0
  %793 = vmatprep.subr.mxu0 0.0
  %794 = vmatpush2.msra.mxu0 0.0
  %795 = vmatprep.subr.mxu0 0.0
  %796 = vmatpush2.msra.mxu0 0.0
  %797 = vmatprep.subr.mxu0 0.0
  %798 = vmatpush2.msra.mxu0 0.0
  %799 = vmatprep.subr.mxu0 0.0
  %800 = vmatpush2.msra.mxu0 0.0
  %801 = vmatprep.subr.mxu0 0.0
  %802 = vmatpush2.msra.mxu0 0.0
  %803 = vmatprep.subr.mxu0 0.0
  %804 = vmatpush2.msra.mxu0 0.0
  %805 = vmatprep.subr.mxu0 0.0
  %806 = vmatpush2.msra.mxu0 0.0
  %807 = vmatprep.mubr.f32.mxu0 0.0
  %808 = vmatmul.mubr.f32.gmra.mxu0 %v670
  %v809 = vpop.f32.mrf.mxu0
  %v810 = vadd.f32 0.0, %v809
  %v811 = vpop.f32.mrf.mxu0
  %812 = vdwg.mxu0
  %v813 = vadd.f32 %v652, %v739
  %v814 = vadd.f32 %v653, %v741
  %v815 = vadd.f32 %v654, %v810
  %s816 = scalar_lea.vmem %s1, 40
  %v817 = vld [vmem:[%s816] sm:$0xff]
  %818 = vrot.lane.b32.xlu0 %v24, 106
  %v819 = vpop.permute.xlu0 %818
  %820 = vrot.lane.b32.xlu0 %v25, 106
  %v821 = vpop.permute.xlu0 %820
  %822 = vrot.lane.b32.xlu0 %v26, 106
  %v823 = vpop.permute.xlu0 %822
  %vm824 = vcmask 867328
  %v825 = vsel %vm824, %v819, %v821
  %v826 = vsel %vm824, %v821, %v823
  %v831 = vsel %vm44, %v817, 0
  %833 = vmatprep.subr.mxu0 0.0
  %834 = vmatpush1.msra.mxu0 0.0
  %835 = vmatprep.subr.mxu0 0.0
  %836 = vmatpush1.msra.mxu0 0.0
  %837 = vmatprep.subr.mxu0 0.0
  %838 = vmatpush1.msra.mxu0 0.0
  %839 = vmatprep.subr.mxu0 0.0
  %840 = vmatpush1.msra.mxu0 0.0
  %841 = vmatprep.subr.mxu0 0.0
  %842 = vmatpush1.msra.mxu0 0.0
  %843 = vmatprep.subr.mxu0 0.0
  %844 = vmatpush1.msra.mxu0 0.0
  %845 = vmatprep.subr.mxu0 0.0
  %846 = vmatpush1.msra.mxu0 0.0
  %847 = vmatprep.subr.mxu0 0.0
  %848 = vmatpush1.msra.mxu0 0.0
  %849 = vmatprep.subr.mxu0 0.0
  %850 = vmatpush1.msra.mxu0 0.0
  %851 = vmatprep.subr.mxu0 0.0
  %852 = vmatpush1.msra.mxu0 0.0
  %853 = vmatprep.subr.mxu0 0.0
  %854 = vmatpush1.msra.mxu0 0.0
  %855 = vmatprep.subr.mxu0 0.0
  %856 = vmatpush1.msra.mxu0 0.0
  %857 = vmatprep.subr.mxu0 0.0
  %858 = vmatpush1.msra.mxu0 0.0
  %859 = vmatprep.subr.mxu0 0.0
  %860 = vmatpush1.msra.mxu0 0.0
  %861 = vmatprep.subr.mxu0 0.0
  %862 = vmatpush1.msra.mxu0 0.0
  %863 = vmatprep.subr.mxu0 %v826
  %864 = vmatpush1.msra.mxu0 %v825
  %865 = vmatprep.subr.mxu0 0.0
  %866 = vmatpush2.msra.mxu0 0.0
  %867 = vmatprep.subr.mxu0 0.0
  %868 = vmatpush2.msra.mxu0 0.0
  %869 = vmatprep.subr.mxu0 0.0
  %870 = vmatpush2.msra.mxu0 0.0
  %871 = vmatprep.subr.mxu0 0.0
  %872 = vmatpush2.msra.mxu0 0.0
  %873 = vmatprep.subr.mxu0 0.0
  %874 = vmatpush2.msra.mxu0 0.0
  %875 = vmatprep.subr.mxu0 0.0
  %876 = vmatpush2.msra.mxu0 0.0
  %877 = vmatprep.subr.mxu0 0.0
  %878 = vmatpush2.msra.mxu0 0.0
  %879 = vmatprep.subr.mxu0 0.0
  %880 = vmatpush2.msra.mxu0 0.0
  %881 = vmatprep.subr.mxu0 0.0
  %882 = vmatpush2.msra.mxu0 0.0
  %883 = vmatprep.subr.mxu0 0.0
  %884 = vmatpush2.msra.mxu0 0.0
  %885 = vmatprep.subr.mxu0 0.0
  %886 = vmatpush2.msra.mxu0 0.0
  %887 = vmatprep.subr.mxu0 0.0
  %888 = vmatpush2.msra.mxu0 0.0
  %889 = vmatprep.subr.mxu0 0.0
  %890 = vmatpush2.msra.mxu0 0.0
  %891 = vmatprep.subr.mxu0 0.0
  %892 = vmatpush2.msra.mxu0 0.0
  %893 = vmatprep.subr.mxu0 0.0
  %894 = vmatpush2.msra.mxu0 0.0
  %895 = vmatprep.subr.mxu0 0.0
  %896 = vmatpush2.msra.mxu0 0.0
  %897 = vmatprep.mubr.f32.mxu0 0.0
  %898 = vmatmul.mubr.f32.gmra.mxu0 %v831
  %v899 = vpop.f32.mrf.mxu0
  %v900 = vadd.f32 0.0, %v899
  %v901 = vpop.f32.mrf.mxu0
  %v902 = vadd.f32 0.0, %v901
  %903 = vdwg.mxu0
  %904 = vmatprep.subr.mxu0 0.0
  %905 = vmatpush1.msra.mxu0 0.0
  %906 = vmatprep.subr.mxu0 0.0
  %907 = vmatpush1.msra.mxu0 0.0
  %908 = vmatprep.subr.mxu0 0.0
  %909 = vmatpush1.msra.mxu0 0.0
  %910 = vmatprep.subr.mxu0 0.0
  %911 = vmatpush1.msra.mxu0 0.0
  %912 = vmatprep.subr.mxu0 0.0
  %913 = vmatpush1.msra.mxu0 0.0
  %914 = vmatprep.subr.mxu0 0.0
  %915 = vmatpush1.msra.mxu0 0.0
  %916 = vmatprep.subr.mxu0 0.0
  %917 = vmatpush1.msra.mxu0 0.0
  %918 = vmatprep.subr.mxu0 0.0
  %919 = vmatpush1.msra.mxu0 0.0
  %920 = vmatprep.subr.mxu0 0.0
  %921 = vmatpush1.msra.mxu0 0.0
  %922 = vmatprep.subr.mxu0 0.0
  %923 = vmatpush1.msra.mxu0 0.0
  %924 = vmatprep.subr.mxu0 0.0
  %925 = vmatpush1.msra.mxu0 0.0
  %926 = vmatprep.subr.mxu0 0.0
  %927 = vmatpush1.msra.mxu0 0.0
  %928 = vmatprep.subr.mxu0 0.0
  %929 = vmatpush1.msra.mxu0 0.0
  %930 = vmatprep.subr.mxu0 0.0
  %931 = vmatpush1.msra.mxu0 0.0
  %932 = vmatprep.subr.mxu0 0.0
  %933 = vmatpush1.msra.mxu0 0.0
  %934 = vmatprep.subr.mxu0 0.0
  %935 = vmatpush1.msra.mxu0 %v823
  %936 = vmatprep.subr.mxu0 0.0
  %937 = vmatpush2.msra.mxu0 0.0
  %938 = vmatprep.subr.mxu0 0.0
  %939 = vmatpush2.msra.mxu0 0.0
  %940 = vmatprep.subr.mxu0 0.0
  %941 = vmatpush2.msra.mxu0 0.0
  %942 = vmatprep.subr.mxu0 0.0
  %943 = vmatpush2.msra.mxu0 0.0
  %944 = vmatprep.subr.mxu0 0.0
  %945 = vmatpush2.msra.mxu0 0.0
  %946 = vmatprep.subr.mxu0 0.0
  %947 = vmatpush2.msra.mxu0 0.0
  %948 = vmatprep.subr.mxu0 0.0
  %949 = vmatpush2.msra.mxu0 0.0
  %950 = vmatprep.subr.mxu0 0.0
  %951 = vmatpush2.msra.mxu0 0.0
  %952 = vmatprep.subr.mxu0 0.0
  %953 = vmatpush2.msra.mxu0 0.0
  %954 = vmatprep.subr.mxu0 0.0
  %955 = vmatpush2.msra.mxu0 0.0
  %956 = vmatprep.subr.mxu0 0.0
  %957 = vmatpush2.msra.mxu0 0.0
  %958 = vmatprep.subr.mxu0 0.0
  %959 = vmatpush2.msra.mxu0 0.0
  %960 = vmatprep.subr.mxu0 0.0
  %961 = vmatpush2.msra.mxu0 0.0
  %962 = vmatprep.subr.mxu0 0.0
  %963 = vmatpush2.msra.mxu0 0.0
  %964 = vmatprep.subr.mxu0 0.0
  %965 = vmatpush2.msra.mxu0 0.0
  %966 = vmatprep.subr.mxu0 0.0
  %967 = vmatpush2.msra.mxu0 0.0
  %968 = vmatprep.mubr.f32.mxu0 0.0
  %969 = vmatmul.mubr.f32.gmra.mxu0 %v831
  %v970 = vpop.f32.mrf.mxu0
  %v971 = vadd.f32 0.0, %v970
  %v972 = vpop.f32.mrf.mxu0
  %973 = vdwg.mxu0
  %v974 = vadd.f32 %v813, %v900
  %v975 = vadd.f32 %v814, %v902
  %v976 = vadd.f32 %v815, %v971
  %s977 = scalar_lea.vmem %s1, 48
  %v978 = vld [vmem:[%s977] sm:$0xff]
  %v979 = vld [vmem:[%s0] sm:$0xff]
  %v980 = vld [vmem:[%s0 + $0x8] sm:$0xff]
  %v981 = vld [vmem:[%s0 + $0x10] sm:$0xff]
  %v982 = vld [vmem:[%s0 + $0x18] sm:$0xff]
  %987 = vrot.lane.b32.xlu0 %v979, 88
  %v988 = vpop.permute.xlu0 %987
  %989 = vrot.lane.b32.xlu0 %v980, 88
  %v990 = vpop.permute.xlu0 %989
  %991 = vrot.lane.b32.xlu0 %v981, 88
  %v992 = vpop.permute.xlu0 %991
  %993 = vrot.lane.b32.xlu0 %v982, 88
  %v994 = vpop.permute.xlu0 %993
  %vm995 = vcmask 719872
  %v996 = vsel %vm995, %v988, %v990
  %v997 = vsel %vm995, %v990, %v992
  %v998 = vsel %vm995, %v992, %v994
  %v1003 = vsel %vm44, %v978, 0
  %1005 = vmatprep.subr.mxu0 0.0
  %1006 = vmatpush1.msra.mxu0 0.0
  %1007 = vmatprep.subr.mxu0 0.0
  %1008 = vmatpush1.msra.mxu0 0.0
  %1009 = vmatprep.subr.mxu0 0.0
  %1010 = vmatpush1.msra.mxu0 0.0
  %1011 = vmatprep.subr.mxu0 0.0
  %1012 = vmatpush1.msra.mxu0 0.0
  %1013 = vmatprep.subr.mxu0 0.0
  %1014 = vmatpush1.msra.mxu0 0.0
  %1015 = vmatprep.subr.mxu0 0.0
  %1016 = vmatpush1.msra.mxu0 0.0
  %1017 = vmatprep.subr.mxu0 0.0
  %1018 = vmatpush1.msra.mxu0 0.0
  %1019 = vmatprep.subr.mxu0 0.0
  %1020 = vmatpush1.msra.mxu0 0.0
  %1021 = vmatprep.subr.mxu0 0.0
  %1022 = vmatpush1.msra.mxu0 0.0
  %1023 = vmatprep.subr.mxu0 0.0
  %1024 = vmatpush1.msra.mxu0 0.0
  %1025 = vmatprep.subr.mxu0 0.0
  %1026 = vmatpush1.msra.mxu0 0.0
  %1027 = vmatprep.subr.mxu0 0.0
  %1028 = vmatpush1.msra.mxu0 0.0
  %1029 = vmatprep.subr.mxu0 0.0
  %1030 = vmatpush1.msra.mxu0 0.0
  %1031 = vmatprep.subr.mxu0 0.0
  %1032 = vmatpush1.msra.mxu0 0.0
  %1033 = vmatprep.subr.mxu0 0.0
  %1034 = vmatpush1.msra.mxu0 0.0
  %1035 = vmatprep.subr.mxu0 %v997
  %1036 = vmatpush1.msra.mxu0 %v996
  %1037 = vmatprep.subr.mxu0 0.0
  %1038 = vmatpush2.msra.mxu0 0.0
  %1039 = vmatprep.subr.mxu0 0.0
  %1040 = vmatpush2.msra.mxu0 0.0
  %1041 = vmatprep.subr.mxu0 0.0
  %1042 = vmatpush2.msra.mxu0 0.0
  %1043 = vmatprep.subr.mxu0 0.0
  %1044 = vmatpush2.msra.mxu0 0.0
  %1045 = vmatprep.subr.mxu0 0.0
  %1046 = vmatpush2.msra.mxu0 0.0
  %1047 = vmatprep.subr.mxu0 0.0
  %1048 = vmatpush2.msra.mxu0 0.0
  %1049 = vmatprep.subr.mxu0 0.0
  %1050 = vmatpush2.msra.mxu0 0.0
  %1051 = vmatprep.subr.mxu0 0.0
  %1052 = vmatpush2.msra.mxu0 0.0
  %1053 = vmatprep.subr.mxu0 0.0
  %1054 = vmatpush2.msra.mxu0 0.0
  %1055 = vmatprep.subr.mxu0 0.0
  %1056 = vmatpush2.msra.mxu0 0.0
  %1057 = vmatprep.subr.mxu0 0.0
  %1058 = vmatpush2.msra.mxu0 0.0
  %1059 = vmatprep.subr.mxu0 0.0
  %1060 = vmatpush2.msra.mxu0 0.0
  %1061 = vmatprep.subr.mxu0 0.0
  %1062 = vmatpush2.msra.mxu0 0.0
  %1063 = vmatprep.subr.mxu0 0.0
  %1064 = vmatpush2.msra.mxu0 0.0
  %1065 = vmatprep.subr.mxu0 0.0
  %1066 = vmatpush2.msra.mxu0 0.0
  %1067 = vmatprep.subr.mxu0 0.0
  %1068 = vmatpush2.msra.mxu0 0.0
  %1069 = vmatprep.mubr.f32.mxu0 0.0
  %1070 = vmatmul.mubr.f32.gmra.mxu0 %v1003
  %v1071 = vpop.f32.mrf.mxu0
  %v1072 = vadd.f32 0.0, %v1071
  %v1073 = vpop.f32.mrf.mxu0
  %v1074 = vadd.f32 0.0, %v1073
  %1075 = vdwg.mxu0
  %1076 = vmatprep.subr.mxu0 0.0
  %1077 = vmatpush1.msra.mxu0 0.0
  %1078 = vmatprep.subr.mxu0 0.0
  %1079 = vmatpush1.msra.mxu0 0.0
  %1080 = vmatprep.subr.mxu0 0.0
  %1081 = vmatpush1.msra.mxu0 0.0
  %1082 = vmatprep.subr.mxu0 0.0
  %1083 = vmatpush1.msra.mxu0 0.0
  %1084 = vmatprep.subr.mxu0 0.0
  %1085 = vmatpush1.msra.mxu0 0.0
  %1086 = vmatprep.subr.mxu0 0.0
  %1087 = vmatpush1.msra.mxu0 0.0
  %1088 = vmatprep.subr.mxu0 0.0
  %1089 = vmatpush1.msra.mxu0 0.0
  %1090 = vmatprep.subr.mxu0 0.0
  %1091 = vmatpush1.msra.mxu0 0.0
  %1092 = vmatprep.subr.mxu0 0.0
  %1093 = vmatpush1.msra.mxu0 0.0
  %1094 = vmatprep.subr.mxu0 0.0
  %1095 = vmatpush1.msra.mxu0 0.0
  %1096 = vmatprep.subr.mxu0 0.0
  %1097 = vmatpush1.msra.mxu0 0.0
  %1098 = vmatprep.subr.mxu0 0.0
  %1099 = vmatpush1.msra.mxu0 0.0
  %1100 = vmatprep.subr.mxu0 0.0
  %1101 = vmatpush1.msra.mxu0 0.0
  %1102 = vmatprep.subr.mxu0 0.0
  %1103 = vmatpush1.msra.mxu0 0.0
  %1104 = vmatprep.subr.mxu0 0.0
  %1105 = vmatpush1.msra.mxu0 0.0
  %1106 = vmatprep.subr.mxu0 0.0
  %1107 = vmatpush1.msra.mxu0 %v998
  %1108 = vmatprep.subr.mxu0 0.0
  %1109 = vmatpush2.msra.mxu0 0.0
  %1110 = vmatprep.subr.mxu0 0.0
  %1111 = vmatpush2.msra.mxu0 0.0
  %1112 = vmatprep.subr.mxu0 0.0
  %1113 = vmatpush2.msra.mxu0 0.0
  %1114 = vmatprep.subr.mxu0 0.0
  %1115 = vmatpush2.msra.mxu0 0.0
  %1116 = vmatprep.subr.mxu0 0.0
  %1117 = vmatpush2.msra.mxu0 0.0
  %1118 = vmatprep.subr.mxu0 0.0
  %1119 = vmatpush2.msra.mxu0 0.0
  %1120 = vmatprep.subr.mxu0 0.0
  %1121 = vmatpush2.msra.mxu0 0.0
  %1122 = vmatprep.subr.mxu0 0.0
  %1123 = vmatpush2.msra.mxu0 0.0
  %1124 = vmatprep.subr.mxu0 0.0
  %1125 = vmatpush2.msra.mxu0 0.0
  %1126 = vmatprep.subr.mxu0 0.0
  %1127 = vmatpush2.msra.mxu0 0.0
  %1128 = vmatprep.subr.mxu0 0.0
  %1129 = vmatpush2.msra.mxu0 0.0
  %1130 = vmatprep.subr.mxu0 0.0
  %1131 = vmatpush2.msra.mxu0 0.0
  %1132 = vmatprep.subr.mxu0 0.0
  %1133 = vmatpush2.msra.mxu0 0.0
  %1134 = vmatprep.subr.mxu0 0.0
  %1135 = vmatpush2.msra.mxu0 0.0
  %1136 = vmatprep.subr.mxu0 0.0
  %1137 = vmatpush2.msra.mxu0 0.0
  %1138 = vmatprep.subr.mxu0 0.0
  %1139 = vmatpush2.msra.mxu0 0.0
  %1140 = vmatprep.mubr.f32.mxu0 0.0
  %1141 = vmatmul.mubr.f32.gmra.mxu0 %v1003
  %v1142 = vpop.f32.mrf.mxu0
  %v1143 = vadd.f32 0.0, %v1142
  %v1144 = vpop.f32.mrf.mxu0
  %1145 = vdwg.mxu0
  %v1146 = vadd.f32 %v974, %v1072
  %v1147 = vadd.f32 %v975, %v1074
  %v1148 = vadd.f32 %v976, %v1143
  %s1149 = scalar_lea.vmem %s1, 56
  %v1150 = vld [vmem:[%s1149] sm:$0xff]
  %1151 = vrot.lane.b32.xlu0 %v979, 87
  %v1152 = vpop.permute.xlu0 %1151
  %1153 = vrot.lane.b32.xlu0 %v980, 87
  %v1154 = vpop.permute.xlu0 %1153
  %1155 = vrot.lane.b32.xlu0 %v981, 87
  %v1156 = vpop.permute.xlu0 %1155
  %1157 = vrot.lane.b32.xlu0 %v982, 87
  %v1158 = vpop.permute.xlu0 %1157
  %vm1159 = vcmask 711680
  %v1160 = vsel %vm1159, %v1152, %v1154
  %v1161 = vsel %vm1159, %v1154, %v1156
  %v1162 = vsel %vm1159, %v1156, %v1158
  %v1167 = vsel %vm44, %v1150, 0
  %1169 = vmatprep.subr.mxu0 0.0
  %1170 = vmatpush1.msra.mxu0 0.0
  %1171 = vmatprep.subr.mxu0 0.0
  %1172 = vmatpush1.msra.mxu0 0.0
  %1173 = vmatprep.subr.mxu0 0.0
  %1174 = vmatpush1.msra.mxu0 0.0
  %1175 = vmatprep.subr.mxu0 0.0
  %1176 = vmatpush1.msra.mxu0 0.0
  %1177 = vmatprep.subr.mxu0 0.0
  %1178 = vmatpush1.msra.mxu0 0.0
  %1179 = vmatprep.subr.mxu0 0.0
  %1180 = vmatpush1.msra.mxu0 0.0
  %1181 = vmatprep.subr.mxu0 0.0
  %1182 = vmatpush1.msra.mxu0 0.0
  %1183 = vmatprep.subr.mxu0 0.0
  %1184 = vmatpush1.msra.mxu0 0.0
  %1185 = vmatprep.subr.mxu0 0.0
  %1186 = vmatpush1.msra.mxu0 0.0
  %1187 = vmatprep.subr.mxu0 0.0
  %1188 = vmatpush1.msra.mxu0 0.0
  %1189 = vmatprep.subr.mxu0 0.0
  %1190 = vmatpush1.msra.mxu0 0.0
  %1191 = vmatprep.subr.mxu0 0.0
  %1192 = vmatpush1.msra.mxu0 0.0
  %1193 = vmatprep.subr.mxu0 0.0
  %1194 = vmatpush1.msra.mxu0 0.0
  %1195 = vmatprep.subr.mxu0 0.0
  %1196 = vmatpush1.msra.mxu0 0.0
  %1197 = vmatprep.subr.mxu0 0.0
  %1198 = vmatpush1.msra.mxu0 0.0
  %1199 = vmatprep.subr.mxu0 %v1161
  %1200 = vmatpush1.msra.mxu0 %v1160
  %1201 = vmatprep.subr.mxu0 0.0
  %1202 = vmatpush2.msra.mxu0 0.0
  %1203 = vmatprep.subr.mxu0 0.0
  %1204 = vmatpush2.msra.mxu0 0.0
  %1205 = vmatprep.subr.mxu0 0.0
  %1206 = vmatpush2.msra.mxu0 0.0
  %1207 = vmatprep.subr.mxu0 0.0
  %1208 = vmatpush2.msra.mxu0 0.0
  %1209 = vmatprep.subr.mxu0 0.0
  %1210 = vmatpush2.msra.mxu0 0.0
  %1211 = vmatprep.subr.mxu0 0.0
  %1212 = vmatpush2.msra.mxu0 0.0
  %1213 = vmatprep.subr.mxu0 0.0
  %1214 = vmatpush2.msra.mxu0 0.0
  %1215 = vmatprep.subr.mxu0 0.0
  %1216 = vmatpush2.msra.mxu0 0.0
  %1217 = vmatprep.subr.mxu0 0.0
  %1218 = vmatpush2.msra.mxu0 0.0
  %1219 = vmatprep.subr.mxu0 0.0
  %1220 = vmatpush2.msra.mxu0 0.0
  %1221 = vmatprep.subr.mxu0 0.0
  %1222 = vmatpush2.msra.mxu0 0.0
  %1223 = vmatprep.subr.mxu0 0.0
  %1224 = vmatpush2.msra.mxu0 0.0
  %1225 = vmatprep.subr.mxu0 0.0
  %1226 = vmatpush2.msra.mxu0 0.0
  %1227 = vmatprep.subr.mxu0 0.0
  %1228 = vmatpush2.msra.mxu0 0.0
  %1229 = vmatprep.subr.mxu0 0.0
  %1230 = vmatpush2.msra.mxu0 0.0
  %1231 = vmatprep.subr.mxu0 0.0
  %1232 = vmatpush2.msra.mxu0 0.0
  %1233 = vmatprep.mubr.f32.mxu0 0.0
  %1234 = vmatmul.mubr.f32.gmra.mxu0 %v1167
  %v1235 = vpop.f32.mrf.mxu0
  %v1236 = vadd.f32 0.0, %v1235
  %v1237 = vpop.f32.mrf.mxu0
  %v1238 = vadd.f32 0.0, %v1237
  %1239 = vdwg.mxu0
  %1240 = vmatprep.subr.mxu0 0.0
  %1241 = vmatpush1.msra.mxu0 0.0
  %1242 = vmatprep.subr.mxu0 0.0
  %1243 = vmatpush1.msra.mxu0 0.0
  %1244 = vmatprep.subr.mxu0 0.0
  %1245 = vmatpush1.msra.mxu0 0.0
  %1246 = vmatprep.subr.mxu0 0.0
  %1247 = vmatpush1.msra.mxu0 0.0
  %1248 = vmatprep.subr.mxu0 0.0
  %1249 = vmatpush1.msra.mxu0 0.0
  %1250 = vmatprep.subr.mxu0 0.0
  %1251 = vmatpush1.msra.mxu0 0.0
  %1252 = vmatprep.subr.mxu0 0.0
  %1253 = vmatpush1.msra.mxu0 0.0
  %1254 = vmatprep.subr.mxu0 0.0
  %1255 = vmatpush1.msra.mxu0 0.0
  %1256 = vmatprep.subr.mxu0 0.0
  %1257 = vmatpush1.msra.mxu0 0.0
  %1258 = vmatprep.subr.mxu0 0.0
  %1259 = vmatpush1.msra.mxu0 0.0
  %1260 = vmatprep.subr.mxu0 0.0
  %1261 = vmatpush1.msra.mxu0 0.0
  %1262 = vmatprep.subr.mxu0 0.0
  %1263 = vmatpush1.msra.mxu0 0.0
  %1264 = vmatprep.subr.mxu0 0.0
  %1265 = vmatpush1.msra.mxu0 0.0
  %1266 = vmatprep.subr.mxu0 0.0
  %1267 = vmatpush1.msra.mxu0 0.0
  %1268 = vmatprep.subr.mxu0 0.0
  %1269 = vmatpush1.msra.mxu0 0.0
  %1270 = vmatprep.subr.mxu0 0.0
  %1271 = vmatpush1.msra.mxu0 %v1162
  %1272 = vmatprep.subr.mxu0 0.0
  %1273 = vmatpush2.msra.mxu0 0.0
  %1274 = vmatprep.subr.mxu0 0.0
  %1275 = vmatpush2.msra.mxu0 0.0
  %1276 = vmatprep.subr.mxu0 0.0
  %1277 = vmatpush2.msra.mxu0 0.0
  %1278 = vmatprep.subr.mxu0 0.0
  %1279 = vmatpush2.msra.mxu0 0.0
  %1280 = vmatprep.subr.mxu0 0.0
  %1281 = vmatpush2.msra.mxu0 0.0
  %1282 = vmatprep.subr.mxu0 0.0
  %1283 = vmatpush2.msra.mxu0 0.0
  %1284 = vmatprep.subr.mxu0 0.0
  %1285 = vmatpush2.msra.mxu0 0.0
  %1286 = vmatprep.subr.mxu0 0.0
  %1287 = vmatpush2.msra.mxu0 0.0
  %1288 = vmatprep.subr.mxu0 0.0
  %1289 = vmatpush2.msra.mxu0 0.0
  %1290 = vmatprep.subr.mxu0 0.0
  %1291 = vmatpush2.msra.mxu0 0.0
  %1292 = vmatprep.subr.mxu0 0.0
  %1293 = vmatpush2.msra.mxu0 0.0
  %1294 = vmatprep.subr.mxu0 0.0
  %1295 = vmatpush2.msra.mxu0 0.0
  %1296 = vmatprep.subr.mxu0 0.0
  %1297 = vmatpush2.msra.mxu0 0.0
  %1298 = vmatprep.subr.mxu0 0.0
  %1299 = vmatpush2.msra.mxu0 0.0
  %1300 = vmatprep.subr.mxu0 0.0
  %1301 = vmatpush2.msra.mxu0 0.0
  %1302 = vmatprep.subr.mxu0 0.0
  %1303 = vmatpush2.msra.mxu0 0.0
  %1304 = vmatprep.mubr.f32.mxu0 0.0
  %1305 = vmatmul.mubr.f32.gmra.mxu0 %v1167
  %v1306 = vpop.f32.mrf.mxu0
  %v1307 = vadd.f32 0.0, %v1306
  %v1308 = vpop.f32.mrf.mxu0
  %1309 = vdwg.mxu0
  %v1310 = vadd.f32 %v1146, %v1236
  %v1311 = vadd.f32 %v1147, %v1238
  %v1312 = vadd.f32 %v1148, %v1307
  %s1313 = scalar_lea.vmem %s1, 64
  %v1314 = vld [vmem:[%s1313] sm:$0xff]
  %1315 = vrot.lane.b32.xlu0 %v979, 86
  %v1316 = vpop.permute.xlu0 %1315
  %1317 = vrot.lane.b32.xlu0 %v980, 86
  %v1318 = vpop.permute.xlu0 %1317
  %1319 = vrot.lane.b32.xlu0 %v981, 86
  %v1320 = vpop.permute.xlu0 %1319
  %1321 = vrot.lane.b32.xlu0 %v982, 86
  %v1322 = vpop.permute.xlu0 %1321
  %vm1323 = vcmask 703488
  %v1324 = vsel %vm1323, %v1316, %v1318
  %v1325 = vsel %vm1323, %v1318, %v1320
  %v1326 = vsel %vm1323, %v1320, %v1322
  %v1331 = vsel %vm44, %v1314, 0
  %1333 = vmatprep.subr.mxu0 0.0
  %1334 = vmatpush1.msra.mxu0 0.0
  %1335 = vmatprep.subr.mxu0 0.0
  %1336 = vmatpush1.msra.mxu0 0.0
  %1337 = vmatprep.subr.mxu0 0.0
  %1338 = vmatpush1.msra.mxu0 0.0
  %1339 = vmatprep.subr.mxu0 0.0
  %1340 = vmatpush1.msra.mxu0 0.0
  %1341 = vmatprep.subr.mxu0 0.0
  %1342 = vmatpush1.msra.mxu0 0.0
  %1343 = vmatprep.subr.mxu0 0.0
  %1344 = vmatpush1.msra.mxu0 0.0
  %1345 = vmatprep.subr.mxu0 0.0
  %1346 = vmatpush1.msra.mxu0 0.0
  %1347 = vmatprep.subr.mxu0 0.0
  %1348 = vmatpush1.msra.mxu0 0.0
  %1349 = vmatprep.subr.mxu0 0.0
  %1350 = vmatpush1.msra.mxu0 0.0
  %1351 = vmatprep.subr.mxu0 0.0
  %1352 = vmatpush1.msra.mxu0 0.0
  %1353 = vmatprep.subr.mxu0 0.0
  %1354 = vmatpush1.msra.mxu0 0.0
  %1355 = vmatprep.subr.mxu0 0.0
  %1356 = vmatpush1.msra.mxu0 0.0
  %1357 = vmatprep.subr.mxu0 0.0
  %1358 = vmatpush1.msra.mxu0 0.0
  %1359 = vmatprep.subr.mxu0 0.0
  %1360 = vmatpush1.msra.mxu0 0.0
  %1361 = vmatprep.subr.mxu0 0.0
  %1362 = vmatpush1.msra.mxu0 0.0
  %1363 = vmatprep.subr.mxu0 %v1325
  %1364 = vmatpush1.msra.mxu0 %v1324
  %1365 = vmatprep.subr.mxu0 0.0
  %1366 = vmatpush2.msra.mxu0 0.0
  %1367 = vmatprep.subr.mxu0 0.0
  %1368 = vmatpush2.msra.mxu0 0.0
  %1369 = vmatprep.subr.mxu0 0.0
  %1370 = vmatpush2.msra.mxu0 0.0
  %1371 = vmatprep.subr.mxu0 0.0
  %1372 = vmatpush2.msra.mxu0 0.0
  %1373 = vmatprep.subr.mxu0 0.0
  %1374 = vmatpush2.msra.mxu0 0.0
  %1375 = vmatprep.subr.mxu0 0.0
  %1376 = vmatpush2.msra.mxu0 0.0
  %1377 = vmatprep.subr.mxu0 0.0
  %1378 = vmatpush2.msra.mxu0 0.0
  %1379 = vmatprep.subr.mxu0 0.0
  %1380 = vmatpush2.msra.mxu0 0.0
  %1381 = vmatprep.subr.mxu0 0.0
  %1382 = vmatpush2.msra.mxu0 0.0
  %1383 = vmatprep.subr.mxu0 0.0
  %1384 = vmatpush2.msra.mxu0 0.0
  %1385 = vmatprep.subr.mxu0 0.0
  %1386 = vmatpush2.msra.mxu0 0.0
  %1387 = vmatprep.subr.mxu0 0.0
  %1388 = vmatpush2.msra.mxu0 0.0
  %1389 = vmatprep.subr.mxu0 0.0
  %1390 = vmatpush2.msra.mxu0 0.0
  %1391 = vmatprep.subr.mxu0 0.0
  %1392 = vmatpush2.msra.mxu0 0.0
  %1393 = vmatprep.subr.mxu0 0.0
  %1394 = vmatpush2.msra.mxu0 0.0
  %1395 = vmatprep.subr.mxu0 0.0
  %1396 = vmatpush2.msra.mxu0 0.0
  %1397 = vmatprep.mubr.f32.mxu0 0.0
  %1398 = vmatmul.mubr.f32.gmra.mxu0 %v1331
  %v1399 = vpop.f32.mrf.mxu0
  %v1400 = vadd.f32 0.0, %v1399
  %v1401 = vpop.f32.mrf.mxu0
  %v1402 = vadd.f32 0.0, %v1401
  %1403 = vdwg.mxu0
  %1404 = vmatprep.subr.mxu0 0.0
  %1405 = vmatpush1.msra.mxu0 0.0
  %1406 = vmatprep.subr.mxu0 0.0
  %1407 = vmatpush1.msra.mxu0 0.0
  %1408 = vmatprep.subr.mxu0 0.0
  %1409 = vmatpush1.msra.mxu0 0.0
  %1410 = vmatprep.subr.mxu0 0.0
  %1411 = vmatpush1.msra.mxu0 0.0
  %1412 = vmatprep.subr.mxu0 0.0
  %1413 = vmatpush1.msra.mxu0 0.0
  %1414 = vmatprep.subr.mxu0 0.0
  %1415 = vmatpush1.msra.mxu0 0.0
  %1416 = vmatprep.subr.mxu0 0.0
  %1417 = vmatpush1.msra.mxu0 0.0
  %1418 = vmatprep.subr.mxu0 0.0
  %1419 = vmatpush1.msra.mxu0 0.0
  %1420 = vmatprep.subr.mxu0 0.0
  %1421 = vmatpush1.msra.mxu0 0.0
  %1422 = vmatprep.subr.mxu0 0.0
  %1423 = vmatpush1.msra.mxu0 0.0
  %1424 = vmatprep.subr.mxu0 0.0
  %1425 = vmatpush1.msra.mxu0 0.0
  %1426 = vmatprep.subr.mxu0 0.0
  %1427 = vmatpush1.msra.mxu0 0.0
  %1428 = vmatprep.subr.mxu0 0.0
  %1429 = vmatpush1.msra.mxu0 0.0
  %1430 = vmatprep.subr.mxu0 0.0
  %1431 = vmatpush1.msra.mxu0 0.0
  %1432 = vmatprep.subr.mxu0 0.0
  %1433 = vmatpush1.msra.mxu0 0.0
  %1434 = vmatprep.subr.mxu0 0.0
  %1435 = vmatpush1.msra.mxu0 %v1326
  %1436 = vmatprep.subr.mxu0 0.0
  %1437 = vmatpush2.msra.mxu0 0.0
  %1438 = vmatprep.subr.mxu0 0.0
  %1439 = vmatpush2.msra.mxu0 0.0
  %1440 = vmatprep.subr.mxu0 0.0
  %1441 = vmatpush2.msra.mxu0 0.0
  %1442 = vmatprep.subr.mxu0 0.0
  %1443 = vmatpush2.msra.mxu0 0.0
  %1444 = vmatprep.subr.mxu0 0.0
  %1445 = vmatpush2.msra.mxu0 0.0
  %1446 = vmatprep.subr.mxu0 0.0
  %1447 = vmatpush2.msra.mxu0 0.0
  %1448 = vmatprep.subr.mxu0 0.0
  %1449 = vmatpush2.msra.mxu0 0.0
  %1450 = vmatprep.subr.mxu0 0.0
  %1451 = vmatpush2.msra.mxu0 0.0
  %1452 = vmatprep.subr.mxu0 0.0
  %1453 = vmatpush2.msra.mxu0 0.0
  %1454 = vmatprep.subr.mxu0 0.0
  %1455 = vmatpush2.msra.mxu0 0.0
  %1456 = vmatprep.subr.mxu0 0.0
  %1457 = vmatpush2.msra.mxu0 0.0
  %1458 = vmatprep.subr.mxu0 0.0
  %1459 = vmatpush2.msra.mxu0 0.0
  %1460 = vmatprep.subr.mxu0 0.0
  %1461 = vmatpush2.msra.mxu0 0.0
  %1462 = vmatprep.subr.mxu0 0.0
  %1463 = vmatpush2.msra.mxu0 0.0
  %1464 = vmatprep.subr.mxu0 0.0
  %1465 = vmatpush2.msra.mxu0 0.0
  %1466 = vmatprep.subr.mxu0 0.0
  %1467 = vmatpush2.msra.mxu0 0.0
  %1468 = vmatprep.mubr.f32.mxu0 0.0
  %1469 = vmatmul.mubr.f32.gmra.mxu0 %v1331
  %v1470 = vpop.f32.mrf.mxu0
  %v1471 = vadd.f32 0.0, %v1470
  %v1472 = vpop.f32.mrf.mxu0
  %1473 = vdwg.mxu0
  %v1474 = vadd.f32 %v1310, %v1400
  %v1475 = vadd.f32 %v1311, %v1402
  %v1476 = vadd.f32 %v1312, %v1471
  %v1477 = vld [vmem:[%s2] sm:$0xff]
  %1479 = vset.pattern.permute.xlu0 0
  %1480 = vperm.xlu0 %1479, %v1477
  %v1481 = vpop.permute.xlu0 %1480
  %v1483 = vadd.f32 %v1474, %v1481
  %v1484 = vadd.f32 %v1475, %v1481
  %v1485 = vadd.f32 %v1476, %v1481
  %v1486 = vmax.f32 %v1483, 0.0
  %v1487 = vmax.f32 %v1484, 0.0
  %v1488 = vmax.f32 %v1485, 0.0
  %v1489 = vld [vmem:[%s3] sm:$0x7]
  %v1491 = vlaneseq
  %v1492 = vshrl.u32 %v1491, 7
  %v1493 = vsub.s32 0, %v1492
  %v1494 = vrot.slane %v1489, %v1493
  %v1495 = vlaneseq
  %v1496 = vshrl.u32 %v1495, 7
  %v1497 = vsub.s32 1, %v1496
  %v1498 = vrot.slane %v1489, %v1497
  %v1499 = vlaneseq
  %v1500 = vshrl.u32 %v1499, 7
  %v1501 = vsub.s32 2, %v1500
  %v1502 = vrot.slane %v1489, %v1501
  %v1506 = vmul.f32 %v1486, %v1494
  %v1507 = vmul.f32 %v1487, %v1498
  %v1508 = vmul.f32 %v1488, %v1502
  %1509 = vst [vmem:[#allocation2] sm:$0xff] %v1506
  %1510 = vst [vmem:[#allocation2 + $0x8] sm:$0xff] %v1507
  %vm1511 = vcmask 834560
  %1512 = vst.msk [vmem:[#allocation2 + $0x10] sm:$0xff] %vm1511, %v1508
  %v1513 = vld [vmem:[%s4] sm:$0xff]
  %v1514 = vld [vmem:[#allocation2] sm:$0xff]
  %v1515 = vld [vmem:[#allocation2 + $0x8] sm:$0xff]
  %v1516 = vld [vmem:[#allocation2 + $0x10] sm:$0xff]
  %s1517 = scalar_lea.vmem %s4, 8
  %v1518 = vld [vmem:[%s1517] sm:$0xff]
  %1522 = vrot.lane.b32.xlu0 %v1514, 127
  %v1523 = vpop.permute.xlu0 %1522
  %1524 = vrot.lane.b32.xlu0 %v1515, 127
  %v1525 = vpop.permute.xlu0 %1524
  %1526 = vrot.lane.b32.xlu0 %v1516, 127
  %v1527 = vpop.permute.xlu0 %1526
  %v1528 = vsel %vm38, %v1523, %v1525
  %v1529 = vsel %vm38, %v1525, %v1527
  %v1534 = vsel %vm44, %v1518, 0
  %1536 = vmatprep.subr.mxu0 0.0
  %1537 = vmatpush1.msra.mxu0 0.0
  %1538 = vmatprep.subr.mxu0 0.0
  %1539 = vmatpush1.msra.mxu0 0.0
  %1540 = vmatprep.subr.mxu0 0.0
  %1541 = vmatpush1.msra.mxu0 0.0
  %1542 = vmatprep.subr.mxu0 0.0
  %1543 = vmatpush1.msra.mxu0 0.0
  %1544 = vmatprep.subr.mxu0 0.0
  %1545 = vmatpush1.msra.mxu0 0.0
  %1546 = vmatprep.subr.mxu0 0.0
  %1547 = vmatpush1.msra.mxu0 0.0
  %1548 = vmatprep.subr.mxu0 0.0
  %1549 = vmatpush1.msra.mxu0 0.0
  %1550 = vmatprep.subr.mxu0 0.0
  %1551 = vmatpush1.msra.mxu0 0.0
  %1552 = vmatprep.subr.mxu0 0.0
  %1553 = vmatpush1.msra.mxu0 0.0
  %1554 = vmatprep.subr.mxu0 0.0
  %1555 = vmatpush1.msra.mxu0 0.0
  %1556 = vmatprep.subr.mxu0 0.0
  %1557 = vmatpush1.msra.mxu0 0.0
  %1558 = vmatprep.subr.mxu0 0.0
  %1559 = vmatpush1.msra.mxu0 0.0
  %1560 = vmatprep.subr.mxu0 0.0
  %1561 = vmatpush1.msra.mxu0 0.0
  %1562 = vmatprep.subr.mxu0 0.0
  %1563 = vmatpush1.msra.mxu0 0.0
  %1564 = vmatprep.subr.mxu0 0.0
  %1565 = vmatpush1.msra.mxu0 0.0
  %1566 = vmatprep.subr.mxu0 %v1529
  %1567 = vmatpush1.msra.mxu0 %v1528
  %1568 = vmatprep.subr.mxu0 0.0
  %1569 = vmatpush2.msra.mxu0 0.0
  %1570 = vmatprep.subr.mxu0 0.0
  %1571 = vmatpush2.msra.mxu0 0.0
  %1572 = vmatprep.subr.mxu0 0.0
  %1573 = vmatpush2.msra.mxu0 0.0
  %1574 = vmatprep.subr.mxu0 0.0
  %1575 = vmatpush2.msra.mxu0 0.0
  %1576 = vmatprep.subr.mxu0 0.0
  %1577 = vmatpush2.msra.mxu0 0.0
  %1578 = vmatprep.subr.mxu0 0.0
  %1579 = vmatpush2.msra.mxu0 0.0
  %1580 = vmatprep.subr.mxu0 0.0
  %1581 = vmatpush2.msra.mxu0 0.0
  %1582 = vmatprep.subr.mxu0 0.0
  %1583 = vmatpush2.msra.mxu0 0.0
  %1584 = vmatprep.subr.mxu0 0.0
  %1585 = vmatpush2.msra.mxu0 0.0
  %1586 = vmatprep.subr.mxu0 0.0
  %1587 = vmatpush2.msra.mxu0 0.0
  %1588 = vmatprep.subr.mxu0 0.0
  %1589 = vmatpush2.msra.mxu0 0.0
  %1590 = vmatprep.subr.mxu0 0.0
  %1591 = vmatpush2.msra.mxu0 0.0
  %1592 = vmatprep.subr.mxu0 0.0
  %1593 = vmatpush2.msra.mxu0 0.0
  %1594 = vmatprep.subr.mxu0 0.0
  %1595 = vmatpush2.msra.mxu0 0.0
  %1596 = vmatprep.subr.mxu0 0.0
  %1597 = vmatpush2.msra.mxu0 0.0
  %1598 = vmatprep.subr.mxu0 0.0
  %1599 = vmatpush2.msra.mxu0 0.0
  %1600 = vmatprep.mubr.f32.mxu0 0.0
  %1601 = vmatmul.mubr.f32.gmra.mxu0 %v1534
  %v1602 = vpop.f32.mrf.mxu0
  %v1603 = vadd.f32 0.0, %v1602
  %v1604 = vpop.f32.mrf.mxu0
  %v1605 = vadd.f32 0.0, %v1604
  %1606 = vdwg.mxu0
  %1607 = vmatprep.subr.mxu0 0.0
  %1608 = vmatpush1.msra.mxu0 0.0
  %1609 = vmatprep.subr.mxu0 0.0
  %1610 = vmatpush1.msra.mxu0 0.0
  %1611 = vmatprep.subr.mxu0 0.0
  %1612 = vmatpush1.msra.mxu0 0.0
  %1613 = vmatprep.subr.mxu0 0.0
  %1614 = vmatpush1.msra.mxu0 0.0
  %1615 = vmatprep.subr.mxu0 0.0
  %1616 = vmatpush1.msra.mxu0 0.0
  %1617 = vmatprep.subr.mxu0 0.0
  %1618 = vmatpush1.msra.mxu0 0.0
  %1619 = vmatprep.subr.mxu0 0.0
  %1620 = vmatpush1.msra.mxu0 0.0
  %1621 = vmatprep.subr.mxu0 0.0
  %1622 = vmatpush1.msra.mxu0 0.0
  %1623 = vmatprep.subr.mxu0 0.0
  %1624 = vmatpush1.msra.mxu0 0.0
  %1625 = vmatprep.subr.mxu0 0.0
  %1626 = vmatpush1.msra.mxu0 0.0
  %1627 = vmatprep.subr.mxu0 0.0
  %1628 = vmatpush1.msra.mxu0 0.0
  %1629 = vmatprep.subr.mxu0 0.0
  %1630 = vmatpush1.msra.mxu0 0.0
  %1631 = vmatprep.subr.mxu0 0.0
  %1632 = vmatpush1.msra.mxu0 0.0
  %1633 = vmatprep.subr.mxu0 0.0
  %1634 = vmatpush1.msra.mxu0 0.0
  %1635 = vmatprep.subr.mxu0 0.0
  %1636 = vmatpush1.msra.mxu0 0.0
  %1637 = vmatprep.subr.mxu0 0.0
  %1638 = vmatpush1.msra.mxu0 %v1527
  %1639 = vmatprep.subr.mxu0 0.0
  %1640 = vmatpush2.msra.mxu0 0.0
  %1641 = vmatprep.subr.mxu0 0.0
  %1642 = vmatpush2.msra.mxu0 0.0
  %1643 = vmatprep.subr.mxu0 0.0
  %1644 = vmatpush2.msra.mxu0 0.0
  %1645 = vmatprep.subr.mxu0 0.0
  %1646 = vmatpush2.msra.mxu0 0.0
  %1647 = vmatprep.subr.mxu0 0.0
  %1648 = vmatpush2.msra.mxu0 0.0
  %1649 = vmatprep.subr.mxu0 0.0
  %1650 = vmatpush2.msra.mxu0 0.0
  %1651 = vmatprep.subr.mxu0 0.0
  %1652 = vmatpush2.msra.mxu0 0.0
  %1653 = vmatprep.subr.mxu0 0.0
  %1654 = vmatpush2.msra.mxu0 0.0
  %1655 = vmatprep.subr.mxu0 0.0
  %1656 = vmatpush2.msra.mxu0 0.0
  %1657 = vmatprep.subr.mxu0 0.0
  %1658 = vmatpush2.msra.mxu0 0.0
  %1659 = vmatprep.subr.mxu0 0.0
  %1660 = vmatpush2.msra.mxu0 0.0
  %1661 = vmatprep.subr.mxu0 0.0
  %1662 = vmatpush2.msra.mxu0 0.0
  %1663 = vmatprep.subr.mxu0 0.0
  %1664 = vmatpush2.msra.mxu0 0.0
  %1665 = vmatprep.subr.mxu0 0.0
  %1666 = vmatpush2.msra.mxu0 0.0
  %1667 = vmatprep.subr.mxu0 0.0
  %1668 = vmatpush2.msra.mxu0 0.0
  %1669 = vmatprep.subr.mxu0 0.0
  %1670 = vmatpush2.msra.mxu0 0.0
  %1671 = vmatprep.mubr.f32.mxu0 0.0
  %1672 = vmatmul.mubr.f32.gmra.mxu0 %v1534
  %v1673 = vpop.f32.mrf.mxu0
  %v1674 = vadd.f32 0.0, %v1673
  %v1675 = vpop.f32.mrf.mxu0
  %1676 = vdwg.mxu0
  %v1678 = vsel %vm44, %v1513, 0
  %1680 = vmatprep.subr.mxu0 0.0
  %1681 = vmatpush1.msra.mxu0 0.0
  %1682 = vmatprep.subr.mxu0 0.0
  %1683 = vmatpush1.msra.mxu0 0.0
  %1684 = vmatprep.subr.mxu0 0.0
  %1685 = vmatpush1.msra.mxu0 0.0
  %1686 = vmatprep.subr.mxu0 0.0
  %1687 = vmatpush1.msra.mxu0 0.0
  %1688 = vmatprep.subr.mxu0 0.0
  %1689 = vmatpush1.msra.mxu0 0.0
  %1690 = vmatprep.subr.mxu0 0.0
  %1691 = vmatpush1.msra.mxu0 0.0
  %1692 = vmatprep.subr.mxu0 0.0
  %1693 = vmatpush1.msra.mxu0 0.0
  %1694 = vmatprep.subr.mxu0 0.0
  %1695 = vmatpush1.msra.mxu0 0.0
  %1696 = vmatprep.subr.mxu0 0.0
  %1697 = vmatpush1.msra.mxu0 0.0
  %1698 = vmatprep.subr.mxu0 0.0
  %1699 = vmatpush1.msra.mxu0 0.0
  %1700 = vmatprep.subr.mxu0 0.0
  %1701 = vmatpush1.msra.mxu0 0.0
  %1702 = vmatprep.subr.mxu0 0.0
  %1703 = vmatpush1.msra.mxu0 0.0
  %1704 = vmatprep.subr.mxu0 0.0
  %1705 = vmatpush1.msra.mxu0 0.0
  %1706 = vmatprep.subr.mxu0 0.0
  %1707 = vmatpush1.msra.mxu0 0.0
  %1708 = vmatprep.subr.mxu0 0.0
  %1709 = vmatpush1.msra.mxu0 0.0
  %1710 = vmatprep.subr.mxu0 %v1515
  %1711 = vmatpush1.msra.mxu0 %v1514
  %1712 = vmatprep.subr.mxu0 0.0
  %1713 = vmatpush2.msra.mxu0 0.0
  %1714 = vmatprep.subr.mxu0 0.0
  %1715 = vmatpush2.msra.mxu0 0.0
  %1716 = vmatprep.subr.mxu0 0.0
  %1717 = vmatpush2.msra.mxu0 0.0
  %1718 = vmatprep.subr.mxu0 0.0
  %1719 = vmatpush2.msra.mxu0 0.0
  %1720 = vmatprep.subr.mxu0 0.0
  %1721 = vmatpush2.msra.mxu0 0.0
  %1722 = vmatprep.subr.mxu0 0.0
  %1723 = vmatpush2.msra.mxu0 0.0
  %1724 = vmatprep.subr.mxu0 0.0
  %1725 = vmatpush2.msra.mxu0 0.0
  %1726 = vmatprep.subr.mxu0 0.0
  %1727 = vmatpush2.msra.mxu0 0.0
  %1728 = vmatprep.subr.mxu0 0.0
  %1729 = vmatpush2.msra.mxu0 0.0
  %1730 = vmatprep.subr.mxu0 0.0
  %1731 = vmatpush2.msra.mxu0 0.0
  %1732 = vmatprep.subr.mxu0 0.0
  %1733 = vmatpush2.msra.mxu0 0.0
  %1734 = vmatprep.subr.mxu0 0.0
  %1735 = vmatpush2.msra.mxu0 0.0
  %1736 = vmatprep.subr.mxu0 0.0
  %1737 = vmatpush2.msra.mxu0 0.0
  %1738 = vmatprep.subr.mxu0 0.0
  %1739 = vmatpush2.msra.mxu0 0.0
  %1740 = vmatprep.subr.mxu0 0.0
  %1741 = vmatpush2.msra.mxu0 0.0
  %1742 = vmatprep.subr.mxu0 0.0
  %1743 = vmatpush2.msra.mxu0 0.0
  %1744 = vmatprep.mubr.f32.mxu0 0.0
  %1745 = vmatmul.mubr.f32.gmra.mxu0 %v1678
  %v1746 = vpop.f32.mrf.mxu0
  %v1747 = vadd.f32 %v1603, %v1746
  %v1748 = vpop.f32.mrf.mxu0
  %v1749 = vadd.f32 %v1605, %v1748
  %1750 = vdwg.mxu0
  %1751 = vmatprep.subr.mxu0 0.0
  %1752 = vmatpush1.msra.mxu0 0.0
  %1753 = vmatprep.subr.mxu0 0.0
  %1754 = vmatpush1.msra.mxu0 0.0
  %1755 = vmatprep.subr.mxu0 0.0
  %1756 = vmatpush1.msra.mxu0 0.0
  %1757 = vmatprep.subr.mxu0 0.0
  %1758 = vmatpush1.msra.mxu0 0.0
  %1759 = vmatprep.subr.mxu0 0.0
  %1760 = vmatpush1.msra.mxu0 0.0
  %1761 = vmatprep.subr.mxu0 0.0
  %1762 = vmatpush1.msra.mxu0 0.0
  %1763 = vmatprep.subr.mxu0 0.0
  %1764 = vmatpush1.msra.mxu0 0.0
  %1765 = vmatprep.subr.mxu0 0.0
  %1766 = vmatpush1.msra.mxu0 0.0
  %1767 = vmatprep.subr.mxu0 0.0
  %1768 = vmatpush1.msra.mxu0 0.0
  %1769 = vmatprep.subr.mxu0 0.0
  %1770 = vmatpush1.msra.mxu0 0.0
  %1771 = vmatprep.subr.mxu0 0.0
  %1772 = vmatpush1.msra.mxu0 0.0
  %1773 = vmatprep.subr.mxu0 0.0
  %1774 = vmatpush1.msra.mxu0 0.0
  %1775 = vmatprep.subr.mxu0 0.0
  %1776 = vmatpush1.msra.mxu0 0.0
  %1777 = vmatprep.subr.mxu0 0.0
  %1778 = vmatpush1.msra.mxu0 0.0
  %1779 = vmatprep.subr.mxu0 0.0
  %1780 = vmatpush1.msra.mxu0 0.0
  %1781 = vmatprep.subr.mxu0 0.0
  %1782 = vmatpush1.msra.mxu0 %v1516
  %1783 = vmatprep.subr.mxu0 0.0
  %1784 = vmatpush2.msra.mxu0 0.0
  %1785 = vmatprep.subr.mxu0 0.0
  %1786 = vmatpush2.msra.mxu0 0.0
  %1787 = vmatprep.subr.mxu0 0.0
  %1788 = vmatpush2.msra.mxu0 0.0
  %1789 = vmatprep.subr.mxu0 0.0
  %1790 = vmatpush2.msra.mxu0 0.0
  %1791 = vmatprep.subr.mxu0 0.0
  %1792 = vmatpush2.msra.mxu0 0.0
  %1793 = vmatprep.subr.mxu0 0.0
  %1794 = vmatpush2.msra.mxu0 0.0
  %1795 = vmatprep.subr.mxu0 0.0
  %1796 = vmatpush2.msra.mxu0 0.0
  %1797 = vmatprep.subr.mxu0 0.0
  %1798 = vmatpush2.msra.mxu0 0.0
  %1799 = vmatprep.subr.mxu0 0.0
  %1800 = vmatpush2.msra.mxu0 0.0
  %1801 = vmatprep.subr.mxu0 0.0
  %1802 = vmatpush2.msra.mxu0 0.0
  %1803 = vmatprep.subr.mxu0 0.0
  %1804 = vmatpush2.msra.mxu0 0.0
  %1805 = vmatprep.subr.mxu0 0.0
  %1806 = vmatpush2.msra.mxu0 0.0
  %1807 = vmatprep.subr.mxu0 0.0
  %1808 = vmatpush2.msra.mxu0 0.0
  %1809 = vmatprep.subr.mxu0 0.0
  %1810 = vmatpush2.msra.mxu0 0.0
  %1811 = vmatprep.subr.mxu0 0.0
  %1812 = vmatpush2.msra.mxu0 0.0
  %1813 = vmatprep.subr.mxu0 0.0
  %1814 = vmatpush2.msra.mxu0 0.0
  %1815 = vmatprep.mubr.f32.mxu0 0.0
  %1816 = vmatmul.mubr.f32.gmra.mxu0 %v1678
  %v1817 = vpop.f32.mrf.mxu0
  %v1818 = vadd.f32 %v1674, %v1817
  %v1819 = vpop.f32.mrf.mxu0
  %1820 = vdwg.mxu0
  %s1821 = scalar_lea.vmem %s4, 16
  %v1822 = vld [vmem:[%s1821] sm:$0xff]
  %1823 = vrot.lane.b32.xlu0 %v1514, 126
  %v1824 = vpop.permute.xlu0 %1823
  %1825 = vrot.lane.b32.xlu0 %v1515, 126
  %v1826 = vpop.permute.xlu0 %1825
  %1827 = vrot.lane.b32.xlu0 %v1516, 126
  %v1828 = vpop.permute.xlu0 %1827
  %v1829 = vsel %vm341, %v1824, %v1826
  %v1830 = vsel %vm341, %v1826, %v1828
  %v1835 = vsel %vm44, %v1822, 0
  %1837 = vmatprep.subr.mxu0 0.0
  %1838 = vmatpush1.msra.mxu0 0.0
  %1839 = vmatprep.subr.mxu0 0.0
  %1840 = vmatpush1.msra.mxu0 0.0
  %1841 = vmatprep.subr.mxu0 0.0
  %1842 = vmatpush1.msra.mxu0 0.0
  %1843 = vmatprep.subr.mxu0 0.0
  %1844 = vmatpush1.msra.mxu0 0.0
  %1845 = vmatprep.subr.mxu0 0.0
  %1846 = vmatpush1.msra.mxu0 0.0
  %1847 = vmatprep.subr.mxu0 0.0
  %1848 = vmatpush1.msra.mxu0 0.0
  %1849 = vmatprep.subr.mxu0 0.0
  %1850 = vmatpush1.msra.mxu0 0.0
  %1851 = vmatprep.subr.mxu0 0.0
  %1852 = vmatpush1.msra.mxu0 0.0
  %1853 = vmatprep.subr.mxu0 0.0
  %1854 = vmatpush1.msra.mxu0 0.0
  %1855 = vmatprep.subr.mxu0 0.0
  %1856 = vmatpush1.msra.mxu0 0.0
  %1857 = vmatprep.subr.mxu0 0.0
  %1858 = vmatpush1.msra.mxu0 0.0
  %1859 = vmatprep.subr.mxu0 0.0
  %1860 = vmatpush1.msra.mxu0 0.0
  %1861 = vmatprep.subr.mxu0 0.0
  %1862 = vmatpush1.msra.mxu0 0.0
  %1863 = vmatprep.subr.mxu0 0.0
  %1864 = vmatpush1.msra.mxu0 0.0
  %1865 = vmatprep.subr.mxu0 0.0
  %1866 = vmatpush1.msra.mxu0 0.0
  %1867 = vmatprep.subr.mxu0 %v1830
  %1868 = vmatpush1.msra.mxu0 %v1829
  %1869 = vmatprep.subr.mxu0 0.0
  %1870 = vmatpush2.msra.mxu0 0.0
  %1871 = vmatprep.subr.mxu0 0.0
  %1872 = vmatpush2.msra.mxu0 0.0
  %1873 = vmatprep.subr.mxu0 0.0
  %1874 = vmatpush2.msra.mxu0 0.0
  %1875 = vmatprep.subr.mxu0 0.0
  %1876 = vmatpush2.msra.mxu0 0.0
  %1877 = vmatprep.subr.mxu0 0.0
  %1878 = vmatpush2.msra.mxu0 0.0
  %1879 = vmatprep.subr.mxu0 0.0
  %1880 = vmatpush2.msra.mxu0 0.0
  %1881 = vmatprep.subr.mxu0 0.0
  %1882 = vmatpush2.msra.mxu0 0.0
  %1883 = vmatprep.subr.mxu0 0.0
  %1884 = vmatpush2.msra.mxu0 0.0
  %1885 = vmatprep.subr.mxu0 0.0
  %1886 = vmatpush2.msra.mxu0 0.0
  %1887 = vmatprep.subr.mxu0 0.0
  %1888 = vmatpush2.msra.mxu0 0.0
  %1889 = vmatprep.subr.mxu0 0.0
  %1890 = vmatpush2.msra.mxu0 0.0
  %1891 = vmatprep.subr.mxu0 0.0
  %1892 = vmatpush2.msra.mxu0 0.0
  %1893 = vmatprep.subr.mxu0 0.0
  %1894 = vmatpush2.msra.mxu0 0.0
  %1895 = vmatprep.subr.mxu0 0.0
  %1896 = vmatpush2.msra.mxu0 0.0
  %1897 = vmatprep.subr.mxu0 0.0
  %1898 = vmatpush2.msra.mxu0 0.0
  %1899 = vmatprep.subr.mxu0 0.0
  %1900 = vmatpush2.msra.mxu0 0.0
  %1901 = vmatprep.mubr.f32.mxu0 0.0
  %1902 = vmatmul.mubr.f32.gmra.mxu0 %v1835
  %v1903 = vpop.f32.mrf.mxu0
  %v1904 = vadd.f32 0.0, %v1903
  %v1905 = vpop.f32.mrf.mxu0
  %v1906 = vadd.f32 0.0, %v1905
  %1907 = vdwg.mxu0
  %1908 = vmatprep.subr.mxu0 0.0
  %1909 = vmatpush1.msra.mxu0 0.0
  %1910 = vmatprep.subr.mxu0 0.0
  %1911 = vmatpush1.msra.mxu0 0.0
  %1912 = vmatprep.subr.mxu0 0.0
  %1913 = vmatpush1.msra.mxu0 0.0
  %1914 = vmatprep.subr.mxu0 0.0
  %1915 = vmatpush1.msra.mxu0 0.0
  %1916 = vmatprep.subr.mxu0 0.0
  %1917 = vmatpush1.msra.mxu0 0.0
  %1918 = vmatprep.subr.mxu0 0.0
  %1919 = vmatpush1.msra.mxu0 0.0
  %1920 = vmatprep.subr.mxu0 0.0
  %1921 = vmatpush1.msra.mxu0 0.0
  %1922 = vmatprep.subr.mxu0 0.0
  %1923 = vmatpush1.msra.mxu0 0.0
  %1924 = vmatprep.subr.mxu0 0.0
  %1925 = vmatpush1.msra.mxu0 0.0
  %1926 = vmatprep.subr.mxu0 0.0
  %1927 = vmatpush1.msra.mxu0 0.0
  %1928 = vmatprep.subr.mxu0 0.0
  %1929 = vmatpush1.msra.mxu0 0.0
  %1930 = vmatprep.subr.mxu0 0.0
  %1931 = vmatpush1.msra.mxu0 0.0
  %1932 = vmatprep.subr.mxu0 0.0
  %1933 = vmatpush1.msra.mxu0 0.0
  %1934 = vmatprep.subr.mxu0 0.0
  %1935 = vmatpush1.msra.mxu0 0.0
  %1936 = vmatprep.subr.mxu0 0.0
  %1937 = vmatpush1.msra.mxu0 0.0
  %1938 = vmatprep.subr.mxu0 0.0
  %1939 = vmatpush1.msra.mxu0 %v1828
  %1940 = vmatprep.subr.mxu0 0.0
  %1941 = vmatpush2.msra.mxu0 0.0
  %1942 = vmatprep.subr.mxu0 0.0
  %1943 = vmatpush2.msra.mxu0 0.0
  %1944 = vmatprep.subr.mxu0 0.0
  %1945 = vmatpush2.msra.mxu0 0.0
  %1946 = vmatprep.subr.mxu0 0.0
  %1947 = vmatpush2.msra.mxu0 0.0
  %1948 = vmatprep.subr.mxu0 0.0
  %1949 = vmatpush2.msra.mxu0 0.0
  %1950 = vmatprep.subr.mxu0 0.0
  %1951 = vmatpush2.msra.mxu0 0.0
  %1952 = vmatprep.subr.mxu0 0.0
  %1953 = vmatpush2.msra.mxu0 0.0
  %1954 = vmatprep.subr.mxu0 0.0
  %1955 = vmatpush2.msra.mxu0 0.0
  %1956 = vmatprep.subr.mxu0 0.0
  %1957 = vmatpush2.msra.mxu0 0.0
  %1958 = vmatprep.subr.mxu0 0.0
  %1959 = vmatpush2.msra.mxu0 0.0
  %1960 = vmatprep.subr.mxu0 0.0
  %1961 = vmatpush2.msra.mxu0 0.0
  %1962 = vmatprep.subr.mxu0 0.0
  %1963 = vmatpush2.msra.mxu0 0.0
  %1964 = vmatprep.subr.mxu0 0.0
  %1965 = vmatpush2.msra.mxu0 0.0
  %1966 = vmatprep.subr.mxu0 0.0
  %1967 = vmatpush2.msra.mxu0 0.0
  %1968 = vmatprep.subr.mxu0 0.0
  %1969 = vmatpush2.msra.mxu0 0.0
  %1970 = vmatprep.subr.mxu0 0.0
  %1971 = vmatpush2.msra.mxu0 0.0
  %1972 = vmatprep.mubr.f32.mxu0 0.0
  %1973 = vmatmul.mubr.f32.gmra.mxu0 %v1835
  %v1974 = vpop.f32.mrf.mxu0
  %v1975 = vadd.f32 0.0, %v1974
  %v1976 = vpop.f32.mrf.mxu0
  %1977 = vdwg.mxu0
  %v1978 = vadd.f32 %v1747, %v1904
  %v1979 = vadd.f32 %v1749, %v1906
  %v1980 = vadd.f32 %v1818, %v1975
  %s1981 = scalar_lea.vmem %s4, 24
  %v1982 = vld [vmem:[%s1981] sm:$0xff]
  %1983 = vrot.lane.b32.xlu0 %v1514, 108
  %v1984 = vpop.permute.xlu0 %1983
  %1985 = vrot.lane.b32.xlu0 %v1515, 108
  %v1986 = vpop.permute.xlu0 %1985
  %1987 = vrot.lane.b32.xlu0 %v1516, 108
  %v1988 = vpop.permute.xlu0 %1987
  %v1989 = vsel %vm502, %v1984, %v1986
  %v1990 = vsel %vm502, %v1986, %v1988
  %v1995 = vsel %vm44, %v1982, 0
  %1997 = vmatprep.subr.mxu0 0.0
  %1998 = vmatpush1.msra.mxu0 0.0
  %1999 = vmatprep.subr.mxu0 0.0
  %2000 = vmatpush1.msra.mxu0 0.0
  %2001 = vmatprep.subr.mxu0 0.0
  %2002 = vmatpush1.msra.mxu0 0.0
  %2003 = vmatprep.subr.mxu0 0.0
  %2004 = vmatpush1.msra.mxu0 0.0
  %2005 = vmatprep.subr.mxu0 0.0
  %2006 = vmatpush1.msra.mxu0 0.0
  %2007 = vmatprep.subr.mxu0 0.0
  %2008 = vmatpush1.msra.mxu0 0.0
  %2009 = vmatprep.subr.mxu0 0.0
  %2010 = vmatpush1.msra.mxu0 0.0
  %2011 = vmatprep.subr.mxu0 0.0
  %2012 = vmatpush1.msra.mxu0 0.0
  %2013 = vmatprep.subr.mxu0 0.0
  %2014 = vmatpush1.msra.mxu0 0.0
  %2015 = vmatprep.subr.mxu0 0.0
  %2016 = vmatpush1.msra.mxu0 0.0
  %2017 = vmatprep.subr.mxu0 0.0
  %2018 = vmatpush1.msra.mxu0 0.0
  %2019 = vmatprep.subr.mxu0 0.0
  %2020 = vmatpush1.msra.mxu0 0.0
  %2021 = vmatprep.subr.mxu0 0.0
  %2022 = vmatpush1.msra.mxu0 0.0
  %2023 = vmatprep.subr.mxu0 0.0
  %2024 = vmatpush1.msra.mxu0 0.0
  %2025 = vmatprep.subr.mxu0 0.0
  %2026 = vmatpush1.msra.mxu0 0.0
  %2027 = vmatprep.subr.mxu0 %v1990
  %2028 = vmatpush1.msra.mxu0 %v1989
  %2029 = vmatprep.subr.mxu0 0.0
  %2030 = vmatpush2.msra.mxu0 0.0
  %2031 = vmatprep.subr.mxu0 0.0
  %2032 = vmatpush2.msra.mxu0 0.0
  %2033 = vmatprep.subr.mxu0 0.0
  %2034 = vmatpush2.msra.mxu0 0.0
  %2035 = vmatprep.subr.mxu0 0.0
  %2036 = vmatpush2.msra.mxu0 0.0
  %2037 = vmatprep.subr.mxu0 0.0
  %2038 = vmatpush2.msra.mxu0 0.0
  %2039 = vmatprep.subr.mxu0 0.0
  %2040 = vmatpush2.msra.mxu0 0.0
  %2041 = vmatprep.subr.mxu0 0.0
  %2042 = vmatpush2.msra.mxu0 0.0
  %2043 = vmatprep.subr.mxu0 0.0
  %2044 = vmatpush2.msra.mxu0 0.0
  %2045 = vmatprep.subr.mxu0 0.0
  %2046 = vmatpush2.msra.mxu0 0.0
  %2047 = vmatprep.subr.mxu0 0.0
  %2048 = vmatpush2.msra.mxu0 0.0
  %2049 = vmatprep.subr.mxu0 0.0
  %2050 = vmatpush2.msra.mxu0 0.0
  %2051 = vmatprep.subr.mxu0 0.0
  %2052 = vmatpush2.msra.mxu0 0.0
  %2053 = vmatprep.subr.mxu0 0.0
  %2054 = vmatpush2.msra.mxu0 0.0
  %2055 = vmatprep.subr.mxu0 0.0
  %2056 = vmatpush2.msra.mxu0 0.0
  %2057 = vmatprep.subr.mxu0 0.0
  %2058 = vmatpush2.msra.mxu0 0.0
  %2059 = vmatprep.subr.mxu0 0.0
  %2060 = vmatpush2.msra.mxu0 0.0
  %2061 = vmatprep.mubr.f32.mxu0 0.0
  %2062 = vmatmul.mubr.f32.gmra.mxu0 %v1995
  %v2063 = vpop.f32.mrf.mxu0
  %v2064 = vadd.f32 0.0, %v2063
  %v2065 = vpop.f32.mrf.mxu0
  %v2066 = vadd.f32 0.0, %v2065
  %2067 = vdwg.mxu0
  %2068 = vmatprep.subr.mxu0 0.0
  %2069 = vmatpush1.msra.mxu0 0.0
  %2070 = vmatprep.subr.mxu0 0.0
  %2071 = vmatpush1.msra.mxu0 0.0
  %2072 = vmatprep.subr.mxu0 0.0
  %2073 = vmatpush1.msra.mxu0 0.0
  %2074 = vmatprep.subr.mxu0 0.0
  %2075 = vmatpush1.msra.mxu0 0.0
  %2076 = vmatprep.subr.mxu0 0.0
  %2077 = vmatpush1.msra.mxu0 0.0
  %2078 = vmatprep.subr.mxu0 0.0
  %2079 = vmatpush1.msra.mxu0 0.0
  %2080 = vmatprep.subr.mxu0 0.0
  %2081 = vmatpush1.msra.mxu0 0.0
  %2082 = vmatprep.subr.mxu0 0.0
  %2083 = vmatpush1.msra.mxu0 0.0
  %2084 = vmatprep.subr.mxu0 0.0
  %2085 = vmatpush1.msra.mxu0 0.0
  %2086 = vmatprep.subr.mxu0 0.0
  %2087 = vmatpush1.msra.mxu0 0.0
  %2088 = vmatprep.subr.mxu0 0.0
  %2089 = vmatpush1.msra.mxu0 0.0
  %2090 = vmatprep.subr.mxu0 0.0
  %2091 = vmatpush1.msra.mxu0 0.0
  %2092 = vmatprep.subr.mxu0 0.0
  %2093 = vmatpush1.msra.mxu0 0.0
  %2094 = vmatprep.subr.mxu0 0.0
  %2095 = vmatpush1.msra.mxu0 0.0
  %2096 = vmatprep.subr.mxu0 0.0
  %2097 = vmatpush1.msra.mxu0 0.0
  %2098 = vmatprep.subr.mxu0 0.0
  %2099 = vmatpush1.msra.mxu0 %v1988
  %2100 = vmatprep.subr.mxu0 0.0
  %2101 = vmatpush2.msra.mxu0 0.0
  %2102 = vmatprep.subr.mxu0 0.0
  %2103 = vmatpush2.msra.mxu0 0.0
  %2104 = vmatprep.subr.mxu0 0.0
  %2105 = vmatpush2.msra.mxu0 0.0
  %2106 = vmatprep.subr.mxu0 0.0
  %2107 = vmatpush2.msra.mxu0 0.0
  %2108 = vmatprep.subr.mxu0 0.0
  %2109 = vmatpush2.msra.mxu0 0.0
  %2110 = vmatprep.subr.mxu0 0.0
  %2111 = vmatpush2.msra.mxu0 0.0
  %2112 = vmatprep.subr.mxu0 0.0
  %2113 = vmatpush2.msra.mxu0 0.0
  %2114 = vmatprep.subr.mxu0 0.0
  %2115 = vmatpush2.msra.mxu0 0.0
  %2116 = vmatprep.subr.mxu0 0.0
  %2117 = vmatpush2.msra.mxu0 0.0
  %2118 = vmatprep.subr.mxu0 0.0
  %2119 = vmatpush2.msra.mxu0 0.0
  %2120 = vmatprep.subr.mxu0 0.0
  %2121 = vmatpush2.msra.mxu0 0.0
  %2122 = vmatprep.subr.mxu0 0.0
  %2123 = vmatpush2.msra.mxu0 0.0
  %2124 = vmatprep.subr.mxu0 0.0
  %2125 = vmatpush2.msra.mxu0 0.0
  %2126 = vmatprep.subr.mxu0 0.0
  %2127 = vmatpush2.msra.mxu0 0.0
  %2128 = vmatprep.subr.mxu0 0.0
  %2129 = vmatpush2.msra.mxu0 0.0
  %2130 = vmatprep.subr.mxu0 0.0
  %2131 = vmatpush2.msra.mxu0 0.0
  %2132 = vmatprep.mubr.f32.mxu0 0.0
  %2133 = vmatmul.mubr.f32.gmra.mxu0 %v1995
  %v2134 = vpop.f32.mrf.mxu0
  %v2135 = vadd.f32 0.0, %v2134
  %v2136 = vpop.f32.mrf.mxu0
  %2137 = vdwg.mxu0
  %v2138 = vadd.f32 %v1978, %v2064
  %v2139 = vadd.f32 %v1979, %v2066
  %v2140 = vadd.f32 %v1980, %v2135
  %s2141 = scalar_lea.vmem %s4, 32
  %v2142 = vld [vmem:[%s2141] sm:$0xff]
  %2143 = vrot.lane.b32.xlu0 %v1514, 107
  %v2144 = vpop.permute.xlu0 %2143
  %2145 = vrot.lane.b32.xlu0 %v1515, 107
  %v2146 = vpop.permute.xlu0 %2145
  %2147 = vrot.lane.b32.xlu0 %v1516, 107
  %v2148 = vpop.permute.xlu0 %2147
  %v2149 = vsel %vm663, %v2144, %v2146
  %v2150 = vsel %vm663, %v2146, %v2148
  %v2155 = vsel %vm44, %v2142, 0
  %2157 = vmatprep.subr.mxu0 0.0
  %2158 = vmatpush1.msra.mxu0 0.0
  %2159 = vmatprep.subr.mxu0 0.0
  %2160 = vmatpush1.msra.mxu0 0.0
  %2161 = vmatprep.subr.mxu0 0.0
  %2162 = vmatpush1.msra.mxu0 0.0
  %2163 = vmatprep.subr.mxu0 0.0
  %2164 = vmatpush1.msra.mxu0 0.0
  %2165 = vmatprep.subr.mxu0 0.0
  %2166 = vmatpush1.msra.mxu0 0.0
  %2167 = vmatprep.subr.mxu0 0.0
  %2168 = vmatpush1.msra.mxu0 0.0
  %2169 = vmatprep.subr.mxu0 0.0
  %2170 = vmatpush1.msra.mxu0 0.0
  %2171 = vmatprep.subr.mxu0 0.0
  %2172 = vmatpush1.msra.mxu0 0.0
  %2173 = vmatprep.subr.mxu0 0.0
  %2174 = vmatpush1.msra.mxu0 0.0
  %2175 = vmatprep.subr.mxu0 0.0
  %2176 = vmatpush1.msra.mxu0 0.0
  %2177 = vmatprep.subr.mxu0 0.0
  %2178 = vmatpush1.msra.mxu0 0.0
  %2179 = vmatprep.subr.mxu0 0.0
  %2180 = vmatpush1.msra.mxu0 0.0
  %2181 = vmatprep.subr.mxu0 0.0
  %2182 = vmatpush1.msra.mxu0 0.0
  %2183 = vmatprep.subr.mxu0 0.0
  %2184 = vmatpush1.msra.mxu0 0.0
  %2185 = vmatprep.subr.mxu0 0.0
  %2186 = vmatpush1.msra.mxu0 0.0
  %2187 = vmatprep.subr.mxu0 %v2150
  %2188 = vmatpush1.msra.mxu0 %v2149
  %2189 = vmatprep.subr.mxu0 0.0
  %2190 = vmatpush2.msra.mxu0 0.0
  %2191 = vmatprep.subr.mxu0 0.0
  %2192 = vmatpush2.msra.mxu0 0.0
  %2193 = vmatprep.subr.mxu0 0.0
  %2194 = vmatpush2.msra.mxu0 0.0
  %2195 = vmatprep.subr.mxu0 0.0
  %2196 = vmatpush2.msra.mxu0 0.0
  %2197 = vmatprep.subr.mxu0 0.0
  %2198 = vmatpush2.msra.mxu0 0.0
  %2199 = vmatprep.subr.mxu0 0.0
  %2200 = vmatpush2.msra.mxu0 0.0
  %2201 = vmatprep.subr.mxu0 0.0
  %2202 = vmatpush2.msra.mxu0 0.0
  %2203 = vmatprep.subr.mxu0 0.0
  %2204 = vmatpush2.msra.mxu0 0.0
  %2205 = vmatprep.subr.mxu0 0.0
  %2206 = vmatpush2.msra.mxu0 0.0
  %2207 = vmatprep.subr.mxu0 0.0
  %2208 = vmatpush2.msra.mxu0 0.0
  %2209 = vmatprep.subr.mxu0 0.0
  %2210 = vmatpush2.msra.mxu0 0.0
  %2211 = vmatprep.subr.mxu0 0.0
  %2212 = vmatpush2.msra.mxu0 0.0
  %2213 = vmatprep.subr.mxu0 0.0
  %2214 = vmatpush2.msra.mxu0 0.0
  %2215 = vmatprep.subr.mxu0 0.0
  %2216 = vmatpush2.msra.mxu0 0.0
  %2217 = vmatprep.subr.mxu0 0.0
  %2218 = vmatpush2.msra.mxu0 0.0
  %2219 = vmatprep.subr.mxu0 0.0
  %2220 = vmatpush2.msra.mxu0 0.0
  %2221 = vmatprep.mubr.f32.mxu0 0.0
  %2222 = vmatmul.mubr.f32.gmra.mxu0 %v2155
  %v2223 = vpop.f32.mrf.mxu0
  %v2224 = vadd.f32 0.0, %v2223
  %v2225 = vpop.f32.mrf.mxu0
  %v2226 = vadd.f32 0.0, %v2225
  %2227 = vdwg.mxu0
  %2228 = vmatprep.subr.mxu0 0.0
  %2229 = vmatpush1.msra.mxu0 0.0
  %2230 = vmatprep.subr.mxu0 0.0
  %2231 = vmatpush1.msra.mxu0 0.0
  %2232 = vmatprep.subr.mxu0 0.0
  %2233 = vmatpush1.msra.mxu0 0.0
  %2234 = vmatprep.subr.mxu0 0.0
  %2235 = vmatpush1.msra.mxu0 0.0
  %2236 = vmatprep.subr.mxu0 0.0
  %2237 = vmatpush1.msra.mxu0 0.0
  %2238 = vmatprep.subr.mxu0 0.0
  %2239 = vmatpush1.msra.mxu0 0.0
  %2240 = vmatprep.subr.mxu0 0.0
  %2241 = vmatpush1.msra.mxu0 0.0
  %2242 = vmatprep.subr.mxu0 0.0
  %2243 = vmatpush1.msra.mxu0 0.0
  %2244 = vmatprep.subr.mxu0 0.0
  %2245 = vmatpush1.msra.mxu0 0.0
  %2246 = vmatprep.subr.mxu0 0.0
  %2247 = vmatpush1.msra.mxu0 0.0
  %2248 = vmatprep.subr.mxu0 0.0
  %2249 = vmatpush1.msra.mxu0 0.0
  %2250 = vmatprep.subr.mxu0 0.0
  %2251 = vmatpush1.msra.mxu0 0.0
  %2252 = vmatprep.subr.mxu0 0.0
  %2253 = vmatpush1.msra.mxu0 0.0
  %2254 = vmatprep.subr.mxu0 0.0
  %2255 = vmatpush1.msra.mxu0 0.0
  %2256 = vmatprep.subr.mxu0 0.0
  %2257 = vmatpush1.msra.mxu0 0.0
  %2258 = vmatprep.subr.mxu0 0.0
  %2259 = vmatpush1.msra.mxu0 %v2148
  %2260 = vmatprep.subr.mxu0 0.0
  %2261 = vmatpush2.msra.mxu0 0.0
  %2262 = vmatprep.subr.mxu0 0.0
  %2263 = vmatpush2.msra.mxu0 0.0
  %2264 = vmatprep.subr.mxu0 0.0
  %2265 = vmatpush2.msra.mxu0 0.0
  %2266 = vmatprep.subr.mxu0 0.0
  %2267 = vmatpush2.msra.mxu0 0.0
  %2268 = vmatprep.subr.mxu0 0.0
  %2269 = vmatpush2.msra.mxu0 0.0
  %2270 = vmatprep.subr.mxu0 0.0
  %2271 = vmatpush2.msra.mxu0 0.0
  %2272 = vmatprep.subr.mxu0 0.0
  %2273 = vmatpush2.msra.mxu0 0.0
  %2274 = vmatprep.subr.mxu0 0.0
  %2275 = vmatpush2.msra.mxu0 0.0
  %2276 = vmatprep.subr.mxu0 0.0
  %2277 = vmatpush2.msra.mxu0 0.0
  %2278 = vmatprep.subr.mxu0 0.0
  %2279 = vmatpush2.msra.mxu0 0.0
  %2280 = vmatprep.subr.mxu0 0.0
  %2281 = vmatpush2.msra.mxu0 0.0
  %2282 = vmatprep.subr.mxu0 0.0
  %2283 = vmatpush2.msra.mxu0 0.0
  %2284 = vmatprep.subr.mxu0 0.0
  %2285 = vmatpush2.msra.mxu0 0.0
  %2286 = vmatprep.subr.mxu0 0.0
  %2287 = vmatpush2.msra.mxu0 0.0
  %2288 = vmatprep.subr.mxu0 0.0
  %2289 = vmatpush2.msra.mxu0 0.0
  %2290 = vmatprep.subr.mxu0 0.0
  %2291 = vmatpush2.msra.mxu0 0.0
  %2292 = vmatprep.mubr.f32.mxu0 0.0
  %2293 = vmatmul.mubr.f32.gmra.mxu0 %v2155
  %v2294 = vpop.f32.mrf.mxu0
  %v2295 = vadd.f32 0.0, %v2294
  %v2296 = vpop.f32.mrf.mxu0
  %2297 = vdwg.mxu0
  %v2298 = vadd.f32 %v2138, %v2224
  %v2299 = vadd.f32 %v2139, %v2226
  %v2300 = vadd.f32 %v2140, %v2295
  %s2301 = scalar_lea.vmem %s4, 40
  %v2302 = vld [vmem:[%s2301] sm:$0xff]
  %2303 = vrot.lane.b32.xlu0 %v1514, 106
  %v2304 = vpop.permute.xlu0 %2303
  %2305 = vrot.lane.b32.xlu0 %v1515, 106
  %v2306 = vpop.permute.xlu0 %2305
  %2307 = vrot.lane.b32.xlu0 %v1516, 106
  %v2308 = vpop.permute.xlu0 %2307
  %v2309 = vsel %vm824, %v2304, %v2306
  %v2310 = vsel %vm824, %v2306, %v2308
  %v2315 = vsel %vm44, %v2302, 0
  %2317 = vmatprep.subr.mxu0 0.0
  %2318 = vmatpush1.msra.mxu0 0.0
  %2319 = vmatprep.subr.mxu0 0.0
  %2320 = vmatpush1.msra.mxu0 0.0
  %2321 = vmatprep.subr.mxu0 0.0
  %2322 = vmatpush1.msra.mxu0 0.0
  %2323 = vmatprep.subr.mxu0 0.0
  %2324 = vmatpush1.msra.mxu0 0.0
  %2325 = vmatprep.subr.mxu0 0.0
  %2326 = vmatpush1.msra.mxu0 0.0
  %2327 = vmatprep.subr.mxu0 0.0
  %2328 = vmatpush1.msra.mxu0 0.0
  %2329 = vmatprep.subr.mxu0 0.0
  %2330 = vmatpush1.msra.mxu0 0.0
  %2331 = vmatprep.subr.mxu0 0.0
  %2332 = vmatpush1.msra.mxu0 0.0
  %2333 = vmatprep.subr.mxu0 0.0
  %2334 = vmatpush1.msra.mxu0 0.0
  %2335 = vmatprep.subr.mxu0 0.0
  %2336 = vmatpush1.msra.mxu0 0.0
  %2337 = vmatprep.subr.mxu0 0.0
  %2338 = vmatpush1.msra.mxu0 0.0
  %2339 = vmatprep.subr.mxu0 0.0
  %2340 = vmatpush1.msra.mxu0 0.0
  %2341 = vmatprep.subr.mxu0 0.0
  %2342 = vmatpush1.msra.mxu0 0.0
  %2343 = vmatprep.subr.mxu0 0.0
  %2344 = vmatpush1.msra.mxu0 0.0
  %2345 = vmatprep.subr.mxu0 0.0
  %2346 = vmatpush1.msra.mxu0 0.0
  %2347 = vmatprep.subr.mxu0 %v2310
  %2348 = vmatpush1.msra.mxu0 %v2309
  %2349 = vmatprep.subr.mxu0 0.0
  %2350 = vmatpush2.msra.mxu0 0.0
  %2351 = vmatprep.subr.mxu0 0.0
  %2352 = vmatpush2.msra.mxu0 0.0
  %2353 = vmatprep.subr.mxu0 0.0
  %2354 = vmatpush2.msra.mxu0 0.0
  %2355 = vmatprep.subr.mxu0 0.0
  %2356 = vmatpush2.msra.mxu0 0.0
  %2357 = vmatprep.subr.mxu0 0.0
  %2358 = vmatpush2.msra.mxu0 0.0
  %2359 = vmatprep.subr.mxu0 0.0
  %2360 = vmatpush2.msra.mxu0 0.0
  %2361 = vmatprep.subr.mxu0 0.0
  %2362 = vmatpush2.msra.mxu0 0.0
  %2363 = vmatprep.subr.mxu0 0.0
  %2364 = vmatpush2.msra.mxu0 0.0
  %2365 = vmatprep.subr.mxu0 0.0
  %2366 = vmatpush2.msra.mxu0 0.0
  %2367 = vmatprep.subr.mxu0 0.0
  %2368 = vmatpush2.msra.mxu0 0.0
  %2369 = vmatprep.subr.mxu0 0.0
  %2370 = vmatpush2.msra.mxu0 0.0
  %2371 = vmatprep.subr.mxu0 0.0
  %2372 = vmatpush2.msra.mxu0 0.0
  %2373 = vmatprep.subr.mxu0 0.0
  %2374 = vmatpush2.msra.mxu0 0.0
  %2375 = vmatprep.subr.mxu0 0.0
  %2376 = vmatpush2.msra.mxu0 0.0
  %2377 = vmatprep.subr.mxu0 0.0
  %2378 = vmatpush2.msra.mxu0 0.0
  %2379 = vmatprep.subr.mxu0 0.0
  %2380 = vmatpush2.msra.mxu0 0.0
  %2381 = vmatprep.mubr.f32.mxu0 0.0
  %2382 = vmatmul.mubr.f32.gmra.mxu0 %v2315
  %v2383 = vpop.f32.mrf.mxu0
  %v2384 = vadd.f32 0.0, %v2383
  %v2385 = vpop.f32.mrf.mxu0
  %v2386 = vadd.f32 0.0, %v2385
  %2387 = vdwg.mxu0
  %2388 = vmatprep.subr.mxu0 0.0
  %2389 = vmatpush1.msra.mxu0 0.0
  %2390 = vmatprep.subr.mxu0 0.0
  %2391 = vmatpush1.msra.mxu0 0.0
  %2392 = vmatprep.subr.mxu0 0.0
  %2393 = vmatpush1.msra.mxu0 0.0
  %2394 = vmatprep.subr.mxu0 0.0
  %2395 = vmatpush1.msra.mxu0 0.0
  %2396 = vmatprep.subr.mxu0 0.0
  %2397 = vmatpush1.msra.mxu0 0.0
  %2398 = vmatprep.subr.mxu0 0.0
  %2399 = vmatpush1.msra.mxu0 0.0
  %2400 = vmatprep.subr.mxu0 0.0
  %2401 = vmatpush1.msra.mxu0 0.0
  %2402 = vmatprep.subr.mxu0 0.0
  %2403 = vmatpush1.msra.mxu0 0.0
  %2404 = vmatprep.subr.mxu0 0.0
  %2405 = vmatpush1.msra.mxu0 0.0
  %2406 = vmatprep.subr.mxu0 0.0
  %2407 = vmatpush1.msra.mxu0 0.0
  %2408 = vmatprep.subr.mxu0 0.0
  %2409 = vmatpush1.msra.mxu0 0.0
  %2410 = vmatprep.subr.mxu0 0.0
  %2411 = vmatpush1.msra.mxu0 0.0
  %2412 = vmatprep.subr.mxu0 0.0
  %2413 = vmatpush1.msra.mxu0 0.0
  %2414 = vmatprep.subr.mxu0 0.0
  %2415 = vmatpush1.msra.mxu0 0.0
  %2416 = vmatprep.subr.mxu0 0.0
  %2417 = vmatpush1.msra.mxu0 0.0
  %2418 = vmatprep.subr.mxu0 0.0
  %2419 = vmatpush1.msra.mxu0 %v2308
  %2420 = vmatprep.subr.mxu0 0.0
  %2421 = vmatpush2.msra.mxu0 0.0
  %2422 = vmatprep.subr.mxu0 0.0
  %2423 = vmatpush2.msra.mxu0 0.0
  %2424 = vmatprep.subr.mxu0 0.0
  %2425 = vmatpush2.msra.mxu0 0.0
  %2426 = vmatprep.subr.mxu0 0.0
  %2427 = vmatpush2.msra.mxu0 0.0
  %2428 = vmatprep.subr.mxu0 0.0
  %2429 = vmatpush2.msra.mxu0 0.0
  %2430 = vmatprep.subr.mxu0 0.0
  %2431 = vmatpush2.msra.mxu0 0.0
  %2432 = vmatprep.subr.mxu0 0.0
  %2433 = vmatpush2.msra.mxu0 0.0
  %2434 = vmatprep.subr.mxu0 0.0
  %2435 = vmatpush2.msra.mxu0 0.0
  %2436 = vmatprep.subr.mxu0 0.0
  %2437 = vmatpush2.msra.mxu0 0.0
  %2438 = vmatprep.subr.mxu0 0.0
  %2439 = vmatpush2.msra.mxu0 0.0
  %2440 = vmatprep.subr.mxu0 0.0
  %2441 = vmatpush2.msra.mxu0 0.0
  %2442 = vmatprep.subr.mxu0 0.0
  %2443 = vmatpush2.msra.mxu0 0.0
  %2444 = vmatprep.subr.mxu0 0.0
  %2445 = vmatpush2.msra.mxu0 0.0
  %2446 = vmatprep.subr.mxu0 0.0
  %2447 = vmatpush2.msra.mxu0 0.0
  %2448 = vmatprep.subr.mxu0 0.0
  %2449 = vmatpush2.msra.mxu0 0.0
  %2450 = vmatprep.subr.mxu0 0.0
  %2451 = vmatpush2.msra.mxu0 0.0
  %2452 = vmatprep.mubr.f32.mxu0 0.0
  %2453 = vmatmul.mubr.f32.gmra.mxu0 %v2315
  %v2454 = vpop.f32.mrf.mxu0
  %v2455 = vadd.f32 0.0, %v2454
  %v2456 = vpop.f32.mrf.mxu0
  %2457 = vdwg.mxu0
  %v2458 = vadd.f32 %v2298, %v2384
  %v2459 = vadd.f32 %v2299, %v2386
  %v2460 = vadd.f32 %v2300, %v2455
  %s2461 = scalar_lea.vmem %s4, 48
  %v2462 = vld [vmem:[%s2461] sm:$0xff]
  %2463 = vrot.lane.b32.xlu0 %v1514, 88
  %v2464 = vpop.permute.xlu0 %2463
  %2465 = vrot.lane.b32.xlu0 %v1515, 88
  %v2466 = vpop.permute.xlu0 %2465
  %2467 = vrot.lane.b32.xlu0 %v1516, 88
  %v2468 = vpop.permute.xlu0 %2467
  %v2469 = vsel %vm995, %v2464, %v2466
  %v2470 = vsel %vm995, %v2466, %v2468
  %v2475 = vsel %vm44, %v2462, 0
  %2477 = vmatprep.subr.mxu0 0.0
  %2478 = vmatpush1.msra.mxu0 0.0
  %2479 = vmatprep.subr.mxu0 0.0
  %2480 = vmatpush1.msra.mxu0 0.0
  %2481 = vmatprep.subr.mxu0 0.0
  %2482 = vmatpush1.msra.mxu0 0.0
  %2483 = vmatprep.subr.mxu0 0.0
  %2484 = vmatpush1.msra.mxu0 0.0
  %2485 = vmatprep.subr.mxu0 0.0
  %2486 = vmatpush1.msra.mxu0 0.0
  %2487 = vmatprep.subr.mxu0 0.0
  %2488 = vmatpush1.msra.mxu0 0.0
  %2489 = vmatprep.subr.mxu0 0.0
  %2490 = vmatpush1.msra.mxu0 0.0
  %2491 = vmatprep.subr.mxu0 0.0
  %2492 = vmatpush1.msra.mxu0 0.0
  %2493 = vmatprep.subr.mxu0 0.0
  %2494 = vmatpush1.msra.mxu0 0.0
  %2495 = vmatprep.subr.mxu0 0.0
  %2496 = vmatpush1.msra.mxu0 0.0
  %2497 = vmatprep.subr.mxu0 0.0
  %2498 = vmatpush1.msra.mxu0 0.0
  %2499 = vmatprep.subr.mxu0 0.0
  %2500 = vmatpush1.msra.mxu0 0.0
  %2501 = vmatprep.subr.mxu0 0.0
  %2502 = vmatpush1.msra.mxu0 0.0
  %2503 = vmatprep.subr.mxu0 0.0
  %2504 = vmatpush1.msra.mxu0 0.0
  %2505 = vmatprep.subr.mxu0 0.0
  %2506 = vmatpush1.msra.mxu0 0.0
  %2507 = vmatprep.subr.mxu0 %v2470
  %2508 = vmatpush1.msra.mxu0 %v2469
  %2509 = vmatprep.subr.mxu0 0.0
  %2510 = vmatpush2.msra.mxu0 0.0
  %2511 = vmatprep.subr.mxu0 0.0
  %2512 = vmatpush2.msra.mxu0 0.0
  %2513 = vmatprep.subr.mxu0 0.0
  %2514 = vmatpush2.msra.mxu0 0.0
  %2515 = vmatprep.subr.mxu0 0.0
  %2516 = vmatpush2.msra.mxu0 0.0
  %2517 = vmatprep.subr.mxu0 0.0
  %2518 = vmatpush2.msra.mxu0 0.0
  %2519 = vmatprep.subr.mxu0 0.0
  %2520 = vmatpush2.msra.mxu0 0.0
  %2521 = vmatprep.subr.mxu0 0.0
  %2522 = vmatpush2.msra.mxu0 0.0
  %2523 = vmatprep.subr.mxu0 0.0
  %2524 = vmatpush2.msra.mxu0 0.0
  %2525 = vmatprep.subr.mxu0 0.0
  %2526 = vmatpush2.msra.mxu0 0.0
  %2527 = vmatprep.subr.mxu0 0.0
  %2528 = vmatpush2.msra.mxu0 0.0
  %2529 = vmatprep.subr.mxu0 0.0
  %2530 = vmatpush2.msra.mxu0 0.0
  %2531 = vmatprep.subr.mxu0 0.0
  %2532 = vmatpush2.msra.mxu0 0.0
  %2533 = vmatprep.subr.mxu0 0.0
  %2534 = vmatpush2.msra.mxu0 0.0
  %2535 = vmatprep.subr.mxu0 0.0
  %2536 = vmatpush2.msra.mxu0 0.0
  %2537 = vmatprep.subr.mxu0 0.0
  %2538 = vmatpush2.msra.mxu0 0.0
  %2539 = vmatprep.subr.mxu0 0.0
  %2540 = vmatpush2.msra.mxu0 0.0
  %2541 = vmatprep.mubr.f32.mxu0 0.0
  %2542 = vmatmul.mubr.f32.gmra.mxu0 %v2475
  %v2543 = vpop.f32.mrf.mxu0
  %v2544 = vadd.f32 0.0, %v2543
  %v2545 = vpop.f32.mrf.mxu0
  %v2546 = vadd.f32 0.0, %v2545
  %2547 = vdwg.mxu0
  %2548 = vmatprep.subr.mxu0 0.0
  %2549 = vmatpush1.msra.mxu0 0.0
  %2550 = vmatprep.subr.mxu0 0.0
  %2551 = vmatpush1.msra.mxu0 0.0
  %2552 = vmatprep.subr.mxu0 0.0
  %2553 = vmatpush1.msra.mxu0 0.0
  %2554 = vmatprep.subr.mxu0 0.0
  %2555 = vmatpush1.msra.mxu0 0.0
  %2556 = vmatprep.subr.mxu0 0.0
  %2557 = vmatpush1.msra.mxu0 0.0
  %2558 = vmatprep.subr.mxu0 0.0
  %2559 = vmatpush1.msra.mxu0 0.0
  %2560 = vmatprep.subr.mxu0 0.0
  %2561 = vmatpush1.msra.mxu0 0.0
  %2562 = vmatprep.subr.mxu0 0.0
  %2563 = vmatpush1.msra.mxu0 0.0
  %2564 = vmatprep.subr.mxu0 0.0
  %2565 = vmatpush1.msra.mxu0 0.0
  %2566 = vmatprep.subr.mxu0 0.0
  %2567 = vmatpush1.msra.mxu0 0.0
  %2568 = vmatprep.subr.mxu0 0.0
  %2569 = vmatpush1.msra.mxu0 0.0
  %2570 = vmatprep.subr.mxu0 0.0
  %2571 = vmatpush1.msra.mxu0 0.0
  %2572 = vmatprep.subr.mxu0 0.0
  %2573 = vmatpush1.msra.mxu0 0.0
  %2574 = vmatprep.subr.mxu0 0.0
  %2575 = vmatpush1.msra.mxu0 0.0
  %2576 = vmatprep.subr.mxu0 0.0
  %2577 = vmatpush1.msra.mxu0 0.0
  %2578 = vmatprep.subr.mxu0 0.0
  %2579 = vmatpush1.msra.mxu0 %v2468
  %2580 = vmatprep.subr.mxu0 0.0
  %2581 = vmatpush2.msra.mxu0 0.0
  %2582 = vmatprep.subr.mxu0 0.0
  %2583 = vmatpush2.msra.mxu0 0.0
  %2584 = vmatprep.subr.mxu0 0.0
  %2585 = vmatpush2.msra.mxu0 0.0
  %2586 = vmatprep.subr.mxu0 0.0
  %2587 = vmatpush2.msra.mxu0 0.0
  %2588 = vmatprep.subr.mxu0 0.0
  %2589 = vmatpush2.msra.mxu0 0.0
  %2590 = vmatprep.subr.mxu0 0.0
  %2591 = vmatpush2.msra.mxu0 0.0
  %2592 = vmatprep.subr.mxu0 0.0
  %2593 = vmatpush2.msra.mxu0 0.0
  %2594 = vmatprep.subr.mxu0 0.0
  %2595 = vmatpush2.msra.mxu0 0.0
  %2596 = vmatprep.subr.mxu0 0.0
  %2597 = vmatpush2.msra.mxu0 0.0
  %2598 = vmatprep.subr.mxu0 0.0
  %2599 = vmatpush2.msra.mxu0 0.0
  %2600 = vmatprep.subr.mxu0 0.0
  %2601 = vmatpush2.msra.mxu0 0.0
  %2602 = vmatprep.subr.mxu0 0.0
  %2603 = vmatpush2.msra.mxu0 0.0
  %2604 = vmatprep.subr.mxu0 0.0
  %2605 = vmatpush2.msra.mxu0 0.0
  %2606 = vmatprep.subr.mxu0 0.0
  %2607 = vmatpush2.msra.mxu0 0.0
  %2608 = vmatprep.subr.mxu0 0.0
  %2609 = vmatpush2.msra.mxu0 0.0
  %2610 = vmatprep.subr.mxu0 0.0
  %2611 = vmatpush2.msra.mxu0 0.0
  %2612 = vmatprep.mubr.f32.mxu0 0.0
  %2613 = vmatmul.mubr.f32.gmra.mxu0 %v2475
  %v2614 = vpop.f32.mrf.mxu0
  %v2615 = vadd.f32 0.0, %v2614
  %v2616 = vpop.f32.mrf.mxu0
  %2617 = vdwg.mxu0
  %v2618 = vadd.f32 %v2458, %v2544
  %v2619 = vadd.f32 %v2459, %v2546
  %v2620 = vadd.f32 %v2460, %v2615
  %s2621 = scalar_lea.vmem %s4, 56
  %v2622 = vld [vmem:[%s2621] sm:$0xff]
  %2623 = vrot.lane.b32.xlu0 %v1514, 87
  %v2624 = vpop.permute.xlu0 %2623
  %2625 = vrot.lane.b32.xlu0 %v1515, 87
  %v2626 = vpop.permute.xlu0 %2625
  %2627 = vrot.lane.b32.xlu0 %v1516, 87
  %v2628 = vpop.permute.xlu0 %2627
  %v2629 = vsel %vm1159, %v2624, %v2626
  %v2630 = vsel %vm1159, %v2626, %v2628
  %v2635 = vsel %vm44, %v2622, 0
  %2637 = vmatprep.subr.mxu0 0.0
  %2638 = vmatpush1.msra.mxu0 0.0
  %2639 = vmatprep.subr.mxu0 0.0
  %2640 = vmatpush1.msra.mxu0 0.0
  %2641 = vmatprep.subr.mxu0 0.0
  %2642 = vmatpush1.msra.mxu0 0.0
  %2643 = vmatprep.subr.mxu0 0.0
  %2644 = vmatpush1.msra.mxu0 0.0
  %2645 = vmatprep.subr.mxu0 0.0
  %2646 = vmatpush1.msra.mxu0 0.0
  %2647 = vmatprep.subr.mxu0 0.0
  %2648 = vmatpush1.msra.mxu0 0.0
  %2649 = vmatprep.subr.mxu0 0.0
  %2650 = vmatpush1.msra.mxu0 0.0
  %2651 = vmatprep.subr.mxu0 0.0
  %2652 = vmatpush1.msra.mxu0 0.0
  %2653 = vmatprep.subr.mxu0 0.0
  %2654 = vmatpush1.msra.mxu0 0.0
  %2655 = vmatprep.subr.mxu0 0.0
  %2656 = vmatpush1.msra.mxu0 0.0
  %2657 = vmatprep.subr.mxu0 0.0
  %2658 = vmatpush1.msra.mxu0 0.0
  %2659 = vmatprep.subr.mxu0 0.0
  %2660 = vmatpush1.msra.mxu0 0.0
  %2661 = vmatprep.subr.mxu0 0.0
  %2662 = vmatpush1.msra.mxu0 0.0
  %2663 = vmatprep.subr.mxu0 0.0
  %2664 = vmatpush1.msra.mxu0 0.0
  %2665 = vmatprep.subr.mxu0 0.0
  %2666 = vmatpush1.msra.mxu0 0.0
  %2667 = vmatprep.subr.mxu0 %v2630
  %2668 = vmatpush1.msra.mxu0 %v2629
  %2669 = vmatprep.subr.mxu0 0.0
  %2670 = vmatpush2.msra.mxu0 0.0
  %2671 = vmatprep.subr.mxu0 0.0
  %2672 = vmatpush2.msra.mxu0 0.0
  %2673 = vmatprep.subr.mxu0 0.0
  %2674 = vmatpush2.msra.mxu0 0.0
  %2675 = vmatprep.subr.mxu0 0.0
  %2676 = vmatpush2.msra.mxu0 0.0
  %2677 = vmatprep.subr.mxu0 0.0
  %2678 = vmatpush2.msra.mxu0 0.0
  %2679 = vmatprep.subr.mxu0 0.0
  %2680 = vmatpush2.msra.mxu0 0.0
  %2681 = vmatprep.subr.mxu0 0.0
  %2682 = vmatpush2.msra.mxu0 0.0
  %2683 = vmatprep.subr.mxu0 0.0
  %2684 = vmatpush2.msra.mxu0 0.0
  %2685 = vmatprep.subr.mxu0 0.0
  %2686 = vmatpush2.msra.mxu0 0.0
  %2687 = vmatprep.subr.mxu0 0.0
  %2688 = vmatpush2.msra.mxu0 0.0
  %2689 = vmatprep.subr.mxu0 0.0
  %2690 = vmatpush2.msra.mxu0 0.0
  %2691 = vmatprep.subr.mxu0 0.0
  %2692 = vmatpush2.msra.mxu0 0.0
  %2693 = vmatprep.subr.mxu0 0.0
  %2694 = vmatpush2.msra.mxu0 0.0
  %2695 = vmatprep.subr.mxu0 0.0
  %2696 = vmatpush2.msra.mxu0 0.0
  %2697 = vmatprep.subr.mxu0 0.0
  %2698 = vmatpush2.msra.mxu0 0.0
  %2699 = vmatprep.subr.mxu0 0.0
  %2700 = vmatpush2.msra.mxu0 0.0
  %2701 = vmatprep.mubr.f32.mxu0 0.0
  %2702 = vmatmul.mubr.f32.gmra.mxu0 %v2635
  %v2703 = vpop.f32.mrf.mxu0
  %v2704 = vadd.f32 0.0, %v2703
  %v2705 = vpop.f32.mrf.mxu0
  %v2706 = vadd.f32 0.0, %v2705
  %2707 = vdwg.mxu0
  %2708 = vmatprep.subr.mxu0 0.0
  %2709 = vmatpush1.msra.mxu0 0.0
  %2710 = vmatprep.subr.mxu0 0.0
  %2711 = vmatpush1.msra.mxu0 0.0
  %2712 = vmatprep.subr.mxu0 0.0
  %2713 = vmatpush1.msra.mxu0 0.0
  %2714 = vmatprep.subr.mxu0 0.0
  %2715 = vmatpush1.msra.mxu0 0.0
  %2716 = vmatprep.subr.mxu0 0.0
  %2717 = vmatpush1.msra.mxu0 0.0
  %2718 = vmatprep.subr.mxu0 0.0
  %2719 = vmatpush1.msra.mxu0 0.0
  %2720 = vmatprep.subr.mxu0 0.0
  %2721 = vmatpush1.msra.mxu0 0.0
  %2722 = vmatprep.subr.mxu0 0.0
  %2723 = vmatpush1.msra.mxu0 0.0
  %2724 = vmatprep.subr.mxu0 0.0
  %2725 = vmatpush1.msra.mxu0 0.0
  %2726 = vmatprep.subr.mxu0 0.0
  %2727 = vmatpush1.msra.mxu0 0.0
  %2728 = vmatprep.subr.mxu0 0.0
  %2729 = vmatpush1.msra.mxu0 0.0
  %2730 = vmatprep.subr.mxu0 0.0
  %2731 = vmatpush1.msra.mxu0 0.0
  %2732 = vmatprep.subr.mxu0 0.0
  %2733 = vmatpush1.msra.mxu0 0.0
  %2734 = vmatprep.subr.mxu0 0.0
  %2735 = vmatpush1.msra.mxu0 0.0
  %2736 = vmatprep.subr.mxu0 0.0
  %2737 = vmatpush1.msra.mxu0 0.0
  %2738 = vmatprep.subr.mxu0 0.0
  %2739 = vmatpush1.msra.mxu0 %v2628
  %2740 = vmatprep.subr.mxu0 0.0
  %2741 = vmatpush2.msra.mxu0 0.0
  %2742 = vmatprep.subr.mxu0 0.0
  %2743 = vmatpush2.msra.mxu0 0.0
  %2744 = vmatprep.subr.mxu0 0.0
  %2745 = vmatpush2.msra.mxu0 0.0
  %2746 = vmatprep.subr.mxu0 0.0
  %2747 = vmatpush2.msra.mxu0 0.0
  %2748 = vmatprep.subr.mxu0 0.0
  %2749 = vmatpush2.msra.mxu0 0.0
  %2750 = vmatprep.subr.mxu0 0.0
  %2751 = vmatpush2.msra.mxu0 0.0
  %2752 = vmatprep.subr.mxu0 0.0
  %2753 = vmatpush2.msra.mxu0 0.0
  %2754 = vmatprep.subr.mxu0 0.0
  %2755 = vmatpush2.msra.mxu0 0.0
  %2756 = vmatprep.subr.mxu0 0.0
  %2757 = vmatpush2.msra.mxu0 0.0
  %2758 = vmatprep.subr.mxu0 0.0
  %2759 = vmatpush2.msra.mxu0 0.0
  %2760 = vmatprep.subr.mxu0 0.0
  %2761 = vmatpush2.msra.mxu0 0.0
  %2762 = vmatprep.subr.mxu0 0.0
  %2763 = vmatpush2.msra.mxu0 0.0
  %2764 = vmatprep.subr.mxu0 0.0
  %2765 = vmatpush2.msra.mxu0 0.0
  %2766 = vmatprep.subr.mxu0 0.0
  %2767 = vmatpush2.msra.mxu0 0.0
  %2768 = vmatprep.subr.mxu0 0.0
  %2769 = vmatpush2.msra.mxu0 0.0
  %2770 = vmatprep.subr.mxu0 0.0
  %2771 = vmatpush2.msra.mxu0 0.0
  %2772 = vmatprep.mubr.f32.mxu0 0.0
  %2773 = vmatmul.mubr.f32.gmra.mxu0 %v2635
  %v2774 = vpop.f32.mrf.mxu0
  %v2775 = vadd.f32 0.0, %v2774
  %v2776 = vpop.f32.mrf.mxu0
  %2777 = vdwg.mxu0
  %v2778 = vadd.f32 %v2618, %v2704
  %v2779 = vadd.f32 %v2619, %v2706
  %v2780 = vadd.f32 %v2620, %v2775
  %s2781 = scalar_lea.vmem %s4, 64
  %v2782 = vld [vmem:[%s2781] sm:$0xff]
  %2783 = vrot.lane.b32.xlu0 %v1514, 86
  %v2784 = vpop.permute.xlu0 %2783
  %2785 = vrot.lane.b32.xlu0 %v1515, 86
  %v2786 = vpop.permute.xlu0 %2785
  %2787 = vrot.lane.b32.xlu0 %v1516, 86
  %v2788 = vpop.permute.xlu0 %2787
  %v2789 = vsel %vm1323, %v2784, %v2786
  %v2790 = vsel %vm1323, %v2786, %v2788
  %v2795 = vsel %vm44, %v2782, 0
  %2797 = vmatprep.subr.mxu0 0.0
  %2798 = vmatpush1.msra.mxu0 0.0
  %2799 = vmatprep.subr.mxu0 0.0
  %2800 = vmatpush1.msra.mxu0 0.0
  %2801 = vmatprep.subr.mxu0 0.0
  %2802 = vmatpush1.msra.mxu0 0.0
  %2803 = vmatprep.subr.mxu0 0.0
  %2804 = vmatpush1.msra.mxu0 0.0
  %2805 = vmatprep.subr.mxu0 0.0
  %2806 = vmatpush1.msra.mxu0 0.0
  %2807 = vmatprep.subr.mxu0 0.0
  %2808 = vmatpush1.msra.mxu0 0.0
  %2809 = vmatprep.subr.mxu0 0.0
  %2810 = vmatpush1.msra.mxu0 0.0
  %2811 = vmatprep.subr.mxu0 0.0
  %2812 = vmatpush1.msra.mxu0 0.0
  %2813 = vmatprep.subr.mxu0 0.0
  %2814 = vmatpush1.msra.mxu0 0.0
  %2815 = vmatprep.subr.mxu0 0.0
  %2816 = vmatpush1.msra.mxu0 0.0
  %2817 = vmatprep.subr.mxu0 0.0
  %2818 = vmatpush1.msra.mxu0 0.0
  %2819 = vmatprep.subr.mxu0 0.0
  %2820 = vmatpush1.msra.mxu0 0.0
  %2821 = vmatprep.subr.mxu0 0.0
  %2822 = vmatpush1.msra.mxu0 0.0
  %2823 = vmatprep.subr.mxu0 0.0
  %2824 = vmatpush1.msra.mxu0 0.0
  %2825 = vmatprep.subr.mxu0 0.0
  %2826 = vmatpush1.msra.mxu0 0.0
  %2827 = vmatprep.subr.mxu0 %v2790
  %2828 = vmatpush1.msra.mxu0 %v2789
  %2829 = vmatprep.subr.mxu0 0.0
  %2830 = vmatpush2.msra.mxu0 0.0
  %2831 = vmatprep.subr.mxu0 0.0
  %2832 = vmatpush2.msra.mxu0 0.0
  %2833 = vmatprep.subr.mxu0 0.0
  %2834 = vmatpush2.msra.mxu0 0.0
  %2835 = vmatprep.subr.mxu0 0.0
  %2836 = vmatpush2.msra.mxu0 0.0
  %2837 = vmatprep.subr.mxu0 0.0
  %2838 = vmatpush2.msra.mxu0 0.0
  %2839 = vmatprep.subr.mxu0 0.0
  %2840 = vmatpush2.msra.mxu0 0.0
  %2841 = vmatprep.subr.mxu0 0.0
  %2842 = vmatpush2.msra.mxu0 0.0
  %2843 = vmatprep.subr.mxu0 0.0
  %2844 = vmatpush2.msra.mxu0 0.0
  %2845 = vmatprep.subr.mxu0 0.0
  %2846 = vmatpush2.msra.mxu0 0.0
  %2847 = vmatprep.subr.mxu0 0.0
  %2848 = vmatpush2.msra.mxu0 0.0
  %2849 = vmatprep.subr.mxu0 0.0
  %2850 = vmatpush2.msra.mxu0 0.0
  %2851 = vmatprep.subr.mxu0 0.0
  %2852 = vmatpush2.msra.mxu0 0.0
  %2853 = vmatprep.subr.mxu0 0.0
  %2854 = vmatpush2.msra.mxu0 0.0
  %2855 = vmatprep.subr.mxu0 0.0
  %2856 = vmatpush2.msra.mxu0 0.0
  %2857 = vmatprep.subr.mxu0 0.0
  %2858 = vmatpush2.msra.mxu0 0.0
  %2859 = vmatprep.subr.mxu0 0.0
  %2860 = vmatpush2.msra.mxu0 0.0
  %2861 = vmatprep.mubr.f32.mxu0 0.0
  %2862 = vmatmul.mubr.f32.gmra.mxu0 %v2795
  %v2863 = vpop.f32.mrf.mxu0
  %v2864 = vadd.f32 0.0, %v2863
  %v2865 = vpop.f32.mrf.mxu0
  %v2866 = vadd.f32 0.0, %v2865
  %2867 = vdwg.mxu0
  %2868 = vmatprep.subr.mxu0 0.0
  %2869 = vmatpush1.msra.mxu0 0.0
  %2870 = vmatprep.subr.mxu0 0.0
  %2871 = vmatpush1.msra.mxu0 0.0
  %2872 = vmatprep.subr.mxu0 0.0
  %2873 = vmatpush1.msra.mxu0 0.0
  %2874 = vmatprep.subr.mxu0 0.0
  %2875 = vmatpush1.msra.mxu0 0.0
  %2876 = vmatprep.subr.mxu0 0.0
  %2877 = vmatpush1.msra.mxu0 0.0
  %2878 = vmatprep.subr.mxu0 0.0
  %2879 = vmatpush1.msra.mxu0 0.0
  %2880 = vmatprep.subr.mxu0 0.0
  %2881 = vmatpush1.msra.mxu0 0.0
  %2882 = vmatprep.subr.mxu0 0.0
  %2883 = vmatpush1.msra.mxu0 0.0
  %2884 = vmatprep.subr.mxu0 0.0
  %2885 = vmatpush1.msra.mxu0 0.0
  %2886 = vmatprep.subr.mxu0 0.0
  %2887 = vmatpush1.msra.mxu0 0.0
  %2888 = vmatprep.subr.mxu0 0.0
  %2889 = vmatpush1.msra.mxu0 0.0
  %2890 = vmatprep.subr.mxu0 0.0
  %2891 = vmatpush1.msra.mxu0 0.0
  %2892 = vmatprep.subr.mxu0 0.0
  %2893 = vmatpush1.msra.mxu0 0.0
  %2894 = vmatprep.subr.mxu0 0.0
  %2895 = vmatpush1.msra.mxu0 0.0
  %2896 = vmatprep.subr.mxu0 0.0
  %2897 = vmatpush1.msra.mxu0 0.0
  %2898 = vmatprep.subr.mxu0 0.0
  %2899 = vmatpush1.msra.mxu0 %v2788
  %2900 = vmatprep.subr.mxu0 0.0
  %2901 = vmatpush2.msra.mxu0 0.0
  %2902 = vmatprep.subr.mxu0 0.0
  %2903 = vmatpush2.msra.mxu0 0.0
  %2904 = vmatprep.subr.mxu0 0.0
  %2905 = vmatpush2.msra.mxu0 0.0
  %2906 = vmatprep.subr.mxu0 0.0
  %2907 = vmatpush2.msra.mxu0 0.0
  %2908 = vmatprep.subr.mxu0 0.0
  %2909 = vmatpush2.msra.mxu0 0.0
  %2910 = vmatprep.subr.mxu0 0.0
  %2911 = vmatpush2.msra.mxu0 0.0
  %2912 = vmatprep.subr.mxu0 0.0
  %2913 = vmatpush2.msra.mxu0 0.0
  %2914 = vmatprep.subr.mxu0 0.0
  %2915 = vmatpush2.msra.mxu0 0.0
  %2916 = vmatprep.subr.mxu0 0.0
  %2917 = vmatpush2.msra.mxu0 0.0
  %2918 = vmatprep.subr.mxu0 0.0
  %2919 = vmatpush2.msra.mxu0 0.0
  %2920 = vmatprep.subr.mxu0 0.0
  %2921 = vmatpush2.msra.mxu0 0.0
  %2922 = vmatprep.subr.mxu0 0.0
  %2923 = vmatpush2.msra.mxu0 0.0
  %2924 = vmatprep.subr.mxu0 0.0
  %2925 = vmatpush2.msra.mxu0 0.0
  %2926 = vmatprep.subr.mxu0 0.0
  %2927 = vmatpush2.msra.mxu0 0.0
  %2928 = vmatprep.subr.mxu0 0.0
  %2929 = vmatpush2.msra.mxu0 0.0
  %2930 = vmatprep.subr.mxu0 0.0
  %2931 = vmatpush2.msra.mxu0 0.0
  %2932 = vmatprep.mubr.f32.mxu0 0.0
  %2933 = vmatmul.mubr.f32.gmra.mxu0 %v2795
  %v2934 = vpop.f32.mrf.mxu0
  %v2935 = vadd.f32 0.0, %v2934
  %v2936 = vpop.f32.mrf.mxu0
  %2937 = vdwg.mxu0
  %v2938 = vadd.f32 %v2778, %v2864
  %v2939 = vadd.f32 %v2779, %v2866
  %v2940 = vadd.f32 %v2780, %v2935
  %v2941 = vld [vmem:[%s0] sm:$0xff]
  %v2942 = vld [vmem:[%s0 + $0x8] sm:$0xff]
  %v2943 = vld [vmem:[%s0 + $0x10] sm:$0xff]
  %v2944 = vld [vmem:[%s5] sm:$0xff]
  %2946 = vset.pattern.permute.xlu0 0
  %2947 = vperm.xlu0 %2946, %v2944
  %v2948 = vpop.permute.xlu0 %2947
  %v2950 = vadd.f32 %v2938, %v2948
  %v2951 = vadd.f32 %v2939, %v2948
  %v2952 = vadd.f32 %v2940, %v2948
  %2956 = vrot.lane.b32.xlu0 %v2941, 86
  %v2957 = vpop.permute.xlu0 %2956
  %2958 = vrot.lane.b32.xlu0 %v2942, 86
  %v2959 = vpop.permute.xlu0 %2958
  %2960 = vrot.lane.b32.xlu0 %v2943, 86
  %v2961 = vpop.permute.xlu0 %2960
  %v2962 = vsel %vm1323, %v2957, %v2959
  %v2963 = vsel %vm1323, %v2959, %v2961
  %v2967 = vadd.f32 %v2950, %v2962
  %v2968 = vadd.f32 %v2951, %v2963
  %v2969 = vadd.f32 %v2952, %v2961
  %v2970 = vmax.f32 %v2967, 0.0
  %v2971 = vmax.f32 %v2968, 0.0
  %v2972 = vmax.f32 %v2969, 0.0
  %2973 = vst [vmem:[%s6] sm:$0xff] %v2970
  %2974 = vst [vmem:[%s6 + $0x8] sm:$0xff] %v2971
  %vm2975 = vcmask 490496
  %2976 = vst.msk [vmem:[%s6 + $0x10] sm:$0xff] %vm2975, %v2972
  // Predicated region
  $region26: #{basic_block_forward.1} parent=0 // pred_check
    _
  $region27: #{basic_block_forward.1} parent=0 // pred_check_branch
    %2978 = sbr.rel (0) target = $region29
  $region28: #{basic_block_forward.1} parent=0 // pred_region
    _
  $region29: #{basic_block_forward.1} parent=0 // pred_fallthru
    _
  // Predicated region
  $region30: #{basic_block_forward.1} parent=0 // pred_check
    _
  $region31: #{basic_block_forward.1} parent=0 // pred_check_branch
    %2980 = sbr.rel (0) target = $region33
  $region32: #{basic_block_forward.1} parent=0 // pred_region
    _
  $region33: #{basic_block_forward.1} parent=0 // pred_fallthru
    _

</llo_original>
